<compile_context>
chip_gen: v6e
topology: v6e:2x2x1
jax: 0.10.0
libtpu: 0.0.40
codegen_flags: <defaults>
</compile_context>

<pallas_src>
import math

import numpy as np
import jax
import jax.numpy as jnp
from jax.experimental import pallas as pl

# ----------------------------- model hyper-params -----------------------------
IN_SIZE = 6
NB_CLASS = 3
D_MODEL = 16
NB_HEADS = 4
HEAD_DIM = D_MODEL // NB_HEADS
DIM_FF = 32
NB_LAYERS = 2
FILTER_ORDER = 2                                   # "order"
NUM_COEFF = FILTER_ORDER * HEAD_DIM * HEAD_DIM     # order * C_in * C_out = 32

B = 2                      # graphs per batch
S = 8                      # max nodes per graph
N = B * S                  # 16 node slots
R64 = NB_HEADS * N         # 64 stacked (head, node) rows
HB = NB_HEADS * B          # 8 (head, graph) pairs
ATT_SCALE = 1.0 / math.sqrt(HEAD_DIM)
PACK_W = 64                # lane width of the two packed input arrays


# ----------------------------- static selector masks ---------------------------
def _static_masks():
    r = np.arange(R64)
    n = np.arange(N)
    d = np.arange(D_MODEL)
    l2 = np.arange(2 * D_MODEL)
    hb_of_r = (r // N) * B + (r % N) // S
    con = {}
    # head-block column mask for stacked (head, node) rows
    con["headmask64"] = (d[None, :] // HEAD_DIM == (r // N)[:, None]).astype(np.float32)
    # (head, graph) row selectors
    con["RowSel"] = (np.arange(HB)[:, None] == hb_of_r[None, :]).astype(np.float32)
    con["RowRep64"] = con["RowSel"].T.copy()
    con["NodeSel"] = ((r % N)[:, None] == n[None, :]).astype(np.float32)
    # Chebyshev dynamic-weight building constants (Wbig row r = b*32 + m2,
    # m2 = k*16 + h*4 + i, coeff row = h*B + b, coeff lane = k*16 + i*4 + j)
    con["RowToCoeffRow"] = ((((r % N) // HEAD_DIM) * B + r // (2 * D_MODEL))[:, None]
                            == np.arange(HB)[None, :]).astype(np.float32)
    con["SelMaskW"] = ((l2[None, :] // HEAD_DIM)
                       == (((r % (2 * D_MODEL)) // D_MODEL) * HEAD_DIM
                           + (r % HEAD_DIM))[:, None]).astype(np.float32)
    con["FoldW"] = ((l2[:, None] % HEAD_DIM) == (d[None, :] % HEAD_DIM)).astype(np.float32)
    con["HeadColMaskW"] = ((d[None, :] // HEAD_DIM)
                           == ((r % N) // HEAD_DIM)[:, None]).astype(np.float32)
    con["GraphColMask"] = ((np.arange(B * 2 * D_MODEL)[None, :] // (2 * D_MODEL))
                           == (n // S)[:, None]).astype(np.float32)
    return con


# ------------------------------- packing helper --------------------------------
def _pack_blocks(blocks):
    """Pack named small arrays into one (rows, PACK_W) f32 array; 8-row aligned."""
    parts, layout, row = [], {}, 0
    for name, arr in blocks:
        a = jnp.asarray(arr, jnp.float32)
        if a.ndim == 1:
            a = a[None, :]
        nr, nc = a.shape
        nr_pad = ((nr + 7) // 8) * 8
        buf = jnp.zeros((nr_pad, PACK_W), jnp.float32).at[:nr, :nc].set(a)
        parts.append(buf)
        layout[name] = (row, nr, nc)
        row += nr_pad
    return jnp.concatenate(parts, axis=0), layout


def pack_weights(params):
    con = _static_masks()
    blocks = []
    for l in range(NB_LAYERS):
        p = f"L{l}_"
        blocks += [
            (p + "Wqkv", params["Wqkv"][l]), (p + "bqkv", params["bqkv"][l]),
            (p + "Wo", params["Wo"][l]), (p + "bo", params["bo"][l]),
            (p + "g1", params["g1"][l]), (p + "be1", params["be1"][l]),
            (p + "W1", params["W1"][l]), (p + "bf1", params["bf1"][l]),
            (p + "W2", params["W2"][l]), (p + "bf2", params["bf2"][l]),
            (p + "g2", params["g2"][l]), (p + "be2", params["be2"][l]),
        ]
    blocks += [
        ("W_emb", params["W_emb"]),
        ("wgcn_cs", jnp.sum(params["W_gcn"], axis=0)),   # ones @ W_gcn (column sums)
        ("b_gcn", params["b_gcn"]),
        ("W_lin", params["W_lin"]), ("b_lin", params["b_lin"]),
        ("Wcat_top", params["W_cat"][:D_MODEL]),
        ("Wcat_bot", params["W_cat"][D_MODEL:]),
        ("b_cat", params["b_cat"]),
        ("Wc1", params["Wc1"]), ("bc1", params["bc1"]),
        ("Wc2", params["Wc2"]), ("bc2", params["bc2"]),
    ]
    blocks += list(con.items())
    return _pack_blocks(blocks)


# ------------------------------ fused Pallas kernel ----------------------------
def _make_kernel(d_layout, w_layout):
    def kernel(dyn_ref, wpack_ref, out_ref):
        def w(name):
            r0, nr, nc = w_layout[name]
            return wpack_ref[r0:r0 + nr, 0:nc]

        def d(name):
            r0, nr, nc = d_layout[name]
            return dyn_ref[r0:r0 + nr, 0:nc]

        def mm(a, b):
            return jnp.dot(a, b, preferred_element_type=jnp.float32)

        def mm_nt(a, b):   # a @ b.T
            return jax.lax.dot_general(a, b, (((1,), (1,)), ((), ())),
                                       preferred_element_type=jnp.float32)

        def ln(z, g, b):
            mu = jnp.mean(z, axis=-1, keepdims=True)
            var = jnp.mean((z - mu) ** 2, axis=-1, keepdims=True)
            return (z - mu) * jax.lax.rsqrt(var + 1e-5) * g + b

        valid_col = d("valid_col")          # (N, 1)   1 = real node, 0 = padding
        key_bias64 = d("key_bias64")        # (R64, N) 0 valid / -1e9 cross-graph or pad
        headmask64 = w("headmask64")        # (R64, D)

        # ------------------------------ embedding ------------------------------
        h = mm(d("x2"), w("W_emb"))         # (N, D)

        p_all = None        # last layer attention, stacked (head, query) x key
        head_out = None     # last layer per-head outputs, head-blocked columns

        # ----------------------- encoder layers (post-norm) ---------------------
        # TODO(synk): pe / degree modulation of attention omitted
        # (DiffTransformerEncoderLayer source unavailable); standard layer used.
        for l in range(NB_LAYERS):
            p = f"L{l}_"
            qkv = mm(h, w(p + "Wqkv")) + w(p + "bqkv")                 # (N, 3D)
            q_m = qkv[:, 0:D_MODEL]
            k_m = qkv[:, D_MODEL:2 * D_MODEL]
            v_m = qkv[:, 2 * D_MODEL:3 * D_MODEL]
            # block-diagonal (over heads) queries: all heads/graphs in one matmul
            qbd = jnp.concatenate([q_m] * NB_HEADS, axis=0) * headmask64   # (R64, D)
            s = mm_nt(qbd, k_m) * ATT_SCALE + key_bias64                   # (R64, N)
            s = s - jnp.max(s, axis=-1, keepdims=True)
            e = jnp.exp(s)
            pr = e * pl.reciprocal(jnp.sum(e, axis=-1, keepdims=True), approx=True)
            ohead = mm(pr, v_m) * headmask64                               # (R64, D)
            oc = (ohead[0:N] + ohead[N:2 * N]
                  + ohead[2 * N:3 * N] + ohead[3 * N:4 * N])               # (N, D)
            attn_out = mm(oc, w(p + "Wo")) + w(p + "bo")
            h = ln(h + attn_out, w(p + "g1"), w(p + "be1"))
            ff = jnp.maximum(mm(h, w(p + "W1")) + w(p + "bf1"), 0.0)       # fused FFN
            ff = mm(ff, w(p + "W2")) + w(p + "bf2")
            h = ln(h + ff, w(p + "g2"), w(p + "be2"))
            p_all, head_out = pr, oc                                       # keep last layer

        # ---- filter-coefficient GCN on the attention graph (all (h,b) at once) ----
        query_sel = d("QuerySel")                                # (HB, R64)
        deg = mm(query_sel, p_all)                               # (HB, N)
        dinv = jnp.where(deg > 0.0, jax.lax.rsqrt(jnp.maximum(deg, 1e-12)), 0.0)
        dinv_sel = jnp.concatenate([dinv] * NB_HEADS, axis=1) * w("RowSel")   # (HB, R64)
        scale = dinv * mm(dinv_sel, p_all)                       # (HB, N)
        # lanes -> sublanes: scale[(h,b), node] -> (head, graph, node) row column
        scale_col = jnp.sum(mm(w("RowRep64"), scale) * w("NodeSel"),
                            axis=-1, keepdims=True)              # (R64, 1)
        hc = jnp.tanh(scale_col * w("wgcn_cs") + w("b_gcn"))     # (R64, NC)
        pooled_hb = mm(d("PoolHB"), hc)                          # (HB, NC)  = gap()
        coeff = mm(pooled_hb, w("W_lin")) + w("b_lin")           # (HB, NC)

        # -------- dynamic Chebyshev filter (order 2), fully batched matmuls --------
        # TODO(synk): ChebConvDynamic source unavailable; bias-free dynamic weights
        # (coeff -> (order, C_in, C_out)), sym norm, lambda_max = 2 assumed.
        z0 = head_out * valid_col                                # (N, D)  T0 = x
        z1 = mm(d("Lhat_blk"), z0)                               # (N, D)  T1 = Lhat x
        zcat = jnp.concatenate([z0, z1], axis=1)                 # (N, 2D)
        zcat_g = jnp.concatenate([zcat, zcat], axis=1) * w("GraphColMask")   # (N, 4D)
        t2 = mm(w("RowToCoeffRow"), coeff)                       # (R64, NC)
        w_dyn = mm(t2 * w("SelMaskW"), w("FoldW")) * w("HeadColMaskW")       # (R64, D)
        out_filtered = mm(zcat_g, w_dyn) * valid_col             # (N, D)

        # ------------------ use_skip_conn: split linear_cat --------------------
        h = mm(h, w("Wcat_top")) + mm(out_filtered, w("Wcat_bot")) + w("b_cat")

        # ------------- GlobalAvg1D masked mean pooling + classifier -------------
        pooled = mm(d("P_pool"), h)                              # (B, D)
        hcls = jnp.maximum(mm(pooled, w("Wc1")) + w("bc1"), 0.0)
        out_ref[...] = mm(hcls, w("Wc2")) + w("bc2")

    return kernel


# ------------------------------- model forward ---------------------------------
def make_forward(w_layout):
    def forward(wpack, x, edge_index, batch, feature_indices, masks, pe):
        """DiffGraphTransformerGenGCN.forward (lap_pos_enc=False, regularization=0)."""
        del pe  # TODO(synk): pe unused (see encoder-layer note inside the kernel)

        valid = (~masks).astype(jnp.float32)                     # (B, S)
        valid_flat = valid.reshape(N)                            # (N,)
        n_b = jnp.maximum(jnp.sum(valid, axis=1), 1.0)           # guard n_b = 0
        inv_n = 1.0 / n_b

        # Tiny data-dependent preamble: edge_index -> dense per-graph adjacency ->
        # scaled Chebyshev Laplacian (sym norm, lambda_max=2 => Lhat = -D^-1/2 A D^-1/2).
        src, dst = edge_index[0], edge_index[1]
        g = batch[src]
        si = feature_indices[src, 1]
        sj = feature_indices[dst, 1]
        adj = jnp.zeros((B, S, S), jnp.float32).at[g, si, sj].set(1.0)
        adeg = jnp.sum(adj, axis=-1)
        adinv = jnp.where(adeg > 0.0, 1.0 / jnp.sqrt(jnp.maximum(adeg, 1e-12)), 0.0)
        lhat = -(adinv[:, :, None] * adj * adinv[:, None, :])    # (B, S, S)
        lhat_blk = jnp.zeros((N, N), jnp.float32)
        for b in range(B):
            lhat_blk = lhat_blk.at[b * S:(b + 1) * S, b * S:(b + 1) * S].set(lhat[b])

        # additive key mask (padding + cross-graph) for the head/graph-stacked attention
        graph_of = np.arange(N) // S
        same_g = jnp.asarray(graph_of[:, None] == graph_of[None, :])
        keyb = jnp.where(same_g & (valid_flat[None, :] > 0.0), 0.0, -1e9)
        key_bias64 = jnp.concatenate([keyb] * NB_HEADS, axis=0)            # (R64, N)

        # (head, graph) row selectors / pooling matrices
        r = np.arange(R64)
        hb_of_r = (r // N) * B + (r % N) // S
        rowsel = jnp.asarray((np.arange(HB)[:, None] == hb_of_r[None, :]).astype(np.float32))
        query_sel = rowsel * valid_flat[r % N][None, :]                    # (HB, R64)
        pool_hb = query_sel * inv_n[np.arange(HB) % B][:, None]            # (HB, R64)
        p_pool = (jnp.asarray((np.arange(B)[:, None] == graph_of[None, :]).astype(np.float32))
                  * valid_flat[None, :]) * inv_n[:, None]                  # (B, N)

        dyn, d_layout = _pack_blocks([
            ("x2", x.reshape(N, IN_SIZE).astype(jnp.float32)),
            ("valid_col", valid_flat[:, None]),
            ("key_bias64", key_bias64),
            ("Lhat_blk", lhat_blk),
            ("QuerySel", query_sel),
            ("PoolHB", pool_hb),
            ("P_pool", p_pool),
        ])

        kernel = _make_kernel(d_layout, w_layout)
        logits = pl.pallas_call(
            kernel,
            out_shape=jax.ShapeDtypeStruct((B, NB_CLASS), jnp.float32),
        )(dyn, wpack)
        filter_coeff_reg = jnp.float32(0.0)                      # regularization == 0
        return logits, filter_coeff_reg

    return forward


# ------------------------------- param init ------------------------------------
def init_params(key):
    def nrm(k, shape, scale=0.1):
        return scale * jax.random.normal(k, shape, jnp.float32)

    ks = iter(jax.random.split(key, 16))
    L, D, FF, NC = NB_LAYERS, D_MODEL, DIM_FF, NUM_COEFF
    return dict(
        W_emb=nrm(next(ks), (IN_SIZE, D)),
        Wqkv=nrm(next(ks), (L, D, 3 * D)), bqkv=jnp.zeros((L, 1, 3 * D), jnp.float32),
        Wo=nrm(next(ks), (L, D, D)), bo=jnp.zeros((L, 1, D), jnp.float32),
        g1=jnp.ones((L, 1, D), jnp.float32), be1=jnp.zeros((L, 1, D), jnp.float32),
        W1=nrm(next(ks), (L, D, FF)), bf1=jnp.zeros((L, 1, FF), jnp.float32),
        W2=nrm(next(ks), (L, FF, D)), bf2=jnp.zeros((L, 1, D), jnp.float32),
        g2=jnp.ones((L, 1, D), jnp.float32), be2=jnp.zeros((L, 1, D), jnp.float32),
        W_gcn=nrm(next(ks), (NC, NC)), b_gcn=jnp.zeros((1, NC), jnp.float32),
        W_lin=nrm(next(ks), (NC, NC)), b_lin=jnp.zeros((1, NC), jnp.float32),
        W_cat=nrm(next(ks), (2 * D, D)), b_cat=jnp.zeros((1, D), jnp.float32),
        Wc1=nrm(next(ks), (D, D)), bc1=jnp.zeros((1, D), jnp.float32),
        Wc2=nrm(next(ks), (D, NB_CLASS)), bc2=jnp.zeros((1, NB_CLASS), jnp.float32),
    )


# ----------------------------------- main ---------------------------------------
if __name__ == "__main__":
    key = jax.random.PRNGKey(0)
    kp, kx = jax.random.split(key)
    params = init_params(kp)
    wpack, w_layout = pack_weights(params)          # one-time weight/constant packing

    # synthetic batched graphs: graph 0 has 8 nodes, graph 1 has 6 nodes (2 padded)
    n_nodes = [8, 6]
    x = jax.random.normal(kx, (B, S, IN_SIZE), jnp.float32)
    masks = jnp.array([[False] * 8,
                       [False] * 6 + [True] * 2])   # (B, S) True = pad

    batch_list, fi_list, src_list, dst_list = [], [], [], []
    offset = 0
    for gi, nn in enumerate(n_nodes):
        for ss in range(nn):
            batch_list.append(gi)
            fi_list.append([gi, ss])
        for i in range(nn):
            for j in range(nn):
                if i != j:
                    src_list.append(offset + i)
                    dst_list.append(offset + j)
        offset += nn
    batch = jnp.array(batch_list, jnp.int32)                 # (N_total,)
    feature_indices = jnp.array(fi_list, jnp.int32)          # (N_total, 2) = (graph, seq)
    edge_index = jnp.array([src_list, dst_list], jnp.int32)  # (2, E)
    pe = jnp.zeros((B, S, S), jnp.float32)                   # unused (see TODO)

    fwd = jax.jit(make_forward(w_layout))
    logits, reg = fwd(wpack, x, edge_index, batch, feature_indices, masks, pe)
    jax.block_until_ready(logits)
    assert logits.shape == (B, NB_CLASS)
    assert bool(jnp.all(jnp.isfinite(logits)))
    print("KERNEL_OK")
</pallas_src>

<mosaic_0001>
module attributes {stable_mosaic.version = 11 : i64} {
  func.func @kernel(%arg0: memref<136x64xf32, #tpu.memory_space<vmem>>, %arg1: memref<880x64xf32, #tpu.memory_space<vmem>>, %arg2: memref<2x3xf32, #tpu.memory_space<vmem>>) attributes {dimension_semantics = [], scalar_prefetch = 0 : i64, scratch_operands = 0 : i64, tpu.core_type = #tpu.core_type<tc>} {
    %c16 = arith.constant 16 : index
    %c0 = arith.constant 0 : index
    %0 = vector.load %arg0[%c16, %c0] : memref<136x64xf32, #tpu.memory_space<vmem>>, vector<16x1xf32>
    %c32 = arith.constant 32 : index
    %c0_0 = arith.constant 0 : index
    %1 = vector.load %arg0[%c32, %c0_0] : memref<136x64xf32, #tpu.memory_space<vmem>>, vector<64x16xf32>
    %c440 = arith.constant 440 : index
    %c0_1 = arith.constant 0 : index
    %2 = vector.load %arg1[%c440, %c0_1] : memref<880x64xf32, #tpu.memory_space<vmem>>, vector<64x16xf32>
    %c0_2 = arith.constant 0 : index
    %c0_3 = arith.constant 0 : index
    %3 = vector.load %arg0[%c0_2, %c0_3] : memref<136x64xf32, #tpu.memory_space<vmem>>, vector<16x6xf32>
    %c288 = arith.constant 288 : index
    %c0_4 = arith.constant 0 : index
    %4 = vector.load %arg1[%c288, %c0_4] : memref<880x64xf32, #tpu.memory_space<vmem>>, vector<6x16xf32>
    %cst = arith.constant dense<0.000000e+00> : vector<16x16xf32>
    %5 = tpu.matmul %3, %4, %cst {dimension_numbers = #tpu.dot_dimension_numbers<[1], [0], [0], [1], [0, 0, 1, 1], [], []>} : vector<16x6xf32>, vector<6x16xf32>, vector<16x16xf32> -> vector<16x16xf32>
    %c0_5 = arith.constant 0 : index
    %c0_6 = arith.constant 0 : index
    %6 = vector.load %arg1[%c0_5, %c0_6] : memref<880x64xf32, #tpu.memory_space<vmem>>, vector<16x48xf32>
    %cst_7 = arith.constant dense<0.000000e+00> : vector<16x48xf32>
    %7 = tpu.matmul %5, %6, %cst_7 {dimension_numbers = #tpu.dot_dimension_numbers<[1], [0], [0], [1], [0, 0, 1, 1], [], []>} : vector<16x16xf32>, vector<16x48xf32>, vector<16x48xf32> -> vector<16x48xf32>
    %c16_8 = arith.constant 16 : index
    %c0_9 = arith.constant 0 : index
    %8 = vector.load %arg1[%c16_8, %c0_9] : memref<880x64xf32, #tpu.memory_space<vmem>>, vector<1x48xf32>
    %9 = vector.broadcast %8 : vector<1x48xf32> to vector<16x48xf32>
    %10 = arith.addf %7, %9 : vector<16x48xf32>
    %11 = vector.extract_strided_slice %10 {offsets = [0, 0], sizes = [16, 16], strides = [1, 1]} : vector<16x48xf32> to vector<16x16xf32>
    %12 = vector.extract_strided_slice %10 {offsets = [0, 16], sizes = [16, 16], strides = [1, 1]} : vector<16x48xf32> to vector<16x16xf32>
    %13 = vector.extract_strided_slice %10 {offsets = [0, 32], sizes = [16, 16], strides = [1, 1]} : vector<16x48xf32> to vector<16x16xf32>
    %14 = tpu.concatenate %11, %11, %11, %11 in 0 : vector<16x16xf32>, vector<16x16xf32>, vector<16x16xf32>, vector<16x16xf32> -> vector<64x16xf32>
    %15 = arith.mulf %14, %2 : vector<64x16xf32>
    %cst_10 = arith.constant dense<0.000000e+00> : vector<64x16xf32>
    %16 = tpu.matmul %15, %12, %cst_10 {dimension_numbers = #tpu.dot_dimension_numbers<[1], [1], [0], [0], [0, 0, 1, 0], [], []>} : vector<64x16xf32>, vector<16x16xf32>, vector<64x16xf32> -> vector<64x16xf32>
    %cst_11 = arith.constant 5.000000e-01 : f32
    %17 = vector.broadcast %cst_11 : f32 to vector<64x16xf32>
    %18 = arith.mulf %16, %17 : vector<64x16xf32>
    %19 = arith.addf %18, %1 : vector<64x16xf32>
    %cst_12 = arith.constant dense<0xFF800000> : vector<64xf32>
    %20 = vector.multi_reduction <maximumf>, %19, %cst_12 [1] : vector<64x16xf32> to vector<64xf32>
    %21 = vector.shape_cast %20 : vector<64xf32> to vector<64x1xf32>
    %22 = vector.broadcast %21 : vector<64x1xf32> to vector<64x16xf32>
    %23 = arith.subf %19, %22 : vector<64x16xf32>
    %24 = math.exp %23 : vector<64x16xf32>
    %cst_13 = arith.constant dense<0.000000e+00> : vector<64xf32>
    %25 = vector.multi_reduction <add>, %24, %cst_13 [1] : vector<64x16xf32> to vector<64xf32>
    %26 = vector.shape_cast %25 : vector<64xf32> to vector<64x1xf32>
    %27 = tpu.reciprocal %26 {approx = true} : vector<64x1xf32> -> vector<64x1xf32>
    %28 = vector.broadcast %27 : vector<64x1xf32> to vector<64x16xf32>
    %29 = arith.mulf %24, %28 : vector<64x16xf32>
    %cst_14 = arith.constant dense<0.000000e+00> : vector<64x16xf32>
    %30 = tpu.matmul %29, %13, %cst_14 {dimension_numbers = #tpu.dot_dimension_numbers<[1], [0], [0], [1], [0, 0, 1, 1], [], []>} : vector<64x16xf32>, vector<16x16xf32>, vector<64x16xf32> -> vector<64x16xf32>
    %31 = arith.mulf %30, %2 : vector<64x16xf32>
    %32 = vector.extract_strided_slice %31 {offsets = [0, 0], sizes = [16, 16], strides = [1, 1]} : vector<64x16xf32> to vector<16x16xf32>
    %33 = vector.extract_strided_slice %31 {offsets = [16, 0], sizes = [16, 16], strides = [1, 1]} : vector<64x16xf32> to vector<16x16xf32>
    %34 = arith.addf %32, %33 : vector<16x16xf32>
    %35 = vector.extract_strided_slice %31 {offsets = [32, 0], sizes = [16, 16], strides = [1, 1]} : vector<64x16xf32> to vector<16x16xf32>
    %36 = arith.addf %34, %35 : vector<16x16xf32>
    %37 = vector.extract_strided_slice %31 {offsets = [48, 0], sizes = [16, 16], strides = [1, 1]} : vector<64x16xf32> to vector<16x16xf32>
    %38 = arith.addf %36, %37 : vector<16x16xf32>
    %c24 = arith.constant 24 : index
    %c0_15 = arith.constant 0 : index
    %39 = vector.load %arg1[%c24, %c0_15] : memref<880x64xf32, #tpu.memory_space<vmem>>, vector<16x16xf32>
    %cst_16 = arith.constant dense<0.000000e+00> : vector<16x16xf32>
    %40 = tpu.matmul %38, %39, %cst_16 {dimension_numbers = #tpu.dot_dimension_numbers<[1], [0], [0], [1], [0, 0, 1, 1], [], []>} : vector<16x16xf32>, vector<16x16xf32>, vector<16x16xf32> -> vector<16x16xf32>
    %c40 = arith.constant 40 : index
    %c0_17 = arith.constant 0 : index
    %41 = vector.load %arg1[%c40, %c0_17] : memref<880x64xf32, #tpu.memory_space<vmem>>, vector<1x16xf32>
    %42 = vector.broadcast %41 : vector<1x16xf32> to vector<16x16xf32>
    %43 = arith.addf %40, %42 : vector<16x16xf32>
    %44 = arith.addf %5, %43 : vector<16x16xf32>
    %c48 = arith.constant 48 : index
    %c0_18 = arith.constant 0 : index
    %45 = vector.load %arg1[%c48, %c0_18] : memref<880x64xf32, #tpu.memory_space<vmem>>, vector<1x16xf32>
    %c56 = arith.constant 56 : index
    %c0_19 = arith.constant 0 : index
    %46 = vector.load %arg1[%c56, %c0_19] : memref<880x64xf32, #tpu.memory_space<vmem>>, vector<1x16xf32>
    %cst_20 = arith.constant dense<0.000000e+00> : vector<16xf32>
    %47 = vector.multi_reduction <add>, %44, %cst_20 [1] : vector<16x16xf32> to vector<16xf32>
    %48 = vector.shape_cast %47 : vector<16xf32> to vector<16x1xf32>
    %cst_21 = arith.constant 1.600000e+01 : f32
    %49 = vector.broadcast %cst_21 : f32 to vector<16x1xf32>
    %50 = arith.divf %48, %49 : vector<16x1xf32>
    %51 = vector.broadcast %50 : vector<16x1xf32> to vector<16x16xf32>
    %52 = arith.subf %44, %51 : vector<16x16xf32>
    %53 = arith.mulf %52, %52 : vector<16x16xf32>
    %cst_22 = arith.constant dense<0.000000e+00> : vector<16xf32>
    %54 = vector.multi_reduction <add>, %53, %cst_22 [1] : vector<16x16xf32> to vector<16xf32>
    %55 = vector.shape_cast %54 : vector<16xf32> to vector<16x1xf32>
    %cst_23 = arith.constant 1.600000e+01 : f32
    %56 = vector.broadcast %cst_23 : f32 to vector<16x1xf32>
    %57 = arith.divf %55, %56 : vector<16x1xf32>
    %58 = vector.broadcast %50 : vector<16x1xf32> to vector<16x16xf32>
    %59 = arith.subf %44, %58 : vector<16x16xf32>
    %cst_24 = arith.constant 9.99999974E-6 : f32
    %60 = vector.broadcast %cst_24 : f32 to vector<16x1xf32>
    %61 = arith.addf %57, %60 : vector<16x1xf32>
    %62 = math.rsqrt %61 : vector<16x1xf32>
    %63 = vector.broadcast %62 : vector<16x1xf32> to vector<16x16xf32>
    %64 = arith.mulf %59, %63 : vector<16x16xf32>
    %65 = vector.broadcast %45 : vector<1x16xf32> to vector<16x16xf32>
    %66 = arith.mulf %64, %65 : vector<16x16xf32>
    %67 = vector.broadcast %46 : vector<1x16xf32> to vector<16x16xf32>
    %68 = arith.addf %66, %67 : vector<16x16xf32>
    %c64 = arith.constant 64 : index
    %c0_25 = arith.constant 0 : index
    %69 = vector.load %arg1[%c64, %c0_25] : memref<880x64xf32, #tpu.memory_space<vmem>>, vector<16x32xf32>
    %cst_26 = arith.constant dense<0.000000e+00> : vector<16x32xf32>
    %70 = tpu.matmul %68, %69, %cst_26 {dimension_numbers = #tpu.dot_dimension_numbers<[1], [0], [0], [1], [0, 0, 1, 1], [], []>} : vector<16x16xf32>, vector<16x32xf32>, vector<16x32xf32> -> vector<16x32xf32>
    %c80 = arith.constant 80 : index
    %c0_27 = arith.constant 0 : index
    %71 = vector.load %arg1[%c80, %c0_27] : memref<880x64xf32, #tpu.memory_space<vmem>>, vector<1x32xf32>
    %72 = vector.broadcast %71 : vector<1x32xf32> to vector<16x32xf32>
    %73 = arith.addf %70, %72 : vector<16x32xf32>
    %cst_28 = arith.constant 0.000000e+00 : f32
    %74 = vector.broadcast %cst_28 : f32 to vector<16x32xf32>
    %75 = arith.maximumf %73, %74 : vector<16x32xf32>
    %c88 = arith.constant 88 : index
    %c0_29 = arith.constant 0 : index
    %76 = vector.load %arg1[%c88, %c0_29] : memref<880x64xf32, #tpu.memory_space<vmem>>, vector<32x16xf32>
    %cst_30 = arith.constant dense<0.000000e+00> : vector<16x16xf32>
    %77 = tpu.matmul %75, %76, %cst_30 {dimension_numbers = #tpu.dot_dimension_numbers<[1], [0], [0], [1], [0, 0, 1, 1], [], []>} : vector<16x32xf32>, vector<32x16xf32>, vector<16x16xf32> -> vector<16x16xf32>
    %c120 = arith.constant 120 : index
    %c0_31 = arith.constant 0 : index
    %78 = vector.load %arg1[%c120, %c0_31] : memref<880x64xf32, #tpu.memory_space<vmem>>, vector<1x16xf32>
    %79 = vector.broadcast %78 : vector<1x16xf32> to vector<16x16xf32>
    %80 = arith.addf %77, %79 : vector<16x16xf32>
    %81 = arith.addf %68, %80 : vector<16x16xf32>
    %c128 = arith.constant 128 : index
    %c0_32 = arith.constant 0 : index
    %82 = vector.load %arg1[%c128, %c0_32] : memref<880x64xf32, #tpu.memory_space<vmem>>, vector<1x16xf32>
    %c136 = arith.constant 136 : index
    %c0_33 = arith.constant 0 : index
    %83 = vector.load %arg1[%c136, %c0_33] : memref<880x64xf32, #tpu.memory_space<vmem>>, vector<1x16xf32>
    %cst_34 = arith.constant dense<0.000000e+00> : vector<16xf32>
    %84 = vector.multi_reduction <add>, %81, %cst_34 [1] : vector<16x16xf32> to vector<16xf32>
    %85 = vector.shape_cast %84 : vector<16xf32> to vector<16x1xf32>
    %cst_35 = arith.constant 1.600000e+01 : f32
    %86 = vector.broadcast %cst_35 : f32 to vector<16x1xf32>
    %87 = arith.divf %85, %86 : vector<16x1xf32>
    %88 = vector.broadcast %87 : vector<16x1xf32> to vector<16x16xf32>
    %89 = arith.subf %81, %88 : vector<16x16xf32>
    %90 = arith.mulf %89, %89 : vector<16x16xf32>
    %cst_36 = arith.constant dense<0.000000e+00> : vector<16xf32>
    %91 = vector.multi_reduction <add>, %90, %cst_36 [1] : vector<16x16xf32> to vector<16xf32>
    %92 = vector.shape_cast %91 : vector<16xf32> to vector<16x1xf32>
    %cst_37 = arith.constant 1.600000e+01 : f32
    %93 = vector.broadcast %cst_37 : f32 to vector<16x1xf32>
    %94 = arith.divf %92, %93 : vector<16x1xf32>
    %95 = vector.broadcast %87 : vector<16x1xf32> to vector<16x16xf32>
    %96 = arith.subf %81, %95 : vector<16x16xf32>
    %cst_38 = arith.constant 9.99999974E-6 : f32
    %97 = vector.broadcast %cst_38 : f32 to vector<16x1xf32>
    %98 = arith.addf %94, %97 : vector<16x1xf32>
    %99 = math.rsqrt %98 : vector<16x1xf32>
    %100 = vector.broadcast %99 : vector<16x1xf32> to vector<16x16xf32>
    %101 = arith.mulf %96, %100 : vector<16x16xf32>
    %102 = vector.broadcast %82 : vector<1x16xf32> to vector<16x16xf32>
    %103 = arith.mulf %101, %102 : vector<16x16xf32>
    %104 = vector.broadcast %83 : vector<1x16xf32> to vector<16x16xf32>
    %105 = arith.addf %103, %104 : vector<16x16xf32>
    %c144 = arith.constant 144 : index
    %c0_39 = arith.constant 0 : index
    %106 = vector.load %arg1[%c144, %c0_39] : memref<880x64xf32, #tpu.memory_space<vmem>>, vector<16x48xf32>
    %cst_40 = arith.constant dense<0.000000e+00> : vector<16x48xf32>
    %107 = tpu.matmul %105, %106, %cst_40 {dimension_numbers = #tpu.dot_dimension_numbers<[1], [0], [0], [1], [0, 0, 1, 1], [], []>} : vector<16x16xf32>, vector<16x48xf32>, vector<16x48xf32> -> vector<16x48xf32>
    %c160 = arith.constant 160 : index
    %c0_41 = arith.constant 0 : index
    %108 = vector.load %arg1[%c160, %c0_41] : memref<880x64xf32, #tpu.memory_space<vmem>>, vector<1x48xf32>
    %109 = vector.broadcast %108 : vector<1x48xf32> to vector<16x48xf32>
    %110 = arith.addf %107, %109 : vector<16x48xf32>
    %111 = vector.extract_strided_slice %110 {offsets = [0, 0], sizes = [16, 16], strides = [1, 1]} : vector<16x48xf32> to vector<16x16xf32>
    %112 = vector.extract_strided_slice %110 {offsets = [0, 16], sizes = [16, 16], strides = [1, 1]} : vector<16x48xf32> to vector<16x16xf32>
    %113 = vector.extract_strided_slice %110 {offsets = [0, 32], sizes = [16, 16], strides = [1, 1]} : vector<16x48xf32> to vector<16x16xf32>
    %114 = tpu.concatenate %111, %111, %111, %111 in 0 : vector<16x16xf32>, vector<16x16xf32>, vector<16x16xf32>, vector<16x16xf32> -> vector<64x16xf32>
    %115 = arith.mulf %114, %2 : vector<64x16xf32>
    %cst_42 = arith.constant dense<0.000000e+00> : vector<64x16xf32>
    %116 = tpu.matmul %115, %112, %cst_42 {dimension_numbers = #tpu.dot_dimension_numbers<[1], [1], [0], [0], [0, 0, 1, 0], [], []>} : vector<64x16xf32>, vector<16x16xf32>, vector<64x16xf32> -> vector<64x16xf32>
    %cst_43 = arith.constant 5.000000e-01 : f32
    %117 = vector.broadcast %cst_43 : f32 to vector<64x16xf32>
    %118 = arith.mulf %116, %117 : vector<64x16xf32>
    %119 = arith.addf %118, %1 : vector<64x16xf32>
    %cst_44 = arith.constant dense<0xFF800000> : vector<64xf32>
    %120 = vector.multi_reduction <maximumf>, %119, %cst_44 [1] : vector<64x16xf32> to vector<64xf32>
    %121 = vector.shape_cast %120 : vector<64xf32> to vector<64x1xf32>
    %122 = vector.broadcast %121 : vector<64x1xf32> to vector<64x16xf32>
    %123 = arith.subf %119, %122 : vector<64x16xf32>
    %124 = math.exp %123 : vector<64x16xf32>
    %cst_45 = arith.constant dense<0.000000e+00> : vector<64xf32>
    %125 = vector.multi_reduction <add>, %124, %cst_45 [1] : vector<64x16xf32> to vector<64xf32>
    %126 = vector.shape_cast %125 : vector<64xf32> to vector<64x1xf32>
    %127 = tpu.reciprocal %126 {approx = true} : vector<64x1xf32> -> vector<64x1xf32>
    %128 = vector.broadcast %127 : vector<64x1xf32> to vector<64x16xf32>
    %129 = arith.mulf %124, %128 : vector<64x16xf32>
    %cst_46 = arith.constant dense<0.000000e+00> : vector<64x16xf32>
    %130 = tpu.matmul %129, %113, %cst_46 {dimension_numbers = #tpu.dot_dimension_numbers<[1], [0], [0], [1], [0, 0, 1, 1], [], []>} : vector<64x16xf32>, vector<16x16xf32>, vector<64x16xf32> -> vector<64x16xf32>
    %131 = arith.mulf %130, %2 : vector<64x16xf32>
    %132 = vector.extract_strided_slice %131 {offsets = [0, 0], sizes = [16, 16], strides = [1, 1]} : vector<64x16xf32> to vector<16x16xf32>
    %133 = vector.extract_strided_slice %131 {offsets = [16, 0], sizes = [16, 16], strides = [1, 1]} : vector<64x16xf32> to vector<16x16xf32>
    %134 = arith.addf %132, %133 : vector<16x16xf32>
    %135 = vector.extract_strided_slice %131 {offsets = [32, 0], sizes = [16, 16], strides = [1, 1]} : vector<64x16xf32> to vector<16x16xf32>
    %136 = arith.addf %134, %135 : vector<16x16xf32>
    %137 = vector.extract_strided_slice %131 {offsets = [48, 0], sizes = [16, 16], strides = [1, 1]} : vector<64x16xf32> to vector<16x16xf32>
    %138 = arith.addf %136, %137 : vector<16x16xf32>
    %c168 = arith.constant 168 : index
    %c0_47 = arith.constant 0 : index
    %139 = vector.load %arg1[%c168, %c0_47] : memref<880x64xf32, #tpu.memory_space<vmem>>, vector<16x16xf32>
    %cst_48 = arith.constant dense<0.000000e+00> : vector<16x16xf32>
    %140 = tpu.matmul %138, %139, %cst_48 {dimension_numbers = #tpu.dot_dimension_numbers<[1], [0], [0], [1], [0, 0, 1, 1], [], []>} : vector<16x16xf32>, vector<16x16xf32>, vector<16x16xf32> -> vector<16x16xf32>
    %c184 = arith.constant 184 : index
    %c0_49 = arith.constant 0 : index
    %141 = vector.load %arg1[%c184, %c0_49] : memref<880x64xf32, #tpu.memory_space<vmem>>, vector<1x16xf32>
    %142 = vector.broadcast %141 : vector<1x16xf32> to vector<16x16xf32>
    %143 = arith.addf %140, %142 : vector<16x16xf32>
    %144 = arith.addf %105, %143 : vector<16x16xf32>
    %c192 = arith.constant 192 : index
    %c0_50 = arith.constant 0 : index
    %145 = vector.load %arg1[%c192, %c0_50] : memref<880x64xf32, #tpu.memory_space<vmem>>, vector<1x16xf32>
    %c200 = arith.constant 200 : index
    %c0_51 = arith.constant 0 : index
    %146 = vector.load %arg1[%c200, %c0_51] : memref<880x64xf32, #tpu.memory_space<vmem>>, vector<1x16xf32>
    %cst_52 = arith.constant dense<0.000000e+00> : vector<16xf32>
    %147 = vector.multi_reduction <add>, %144, %cst_52 [1] : vector<16x16xf32> to vector<16xf32>
    %148 = vector.shape_cast %147 : vector<16xf32> to vector<16x1xf32>
    %cst_53 = arith.constant 1.600000e+01 : f32
    %149 = vector.broadcast %cst_53 : f32 to vector<16x1xf32>
    %150 = arith.divf %148, %149 : vector<16x1xf32>
    %151 = vector.broadcast %150 : vector<16x1xf32> to vector<16x16xf32>
    %152 = arith.subf %144, %151 : vector<16x16xf32>
    %153 = arith.mulf %152, %152 : vector<16x16xf32>
    %cst_54 = arith.constant dense<0.000000e+00> : vector<16xf32>
    %154 = vector.multi_reduction <add>, %153, %cst_54 [1] : vector<16x16xf32> to vector<16xf32>
    %155 = vector.shape_cast %154 : vector<16xf32> to vector<16x1xf32>
    %cst_55 = arith.constant 1.600000e+01 : f32
    %156 = vector.broadcast %cst_55 : f32 to vector<16x1xf32>
    %157 = arith.divf %155, %156 : vector<16x1xf32>
    %158 = vector.broadcast %150 : vector<16x1xf32> to vector<16x16xf32>
    %159 = arith.subf %144, %158 : vector<16x16xf32>
    %cst_56 = arith.constant 9.99999974E-6 : f32
    %160 = vector.broadcast %cst_56 : f32 to vector<16x1xf32>
    %161 = arith.addf %157, %160 : vector<16x1xf32>
    %162 = math.rsqrt %161 : vector<16x1xf32>
    %163 = vector.broadcast %162 : vector<16x1xf32> to vector<16x16xf32>
    %164 = arith.mulf %159, %163 : vector<16x16xf32>
    %165 = vector.broadcast %145 : vector<1x16xf32> to vector<16x16xf32>
    %166 = arith.mulf %164, %165 : vector<16x16xf32>
    %167 = vector.broadcast %146 : vector<1x16xf32> to vector<16x16xf32>
    %168 = arith.addf %166, %167 : vector<16x16xf32>
    %c208 = arith.constant 208 : index
    %c0_57 = arith.constant 0 : index
    %169 = vector.load %arg1[%c208, %c0_57] : memref<880x64xf32, #tpu.memory_space<vmem>>, vector<16x32xf32>
    %cst_58 = arith.constant dense<0.000000e+00> : vector<16x32xf32>
    %170 = tpu.matmul %168, %169, %cst_58 {dimension_numbers = #tpu.dot_dimension_numbers<[1], [0], [0], [1], [0, 0, 1, 1], [], []>} : vector<16x16xf32>, vector<16x32xf32>, vector<16x32xf32> -> vector<16x32xf32>
    %c224 = arith.constant 224 : index
    %c0_59 = arith.constant 0 : index
    %171 = vector.load %arg1[%c224, %c0_59] : memref<880x64xf32, #tpu.memory_space<vmem>>, vector<1x32xf32>
    %172 = vector.broadcast %171 : vector<1x32xf32> to vector<16x32xf32>
    %173 = arith.addf %170, %172 : vector<16x32xf32>
    %cst_60 = arith.constant 0.000000e+00 : f32
    %174 = vector.broadcast %cst_60 : f32 to vector<16x32xf32>
    %175 = arith.maximumf %173, %174 : vector<16x32xf32>
    %c232 = arith.constant 232 : index
    %c0_61 = arith.constant 0 : index
    %176 = vector.load %arg1[%c232, %c0_61] : memref<880x64xf32, #tpu.memory_space<vmem>>, vector<32x16xf32>
    %cst_62 = arith.constant dense<0.000000e+00> : vector<16x16xf32>
    %177 = tpu.matmul %175, %176, %cst_62 {dimension_numbers = #tpu.dot_dimension_numbers<[1], [0], [0], [1], [0, 0, 1, 1], [], []>} : vector<16x32xf32>, vector<32x16xf32>, vector<16x16xf32> -> vector<16x16xf32>
    %c264 = arith.constant 264 : index
    %c0_63 = arith.constant 0 : index
    %178 = vector.load %arg1[%c264, %c0_63] : memref<880x64xf32, #tpu.memory_space<vmem>>, vector<1x16xf32>
    %179 = vector.broadcast %178 : vector<1x16xf32> to vector<16x16xf32>
    %180 = arith.addf %177, %179 : vector<16x16xf32>
    %181 = arith.addf %168, %180 : vector<16x16xf32>
    %c272 = arith.constant 272 : index
    %c0_64 = arith.constant 0 : index
    %182 = vector.load %arg1[%c272, %c0_64] : memref<880x64xf32, #tpu.memory_space<vmem>>, vector<1x16xf32>
    %c280 = arith.constant 280 : index
    %c0_65 = arith.constant 0 : index
    %183 = vector.load %arg1[%c280, %c0_65] : memref<880x64xf32, #tpu.memory_space<vmem>>, vector<1x16xf32>
    %cst_66 = arith.constant dense<0.000000e+00> : vector<16xf32>
    %184 = vector.multi_reduction <add>, %181, %cst_66 [1] : vector<16x16xf32> to vector<16xf32>
    %185 = vector.shape_cast %184 : vector<16xf32> to vector<16x1xf32>
    %cst_67 = arith.constant 1.600000e+01 : f32
    %186 = vector.broadcast %cst_67 : f32 to vector<16x1xf32>
    %187 = arith.divf %185, %186 : vector<16x1xf32>
    %188 = vector.broadcast %187 : vector<16x1xf32> to vector<16x16xf32>
    %189 = arith.subf %181, %188 : vector<16x16xf32>
    %190 = arith.mulf %189, %189 : vector<16x16xf32>
    %cst_68 = arith.constant dense<0.000000e+00> : vector<16xf32>
    %191 = vector.multi_reduction <add>, %190, %cst_68 [1] : vector<16x16xf32> to vector<16xf32>
    %192 = vector.shape_cast %191 : vector<16xf32> to vector<16x1xf32>
    %cst_69 = arith.constant 1.600000e+01 : f32
    %193 = vector.broadcast %cst_69 : f32 to vector<16x1xf32>
    %194 = arith.divf %192, %193 : vector<16x1xf32>
    %195 = vector.broadcast %187 : vector<16x1xf32> to vector<16x16xf32>
    %196 = arith.subf %181, %195 : vector<16x16xf32>
    %cst_70 = arith.constant 9.99999974E-6 : f32
    %197 = vector.broadcast %cst_70 : f32 to vector<16x1xf32>
    %198 = arith.addf %194, %197 : vector<16x1xf32>
    %199 = math.rsqrt %198 : vector<16x1xf32>
    %200 = vector.broadcast %199 : vector<16x1xf32> to vector<16x16xf32>
    %201 = arith.mulf %196, %200 : vector<16x16xf32>
    %202 = vector.broadcast %182 : vector<1x16xf32> to vector<16x16xf32>
    %203 = arith.mulf %201, %202 : vector<16x16xf32>
    %204 = vector.broadcast %183 : vector<1x16xf32> to vector<16x16xf32>
    %205 = arith.addf %203, %204 : vector<16x16xf32>
    %c112 = arith.constant 112 : index
    %c0_71 = arith.constant 0 : index
    %206 = vector.load %arg0[%c112, %c0_71] : memref<136x64xf32, #tpu.memory_space<vmem>>, vector<8x64xf32>
    %cst_72 = arith.constant dense<0.000000e+00> : vector<8x16xf32>
    %207 = tpu.matmul %206, %129, %cst_72 {dimension_numbers = #tpu.dot_dimension_numbers<[1], [0], [0], [1], [0, 0, 1, 1], [], []>} : vector<8x64xf32>, vector<64x16xf32>, vector<8x16xf32> -> vector<8x16xf32>
    %cst_73 = arith.constant 0.000000e+00 : f32
    %208 = vector.broadcast %cst_73 : f32 to vector<8x16xf32>
    %209 = arith.cmpf ogt, %207, %208 : vector<8x16xf32>
    %cst_74 = arith.constant 9.99999996E-13 : f32
    %210 = vector.broadcast %cst_74 : f32 to vector<8x16xf32>
    %211 = arith.maximumf %207, %210 : vector<8x16xf32>
    %212 = math.rsqrt %211 : vector<8x16xf32>
    %cst_75 = arith.constant 0.000000e+00 : f32
    %213 = vector.broadcast %cst_75 : f32 to vector<8x16xf32>
    %214 = arith.select %209, %212, %213 : vector<8x16xi1>, vector<8x16xf32>
    %215 = tpu.concatenate %214, %214, %214, %214 in 1 : vector<8x16xf32>, vector<8x16xf32>, vector<8x16xf32>, vector<8x16xf32> -> vector<8x64xf32>
    %c504 = arith.constant 504 : index
    %c0_76 = arith.constant 0 : index
    %216 = vector.load %arg1[%c504, %c0_76] : memref<880x64xf32, #tpu.memory_space<vmem>>, vector<8x64xf32>
    %217 = arith.mulf %215, %216 : vector<8x64xf32>
    %cst_77 = arith.constant dense<0.000000e+00> : vector<8x16xf32>
    %218 = tpu.matmul %217, %129, %cst_77 {dimension_numbers = #tpu.dot_dimension_numbers<[1], [0], [0], [1], [0, 0, 1, 1], [], []>} : vector<8x64xf32>, vector<64x16xf32>, vector<8x16xf32> -> vector<8x16xf32>
    %219 = arith.mulf %214, %218 : vector<8x16xf32>
    %c512 = arith.constant 512 : index
    %c0_78 = arith.constant 0 : index
    %220 = vector.load %arg1[%c512, %c0_78] : memref<880x64xf32, #tpu.memory_space<vmem>>, vector<64x8xf32>
    %cst_79 = arith.constant dense<0.000000e+00> : vector<64x16xf32>
    %221 = tpu.matmul %220, %219, %cst_79 {dimension_numbers = #tpu.dot_dimension_numbers<[1], [0], [0], [1], [0, 0, 1, 1], [], []>} : vector<64x8xf32>, vector<8x16xf32>, vector<64x16xf32> -> vector<64x16xf32>
    %c576 = arith.constant 576 : index
    %c0_80 = arith.constant 0 : index
    %222 = vector.load %arg1[%c576, %c0_80] : memref<880x64xf32, #tpu.memory_space<vmem>>, vector<64x16xf32>
    %223 = arith.mulf %221, %222 : vector<64x16xf32>
    %cst_81 = arith.constant dense<0.000000e+00> : vector<64xf32>
    %224 = vector.multi_reduction <add>, %223, %cst_81 [1] : vector<64x16xf32> to vector<64xf32>
    %225 = vector.shape_cast %224 : vector<64xf32> to vector<64x1xf32>
    %c296 = arith.constant 296 : index
    %c0_82 = arith.constant 0 : index
    %226 = vector.load %arg1[%c296, %c0_82] : memref<880x64xf32, #tpu.memory_space<vmem>>, vector<1x32xf32>
    %227 = vector.broadcast %225 : vector<64x1xf32> to vector<64x32xf32>
    %228 = vector.broadcast %226 : vector<1x32xf32> to vector<64x32xf32>
    %229 = arith.mulf %227, %228 : vector<64x32xf32>
    %c304 = arith.constant 304 : index
    %c0_83 = arith.constant 0 : index
    %230 = vector.load %arg1[%c304, %c0_83] : memref<880x64xf32, #tpu.memory_space<vmem>>, vector<1x32xf32>
    %231 = vector.broadcast %230 : vector<1x32xf32> to vector<64x32xf32>
    %232 = arith.addf %229, %231 : vector<64x32xf32>
    %233 = math.tanh %232 : vector<64x32xf32>
    %c120_84 = arith.constant 120 : index
    %c0_85 = arith.constant 0 : index
    %234 = vector.load %arg0[%c120_84, %c0_85] : memref<136x64xf32, #tpu.memory_space<vmem>>, vector<8x64xf32>
    %cst_86 = arith.constant dense<0.000000e+00> : vector<8x32xf32>
    %235 = tpu.matmul %234, %233, %cst_86 {dimension_numbers = #tpu.dot_dimension_numbers<[1], [0], [0], [1], [0, 0, 1, 1], [], []>} : vector<8x64xf32>, vector<64x32xf32>, vector<8x32xf32> -> vector<8x32xf32>
    %c312 = arith.constant 312 : index
    %c0_87 = arith.constant 0 : index
    %236 = vector.load %arg1[%c312, %c0_87] : memref<880x64xf32, #tpu.memory_space<vmem>>, vector<32x32xf32>
    %cst_88 = arith.constant dense<0.000000e+00> : vector<8x32xf32>
    %237 = tpu.matmul %235, %236, %cst_88 {dimension_numbers = #tpu.dot_dimension_numbers<[1], [0], [0], [1], [0, 0, 1, 1], [], []>} : vector<8x32xf32>, vector<32x32xf32>, vector<8x32xf32> -> vector<8x32xf32>
    %c344 = arith.constant 344 : index
    %c0_89 = arith.constant 0 : index
    %238 = vector.load %arg1[%c344, %c0_89] : memref<880x64xf32, #tpu.memory_space<vmem>>, vector<1x32xf32>
    %239 = vector.broadcast %238 : vector<1x32xf32> to vector<8x32xf32>
    %240 = arith.addf %237, %239 : vector<8x32xf32>
    %241 = vector.broadcast %0 : vector<16x1xf32> to vector<16x16xf32>
    %242 = arith.mulf %138, %241 : vector<16x16xf32>
    %c96 = arith.constant 96 : index
    %c0_90 = arith.constant 0 : index
    %243 = vector.load %arg0[%c96, %c0_90] : memref<136x64xf32, #tpu.memory_space<vmem>>, vector<16x16xf32>
    %cst_91 = arith.constant dense<0.000000e+00> : vector<16x16xf32>
    %244 = tpu.matmul %243, %242, %cst_91 {dimension_numbers = #tpu.dot_dimension_numbers<[1], [0], [0], [1], [0, 0, 1, 1], [], []>} : vector<16x16xf32>, vector<16x16xf32>, vector<16x16xf32> -> vector<16x16xf32>
    %245 = tpu.concatenate %242, %244 in 1 : vector<16x16xf32>, vector<16x16xf32> -> vector<16x32xf32>
    %246 = tpu.concatenate %245, %245 in 1 : vector<16x32xf32>, vector<16x32xf32> -> vector<16x64xf32>
    %c864 = arith.constant 864 : index
    %c0_92 = arith.constant 0 : index
    %247 = vector.load %arg1[%c864, %c0_92] : memref<880x64xf32, #tpu.memory_space<vmem>>, vector<16x64xf32>
    %248 = arith.mulf %246, %247 : vector<16x64xf32>
    %c640 = arith.constant 640 : index
    %c0_93 = arith.constant 0 : index
    %249 = vector.load %arg1[%c640, %c0_93] : memref<880x64xf32, #tpu.memory_space<vmem>>, vector<64x8xf32>
    %cst_94 = arith.constant dense<0.000000e+00> : vector<64x32xf32>
    %250 = tpu.matmul %249, %240, %cst_94 {dimension_numbers = #tpu.dot_dimension_numbers<[1], [0], [0], [1], [0, 0, 1, 1], [], []>} : vector<64x8xf32>, vector<8x32xf32>, vector<64x32xf32> -> vector<64x32xf32>
    %c704 = arith.constant 704 : index
    %c0_95 = arith.constant 0 : index
    %251 = vector.load %arg1[%c704, %c0_95] : memref<880x64xf32, #tpu.memory_space<vmem>>, vector<64x32xf32>
    %252 = arith.mulf %250, %251 : vector<64x32xf32>
    %c768 = arith.constant 768 : index
    %c0_96 = arith.constant 0 : index
    %253 = vector.load %arg1[%c768, %c0_96] : memref<880x64xf32, #tpu.memory_space<vmem>>, vector<32x16xf32>
    %cst_97 = arith.constant dense<0.000000e+00> : vector<64x16xf32>
    %254 = tpu.matmul %252, %253, %cst_97 {dimension_numbers = #tpu.dot_dimension_numbers<[1], [0], [0], [1], [0, 0, 1, 1], [], []>} : vector<64x32xf32>, vector<32x16xf32>, vector<64x16xf32> -> vector<64x16xf32>
    %c800 = arith.constant 800 : index
    %c0_98 = arith.constant 0 : index
    %255 = vector.load %arg1[%c800, %c0_98] : memref<880x64xf32, #tpu.memory_space<vmem>>, vector<64x16xf32>
    %256 = arith.mulf %254, %255 : vector<64x16xf32>
    %cst_99 = arith.constant dense<0.000000e+00> : vector<16x16xf32>
    %257 = tpu.matmul %248, %256, %cst_99 {dimension_numbers = #tpu.dot_dimension_numbers<[1], [0], [0], [1], [0, 0, 1, 1], [], []>} : vector<16x64xf32>, vector<64x16xf32>, vector<16x16xf32> -> vector<16x16xf32>
    %258 = vector.broadcast %0 : vector<16x1xf32> to vector<16x16xf32>
    %259 = arith.mulf %257, %258 : vector<16x16xf32>
    %c352 = arith.constant 352 : index
    %c0_100 = arith.constant 0 : index
    %260 = vector.load %arg1[%c352, %c0_100] : memref<880x64xf32, #tpu.memory_space<vmem>>, vector<16x16xf32>
    %cst_101 = arith.constant dense<0.000000e+00> : vector<16x16xf32>
    %261 = tpu.matmul %205, %260, %cst_101 {dimension_numbers = #tpu.dot_dimension_numbers<[1], [0], [0], [1], [0, 0, 1, 1], [], []>} : vector<16x16xf32>, vector<16x16xf32>, vector<16x16xf32> -> vector<16x16xf32>
    %c368 = arith.constant 368 : index
    %c0_102 = arith.constant 0 : index
    %262 = vector.load %arg1[%c368, %c0_102] : memref<880x64xf32, #tpu.memory_space<vmem>>, vector<16x16xf32>
    %cst_103 = arith.constant dense<0.000000e+00> : vector<16x16xf32>
    %263 = tpu.matmul %259, %262, %cst_103 {dimension_numbers = #tpu.dot_dimension_numbers<[1], [0], [0], [1], [0, 0, 1, 1], [], []>} : vector<16x16xf32>, vector<16x16xf32>, vector<16x16xf32> -> vector<16x16xf32>
    %264 = arith.addf %261, %263 : vector<16x16xf32>
    %c384 = arith.constant 384 : index
    %c0_104 = arith.constant 0 : index
    %265 = vector.load %arg1[%c384, %c0_104] : memref<880x64xf32, #tpu.memory_space<vmem>>, vector<1x16xf32>
    %266 = vector.broadcast %265 : vector<1x16xf32> to vector<16x16xf32>
    %267 = arith.addf %264, %266 : vector<16x16xf32>
    %c128_105 = arith.constant 128 : index
    %c0_106 = arith.constant 0 : index
    %268 = vector.load %arg0[%c128_105, %c0_106] : memref<136x64xf32, #tpu.memory_space<vmem>>, vector<2x16xf32>
    %cst_107 = arith.constant dense<0.000000e+00> : vector<2x16xf32>
    %269 = tpu.matmul %268, %267, %cst_107 {dimension_numbers = #tpu.dot_dimension_numbers<[1], [0], [0], [1], [0, 0, 1, 1], [], []>} : vector<2x16xf32>, vector<16x16xf32>, vector<2x16xf32> -> vector<2x16xf32>
    %c392 = arith.constant 392 : index
    %c0_108 = arith.constant 0 : index
    %270 = vector.load %arg1[%c392, %c0_108] : memref<880x64xf32, #tpu.memory_space<vmem>>, vector<16x16xf32>
    %cst_109 = arith.constant dense<0.000000e+00> : vector<2x16xf32>
    %271 = tpu.matmul %269, %270, %cst_109 {dimension_numbers = #tpu.dot_dimension_numbers<[1], [0], [0], [1], [0, 0, 1, 1], [], []>} : vector<2x16xf32>, vector<16x16xf32>, vector<2x16xf32> -> vector<2x16xf32>
    %c408 = arith.constant 408 : index
    %c0_110 = arith.constant 0 : index
    %272 = vector.load %arg1[%c408, %c0_110] : memref<880x64xf32, #tpu.memory_space<vmem>>, vector<1x16xf32>
    %273 = vector.broadcast %272 : vector<1x16xf32> to vector<2x16xf32>
    %274 = arith.addf %271, %273 : vector<2x16xf32>
    %cst_111 = arith.constant 0.000000e+00 : f32
    %275 = vector.broadcast %cst_111 : f32 to vector<2x16xf32>
    %276 = arith.maximumf %274, %275 : vector<2x16xf32>
    %c416 = arith.constant 416 : index
    %c0_112 = arith.constant 0 : index
    %277 = vector.load %arg1[%c416, %c0_112] : memref<880x64xf32, #tpu.memory_space<vmem>>, vector<16x3xf32>
    %cst_113 = arith.constant dense<0.000000e+00> : vector<2x3xf32>
    %278 = tpu.matmul %276, %277, %cst_113 {dimension_numbers = #tpu.dot_dimension_numbers<[1], [0], [0], [1], [0, 0, 1, 1], [], []>} : vector<2x16xf32>, vector<16x3xf32>, vector<2x3xf32> -> vector<2x3xf32>
    %c432 = arith.constant 432 : index
    %c0_114 = arith.constant 0 : index
    %279 = vector.load %arg1[%c432, %c0_114] : memref<880x64xf32, #tpu.memory_space<vmem>>, vector<1x3xf32>
    %280 = vector.broadcast %279 : vector<1x3xf32> to vector<2x3xf32>
    %281 = arith.addf %278, %280 : vector<2x3xf32>
    %c0_115 = arith.constant 0 : index
    %c0_116 = arith.constant 0 : index
    %282 = vector.load %arg2[%c0_115, %c0_116] : memref<2x3xf32, #tpu.memory_space<vmem>>, vector<2x3xf32>
    tpu.vector_store %arg2[%c0_115, %c0_116], %281 {strides = array<i32>} : memref<2x3xf32, #tpu.memory_space<vmem>>, vector<2x3xf32>,
    return
  }
}

</mosaic_0001>

<llo_original>
// kernel: forward.1
$region0: #{forward.1}
  #allocation0 [shape = 'u32[]', space=smem, size = 0x4, offset = 0x4, fixed_abs, tag = 'smem constant byte address 0x4 - core index']
  #allocation1 [shape = 'u32[144,128]{1,0:T(1,128)}', space=vmem, size = 0x12000, scoped, tag = 'internal scratch']
  %s0 = inlined_call_operand.vmem [shape: f32[136,64], index: 0, kind: input, shape index: {}]
  %s1 = inlined_call_operand.vmem [shape: f32[880,64], index: 1, kind: input, shape index: {}]
  %s2 = inlined_call_operand.hbm [shape: f32[2,3], index: 2, kind: output, shape index: {}]
  %s3 = sld [smem:[#allocation0]]
  $region18: #{forward.1} parent=0
    _
  %s5 = ssub.s32 1, %s3
  %s6 = scalar_select 0, %s5, %s3
  $region1: #{forward.1} parent=0
    #allocation2 [shape = 'u8[1024]{0}', space=vmem, size = 0x400, scoped, tag = 'output window, operand 0, single buffered']
    #allocation3 [shape = 's32[1]{0}', space=sflag, size = 0x4, scoped, tag = 'scoped memory for forward.1']
    %7 = vsyncpa [#allocation3], 0
    // Predicated region
    $region2: #{forward.1} parent=1 // pred_check
      _
    $region3: #{forward.1} parent=1 // pred_check_branch
      %9 = sbr.rel (0) target = $region5
    $region4: #{forward.1} parent=1 // pred_region
      _
    $region5: #{forward.1} parent=1 // pred_fallthru
      _
    // Predicated region
    $region6: #{forward.1} parent=1 // pred_check
      _
    $region7: #{forward.1} parent=1 // pred_check_branch
      %11 = sbr.rel (0) target = $region9
    $region8: #{forward.1} parent=1 // pred_region
      _
    $region9: #{forward.1} parent=1 // pred_fallthru
      _
    %v12 = vld [vmem:[%s0 + $0x10] sm:$0xff]
    %v13 = vld [vmem:[%s0 + $0x18] sm:$0xff]
    %v14 = vld [vmem:[%s0 + $0x20] sm:$0xff]
    %v15 = vld [vmem:[%s0 + $0x28] sm:$0xff]
    %v16 = vld [vmem:[%s0 + $0x30] sm:$0xff]
    %v17 = vld [vmem:[%s0 + $0x38] sm:$0xff]
    %v18 = vld [vmem:[%s0 + $0x40] sm:$0xff]
    %v19 = vld [vmem:[%s0 + $0x48] sm:$0xff]
    %v20 = vld [vmem:[%s0 + $0x50] sm:$0xff]
    %v21 = vld [vmem:[%s0 + $0x58] sm:$0xff]
    %v22 = vld [vmem:[%s1 + $0x1b8] sm:$0xff]
    %v23 = vld [vmem:[%s1 + $0x1c0] sm:$0xff]
    %v24 = vld [vmem:[%s1 + $0x1c8] sm:$0xff]
    %v25 = vld [vmem:[%s1 + $0x1d0] sm:$0xff]
    %v26 = vld [vmem:[%s1 + $0x1d8] sm:$0xff]
    %v27 = vld [vmem:[%s1 + $0x1e0] sm:$0xff]
    %v28 = vld [vmem:[%s1 + $0x1e8] sm:$0xff]
    %v29 = vld [vmem:[%s1 + $0x1f0] sm:$0xff]
    %v30 = vld [vmem:[%s0] sm:$0xff]
    %v31 = vld [vmem:[%s0 + $0x8] sm:$0xff]
    %v32 = vld [vmem:[%s1 + $0x120] sm:$0x3f]
    %vm33 = vcmask 48128
    %v35 = vsel %vm33, %v30, 0
    %v38 = vsel %vm33, %v31, 0
    %vm40 = vcmask 1045504
    %v42 = vsel %vm40, %v32, 0
    %44 = vmatprep.subr.mxu0 0.0
    %45 = vmatpush1.msra.mxu0 0.0
    %46 = vmatprep.subr.mxu0 0.0
    %47 = vmatpush1.msra.mxu0 0.0
    %48 = vmatprep.subr.mxu0 0.0
    %49 = vmatpush1.msra.mxu0 0.0
    %50 = vmatprep.subr.mxu0 0.0
    %51 = vmatpush1.msra.mxu0 0.0
    %52 = vmatprep.subr.mxu0 0.0
    %53 = vmatpush1.msra.mxu0 0.0
    %54 = vmatprep.subr.mxu0 0.0
    %55 = vmatpush1.msra.mxu0 0.0
    %56 = vmatprep.subr.mxu0 0.0
    %57 = vmatpush1.msra.mxu0 0.0
    %58 = vmatprep.subr.mxu0 0.0
    %59 = vmatpush1.msra.mxu0 0.0
    %60 = vmatprep.subr.mxu0 0.0
    %61 = vmatpush1.msra.mxu0 0.0
    %62 = vmatprep.subr.mxu0 0.0
    %63 = vmatpush1.msra.mxu0 0.0
    %64 = vmatprep.subr.mxu0 0.0
    %65 = vmatpush1.msra.mxu0 0.0
    %66 = vmatprep.subr.mxu0 0.0
    %67 = vmatpush1.msra.mxu0 0.0
    %68 = vmatprep.subr.mxu0 0.0
    %69 = vmatpush1.msra.mxu0 0.0
    %70 = vmatprep.subr.mxu0 0.0
    %71 = vmatpush1.msra.mxu0 0.0
    %72 = vmatprep.subr.mxu0 0.0
    %73 = vmatpush1.msra.mxu0 0.0
    %74 = vmatprep.subr.mxu0 0.0
    %75 = vmatpush1.msra.mxu0 %v42
    %76 = vmatprep.subr.mxu0 0.0
    %77 = vmatpush2.msra.mxu0 0.0
    %78 = vmatprep.subr.mxu0 0.0
    %79 = vmatpush2.msra.mxu0 0.0
    %80 = vmatprep.subr.mxu0 0.0
    %81 = vmatpush2.msra.mxu0 0.0
    %82 = vmatprep.subr.mxu0 0.0
    %83 = vmatpush2.msra.mxu0 0.0
    %84 = vmatprep.subr.mxu0 0.0
    %85 = vmatpush2.msra.mxu0 0.0
    %86 = vmatprep.subr.mxu0 0.0
    %87 = vmatpush2.msra.mxu0 0.0
    %88 = vmatprep.subr.mxu0 0.0
    %89 = vmatpush2.msra.mxu0 0.0
    %90 = vmatprep.subr.mxu0 0.0
    %91 = vmatpush2.msra.mxu0 0.0
    %92 = vmatprep.subr.mxu0 0.0
    %93 = vmatpush2.msra.mxu0 0.0
    %94 = vmatprep.subr.mxu0 0.0
    %95 = vmatpush2.msra.mxu0 0.0
    %96 = vmatprep.subr.mxu0 0.0
    %97 = vmatpush2.msra.mxu0 0.0
    %98 = vmatprep.subr.mxu0 0.0
    %99 = vmatpush2.msra.mxu0 0.0
    %100 = vmatprep.subr.mxu0 0.0
    %101 = vmatpush2.msra.mxu0 0.0
    %102 = vmatprep.subr.mxu0 0.0
    %103 = vmatpush2.msra.mxu0 0.0
    %104 = vmatprep.subr.mxu0 0.0
    %105 = vmatpush2.msra.mxu0 0.0
    %106 = vmatprep.subr.mxu0 0.0
    %107 = vmatpush2.msra.mxu0 0.0
    %108 = vmatprep.mubr.f32.mxu0 0.0
    %109 = vmatmul.mubr.f32.gmra.mxu0 %v35
    %v110 = vpop.f32.mrf.mxu0
    %v111 = vadd.f32 0.0, %v110
    %v112 = vpop.f32.mrf.mxu0
    %113 = vmatprep.mubr.f32.mxu0 0.0
    %114 = vmatmul.mubr.f32.gmra.mxu0 %v38
    %v115 = vpop.f32.mrf.mxu0
    %v116 = vadd.f32 0.0, %v115
    %v117 = vpop.f32.mrf.mxu0
    %118 = vdwg.mxu0
    %v119 = vld [vmem:[%s1] sm:$0xff]
    %v120 = vld [vmem:[%s1 + $0x8] sm:$0xff]
    %v121 = vld [vmem:[%s1 + $0x10] sm:$0x1]
    %v122 = vlaneseq
    %v123 = vshrl.u32 %v122, 7
    %v124 = vsub.s32 0, %v123
    %v125 = vrot.slane %v121, %v124
    %vm126 = vcmask 130048
    %v128 = vsel %vm126, %v111, 0
    %v131 = vsel %vm126, %v116, 0
    %133 = vmatprep.subr.mxu0 0.0
    %134 = vmatpush1.msra.mxu0 0.0
    %135 = vmatprep.subr.mxu0 0.0
    %136 = vmatpush1.msra.mxu0 0.0
    %137 = vmatprep.subr.mxu0 0.0
    %138 = vmatpush1.msra.mxu0 0.0
    %139 = vmatprep.subr.mxu0 0.0
    %140 = vmatpush1.msra.mxu0 0.0
    %141 = vmatprep.subr.mxu0 0.0
    %142 = vmatpush1.msra.mxu0 0.0
    %143 = vmatprep.subr.mxu0 0.0
    %144 = vmatpush1.msra.mxu0 0.0
    %145 = vmatprep.subr.mxu0 0.0
    %146 = vmatpush1.msra.mxu0 0.0
    %147 = vmatprep.subr.mxu0 0.0
    %148 = vmatpush1.msra.mxu0 0.0
    %149 = vmatprep.subr.mxu0 0.0
    %150 = vmatpush1.msra.mxu0 0.0
    %151 = vmatprep.subr.mxu0 0.0
    %152 = vmatpush1.msra.mxu0 0.0
    %153 = vmatprep.subr.mxu0 0.0
    %154 = vmatpush1.msra.mxu0 0.0
    %155 = vmatprep.subr.mxu0 0.0
    %156 = vmatpush1.msra.mxu0 0.0
    %157 = vmatprep.subr.mxu0 0.0
    %158 = vmatpush1.msra.mxu0 0.0
    %159 = vmatprep.subr.mxu0 0.0
    %160 = vmatpush1.msra.mxu0 0.0
    %161 = vmatprep.subr.mxu0 0.0
    %162 = vmatpush1.msra.mxu0 %v120
    %163 = vmatprep.subr.mxu0 0.0
    %164 = vmatpush1.msra.mxu0 %v119
    %165 = vmatprep.subr.mxu0 0.0
    %166 = vmatpush2.msra.mxu0 0.0
    %167 = vmatprep.subr.mxu0 0.0
    %168 = vmatpush2.msra.mxu0 0.0
    %169 = vmatprep.subr.mxu0 0.0
    %170 = vmatpush2.msra.mxu0 0.0
    %171 = vmatprep.subr.mxu0 0.0
    %172 = vmatpush2.msra.mxu0 0.0
    %173 = vmatprep.subr.mxu0 0.0
    %174 = vmatpush2.msra.mxu0 0.0
    %175 = vmatprep.subr.mxu0 0.0
    %176 = vmatpush2.msra.mxu0 0.0
    %177 = vmatprep.subr.mxu0 0.0
    %178 = vmatpush2.msra.mxu0 0.0
    %179 = vmatprep.subr.mxu0 0.0
    %180 = vmatpush2.msra.mxu0 0.0
    %181 = vmatprep.subr.mxu0 0.0
    %182 = vmatpush2.msra.mxu0 0.0
    %183 = vmatprep.subr.mxu0 0.0
    %184 = vmatpush2.msra.mxu0 0.0
    %185 = vmatprep.subr.mxu0 0.0
    %186 = vmatpush2.msra.mxu0 0.0
    %187 = vmatprep.subr.mxu0 0.0
    %188 = vmatpush2.msra.mxu0 0.0
    %189 = vmatprep.subr.mxu0 0.0
    %190 = vmatpush2.msra.mxu0 0.0
    %191 = vmatprep.subr.mxu0 0.0
    %192 = vmatpush2.msra.mxu0 0.0
    %193 = vmatprep.subr.mxu0 0.0
    %194 = vmatpush2.msra.mxu0 0.0
    %195 = vmatprep.subr.mxu0 0.0
    %196 = vmatpush2.msra.mxu0 0.0
    %197 = vmatprep.mubr.f32.mxu0 0.0
    %198 = vmatmul.mubr.f32.gmra.mxu0 %v128
    %v199 = vpop.f32.mrf.mxu0
    %v200 = vadd.f32 %v125, %v199
    %v201 = vpop.f32.mrf.mxu0
    %202 = vmatprep.mubr.f32.mxu0 0.0
    %203 = vmatmul.mubr.f32.gmra.mxu0 %v131
    %v204 = vpop.f32.mrf.mxu0
    %v205 = vadd.f32 %v125, %v204
    %v206 = vpop.f32.mrf.mxu0
    %207 = vdwg.mxu0
    %v208 = vmul.f32 %v200, %v22
    %v209 = vmul.f32 %v205, %v23
    %v210 = vmul.f32 %v200, %v24
    %v211 = vmul.f32 %v205, %v25
    %v212 = vmul.f32 %v200, %v26
    %v213 = vmul.f32 %v205, %v27
    %v214 = vmul.f32 %v200, %v28
    %v215 = vmul.f32 %v205, %v29
    %218 = vrot.lane.b32.xlu0 %v200, 112
    %v219 = vpop.permute.xlu0 %218
    %220 = vrot.lane.b32.xlu0 %v205, 112
    %v221 = vpop.permute.xlu0 %220
    %v223 = vsel %vm126, %v208, 0
    %v226 = vsel %vm126, %v209, 0
    %v229 = vsel %vm126, %v210, 0
    %v232 = vsel %vm126, %v211, 0
    %v235 = vsel %vm126, %v212, 0
    %v238 = vsel %vm126, %v213, 0
    %v241 = vsel %vm126, %v214, 0
    %v244 = vsel %vm126, %v215, 0
    %v246 = vsel %vm126, %v219, 0
    %v248 = vsel %vm126, %v221, 0
    %250 = vmatprep.subr.mxu0 0.0
    %251 = vmatpush1.xpose.msra.mxu0 0.0
    %252 = vmatprep.subr.mxu0 0.0
    %253 = vmatpush1.xpose.msra.mxu0 0.0
    %254 = vmatprep.subr.mxu0 0.0
    %255 = vmatpush1.xpose.msra.mxu0 0.0
    %256 = vmatprep.subr.mxu0 0.0
    %257 = vmatpush1.xpose.msra.mxu0 0.0
    %258 = vmatprep.subr.mxu0 0.0
    %259 = vmatpush1.xpose.msra.mxu0 0.0
    %260 = vmatprep.subr.mxu0 0.0
    %261 = vmatpush1.xpose.msra.mxu0 0.0
    %262 = vmatprep.subr.mxu0 0.0
    %263 = vmatpush1.xpose.msra.mxu0 0.0
    %264 = vmatprep.subr.mxu0 0.0
    %265 = vmatpush1.xpose.msra.mxu0 0.0
    %266 = vmatprep.subr.mxu0 0.0
    %267 = vmatpush1.xpose.msra.mxu0 0.0
    %268 = vmatprep.subr.mxu0 0.0
    %269 = vmatpush1.xpose.msra.mxu0 0.0
    %270 = vmatprep.subr.mxu0 0.0
    %271 = vmatpush1.xpose.msra.mxu0 0.0
    %272 = vmatprep.subr.mxu0 0.0
    %273 = vmatpush1.xpose.msra.mxu0 0.0
    %274 = vmatprep.subr.mxu0 0.0
    %275 = vmatpush1.xpose.msra.mxu0 0.0
    %276 = vmatprep.subr.mxu0 0.0
    %277 = vmatpush1.xpose.msra.mxu0 0.0
    %278 = vmatprep.subr.mxu0 0.0
    %279 = vmatpush1.xpose.msra.mxu0 %v248
    %280 = vmatprep.subr.mxu0 0.0
    %281 = vmatpush1.xpose.msra.mxu0 %v246
    %282 = vmatprep.subr.mxu0 0.0
    %283 = vmatpush2.xpose.msra.mxu0 0.0
    %284 = vmatprep.subr.mxu0 0.0
    %285 = vmatpush2.xpose.msra.mxu0 0.0
    %286 = vmatprep.subr.mxu0 0.0
    %287 = vmatpush2.xpose.msra.mxu0 0.0
    %288 = vmatprep.subr.mxu0 0.0
    %289 = vmatpush2.xpose.msra.mxu0 0.0
    %290 = vmatprep.subr.mxu0 0.0
    %291 = vmatpush2.xpose.msra.mxu0 0.0
    %292 = vmatprep.subr.mxu0 0.0
    %293 = vmatpush2.xpose.msra.mxu0 0.0
    %294 = vmatprep.subr.mxu0 0.0
    %295 = vmatpush2.xpose.msra.mxu0 0.0
    %296 = vmatprep.subr.mxu0 0.0
    %297 = vmatpush2.xpose.msra.mxu0 0.0
    %298 = vmatprep.subr.mxu0 0.0
    %299 = vmatpush2.xpose.msra.mxu0 0.0
    %300 = vmatprep.subr.mxu0 0.0
    %301 = vmatpush2.xpose.msra.mxu0 0.0
    %302 = vmatprep.subr.mxu0 0.0
    %303 = vmatpush2.xpose.msra.mxu0 0.0
    %304 = vmatprep.subr.mxu0 0.0
    %305 = vmatpush2.xpose.msra.mxu0 0.0
    %306 = vmatprep.subr.mxu0 0.0
    %307 = vmatpush2.xpose.msra.mxu0 0.0
    %308 = vmatprep.subr.mxu0 0.0
    %309 = vmatpush2.xpose.msra.mxu0 0.0
    %310 = vmatprep.subr.mxu0 0.0
    %311 = vmatpush2.xpose.msra.mxu0 0.0
    %312 = vmatprep.subr.mxu0 0.0
    %313 = vmatpush2.xpose.msra.mxu0 0.0
    %314 = vmatprep.mubr.f32.mxu0 0.0
    %315 = vmatmul.mubr.f32.gmra.mxu0 %v223
    %v316 = vpop.f32.mrf.mxu0
    %v317 = vadd.f32 0.0, %v316
    %v318 = vpop.f32.mrf.mxu0
    %319 = vmatprep.mubr.f32.mxu0 0.0
    %320 = vmatmul.mubr.f32.gmra.mxu0 %v226
    %v321 = vpop.f32.mrf.mxu0
    %v322 = vadd.f32 0.0, %v321
    %v323 = vpop.f32.mrf.mxu0
    %324 = vmatprep.mubr.f32.mxu0 0.0
    %325 = vmatmul.mubr.f32.gmra.mxu0 %v229
    %v326 = vpop.f32.mrf.mxu0
    %v327 = vadd.f32 0.0, %v326
    %v328 = vpop.f32.mrf.mxu0
    %329 = vmatprep.mubr.f32.mxu0 0.0
    %330 = vmatmul.mubr.f32.gmra.mxu0 %v232
    %v331 = vpop.f32.mrf.mxu0
    %v332 = vadd.f32 0.0, %v331
    %v333 = vpop.f32.mrf.mxu0
    %334 = vmatprep.mubr.f32.mxu0 0.0
    %335 = vmatmul.mubr.f32.gmra.mxu0 %v235
    %v336 = vpop.f32.mrf.mxu0
    %v337 = vadd.f32 0.0, %v336
    %v338 = vpop.f32.mrf.mxu0
    %339 = vmatprep.mubr.f32.mxu0 0.0
    %340 = vmatmul.mubr.f32.gmra.mxu0 %v238
    %v341 = vpop.f32.mrf.mxu0
    %v342 = vadd.f32 0.0, %v341
    %v343 = vpop.f32.mrf.mxu0
    %344 = vmatprep.mubr.f32.mxu0 0.0
    %345 = vmatmul.mubr.f32.gmra.mxu0 %v241
    %v346 = vpop.f32.mrf.mxu0
    %v347 = vadd.f32 0.0, %v346
    %v348 = vpop.f32.mrf.mxu0
    %349 = vmatprep.mubr.f32.mxu0 0.0
    %350 = vmatmul.mubr.f32.gmra.mxu0 %v244
    %v351 = vpop.f32.mrf.mxu0
    %v352 = vadd.f32 0.0, %v351
    %v353 = vpop.f32.mrf.mxu0
    %354 = vdwg.mxu0
    %v355 = vmul.f32 %v317, 0.5
    %v356 = vmul.f32 %v322, 0.5
    %v357 = vmul.f32 %v327, 0.5
    %v358 = vmul.f32 %v332, 0.5
    %v359 = vmul.f32 %v337, 0.5
    %v360 = vmul.f32 %v342, 0.5
    %v361 = vmul.f32 %v347, 0.5
    %v362 = vmul.f32 %v352, 0.5
    %v363 = vadd.f32 %v355, %v14
    %v364 = vadd.f32 %v356, %v15
    %v365 = vadd.f32 %v357, %v16
    %v366 = vadd.f32 %v358, %v17
    %v367 = vadd.f32 %v359, %v18
    %v368 = vadd.f32 %v360, %v19
    %v369 = vadd.f32 %v361, %v20
    %v370 = vadd.f32 %v362, %v21
    %v371 = vsel %vm126, %v363, -inf
    %372 = vmax.xlane.f32.xlu0 %v371
    %v373 = vpop.xlane.xlu0 %372
    %v374 = vsel %vm126, %v364, -inf
    %375 = vmax.xlane.f32.xlu0 %v374
    %v376 = vpop.xlane.xlu0 %375
    %v377 = vsel %vm126, %v365, -inf
    %378 = vmax.xlane.f32.xlu0 %v377
    %v379 = vpop.xlane.xlu0 %378
    %v380 = vsel %vm126, %v366, -inf
    %381 = vmax.xlane.f32.xlu0 %v380
    %v382 = vpop.xlane.xlu0 %381
    %v383 = vsel %vm126, %v367, -inf
    %384 = vmax.xlane.f32.xlu0 %v383
    %v385 = vpop.xlane.xlu0 %384
    %v386 = vsel %vm126, %v368, -inf
    %387 = vmax.xlane.f32.xlu0 %v386
    %v388 = vpop.xlane.xlu0 %387
    %v389 = vsel %vm126, %v369, -inf
    %390 = vmax.xlane.f32.xlu0 %v389
    %v391 = vpop.xlane.xlu0 %390
    %v392 = vsel %vm126, %v370, -inf
    %393 = vmax.xlane.f32.xlu0 %v392
    %v394 = vpop.xlane.xlu0 %393
    %v395 = vsub.f32 %v363, %v373
    %v396 = vsub.f32 %v364, %v376
    %v397 = vsub.f32 %v365, %v379
    %v398 = vsub.f32 %v366, %v382
    %v399 = vsub.f32 %v367, %v385
    %v400 = vsub.f32 %v368, %v388
    %v401 = vsub.f32 %v369, %v391
    %v402 = vsub.f32 %v370, %v394
    %v403 = vmul.f32 %v395, 1.442695
    %v404 = vpow.pop %v403
    %v405 = vmul.f32 %v396, 1.442695
    %v406 = vpow.pop %v405
    %v407 = vmul.f32 %v397, 1.442695
    %v408 = vpow.pop %v407
    %v409 = vmul.f32 %v398, 1.442695
    %v410 = vpow.pop %v409
    %v411 = vmul.f32 %v399, 1.442695
    %v412 = vpow.pop %v411
    %v413 = vmul.f32 %v400, 1.442695
    %v414 = vpow.pop %v413
    %v415 = vmul.f32 %v401, 1.442695
    %v416 = vpow.pop %v415
    %v417 = vmul.f32 %v402, 1.442695
    %v418 = vpow.pop %v417
    %v419 = vsel %vm126, %v404, 0.0
    %420 = vadd.xlane.f32.xlu0 %v419
    %v421 = vpop.xlane.xlu0 %420
    %v422 = vsel %vm126, %v406, 0.0
    %423 = vadd.xlane.f32.xlu0 %v422
    %v424 = vpop.xlane.xlu0 %423
    %v425 = vsel %vm126, %v408, 0.0
    %426 = vadd.xlane.f32.xlu0 %v425
    %v427 = vpop.xlane.xlu0 %426
    %v428 = vsel %vm126, %v410, 0.0
    %429 = vadd.xlane.f32.xlu0 %v428
    %v430 = vpop.xlane.xlu0 %429
    %v431 = vsel %vm126, %v412, 0.0
    %432 = vadd.xlane.f32.xlu0 %v431
    %v433 = vpop.xlane.xlu0 %432
    %v434 = vsel %vm126, %v414, 0.0
    %435 = vadd.xlane.f32.xlu0 %v434
    %v436 = vpop.xlane.xlu0 %435
    %v437 = vsel %vm126, %v416, 0.0
    %438 = vadd.xlane.f32.xlu0 %v437
    %v439 = vpop.xlane.xlu0 %438
    %v440 = vsel %vm126, %v418, 0.0
    %441 = vadd.xlane.f32.xlu0 %v440
    %v442 = vpop.xlane.xlu0 %441
    %v443 = vrcp.pop %v421
    %v444 = vrcp.pop %v424
    %v445 = vrcp.pop %v427
    %v446 = vrcp.pop %v430
    %v447 = vrcp.pop %v433
    %v448 = vrcp.pop %v436
    %v449 = vrcp.pop %v439
    %v450 = vrcp.pop %v442
    %v451 = vmul.f32 %v404, %v443
    %v452 = vmul.f32 %v406, %v444
    %v453 = vmul.f32 %v408, %v445
    %v454 = vmul.f32 %v410, %v446
    %v455 = vmul.f32 %v412, %v447
    %v456 = vmul.f32 %v414, %v448
    %v457 = vmul.f32 %v416, %v449
    %v458 = vmul.f32 %v418, %v450
    %459 = vrot.lane.b32.xlu0 %v200, 96
    %v460 = vpop.permute.xlu0 %459
    %461 = vrot.lane.b32.xlu0 %v205, 96
    %v462 = vpop.permute.xlu0 %461
    %v466 = vsel %vm126, %v451, 0
    %v469 = vsel %vm126, %v452, 0
    %v472 = vsel %vm126, %v453, 0
    %v475 = vsel %vm126, %v454, 0
    %v478 = vsel %vm126, %v455, 0
    %v481 = vsel %vm126, %v456, 0
    %v484 = vsel %vm126, %v457, 0
    %v487 = vsel %vm126, %v458, 0
    %489 = vmatprep.subr.mxu0 0.0
    %490 = vmatpush1.msra.mxu0 0.0
    %491 = vmatprep.subr.mxu0 0.0
    %492 = vmatpush1.msra.mxu0 0.0
    %493 = vmatprep.subr.mxu0 0.0
    %494 = vmatpush1.msra.mxu0 0.0
    %495 = vmatprep.subr.mxu0 0.0
    %496 = vmatpush1.msra.mxu0 0.0
    %497 = vmatprep.subr.mxu0 0.0
    %498 = vmatpush1.msra.mxu0 0.0
    %499 = vmatprep.subr.mxu0 0.0
    %500 = vmatpush1.msra.mxu0 0.0
    %501 = vmatprep.subr.mxu0 0.0
    %502 = vmatpush1.msra.mxu0 0.0
    %503 = vmatprep.subr.mxu0 0.0
    %504 = vmatpush1.msra.mxu0 0.0
    %505 = vmatprep.subr.mxu0 0.0
    %506 = vmatpush1.msra.mxu0 0.0
    %507 = vmatprep.subr.mxu0 0.0
    %508 = vmatpush1.msra.mxu0 0.0
    %509 = vmatprep.subr.mxu0 0.0
    %510 = vmatpush1.msra.mxu0 0.0
    %511 = vmatprep.subr.mxu0 0.0
    %512 = vmatpush1.msra.mxu0 0.0
    %513 = vmatprep.subr.mxu0 0.0
    %514 = vmatpush1.msra.mxu0 0.0
    %515 = vmatprep.subr.mxu0 0.0
    %516 = vmatpush1.msra.mxu0 0.0
    %517 = vmatprep.subr.mxu0 0.0
    %518 = vmatpush1.msra.mxu0 %v462
    %519 = vmatprep.subr.mxu0 0.0
    %520 = vmatpush1.msra.mxu0 %v460
    %521 = vmatprep.subr.mxu0 0.0
    %522 = vmatpush2.msra.mxu0 0.0
    %523 = vmatprep.subr.mxu0 0.0
    %524 = vmatpush2.msra.mxu0 0.0
    %525 = vmatprep.subr.mxu0 0.0
    %526 = vmatpush2.msra.mxu0 0.0
    %527 = vmatprep.subr.mxu0 0.0
    %528 = vmatpush2.msra.mxu0 0.0
    %529 = vmatprep.subr.mxu0 0.0
    %530 = vmatpush2.msra.mxu0 0.0
    %531 = vmatprep.subr.mxu0 0.0
    %532 = vmatpush2.msra.mxu0 0.0
    %533 = vmatprep.subr.mxu0 0.0
    %534 = vmatpush2.msra.mxu0 0.0
    %535 = vmatprep.subr.mxu0 0.0
    %536 = vmatpush2.msra.mxu0 0.0
    %537 = vmatprep.subr.mxu0 0.0
    %538 = vmatpush2.msra.mxu0 0.0
    %539 = vmatprep.subr.mxu0 0.0
    %540 = vmatpush2.msra.mxu0 0.0
    %541 = vmatprep.subr.mxu0 0.0
    %542 = vmatpush2.msra.mxu0 0.0
    %543 = vmatprep.subr.mxu0 0.0
    %544 = vmatpush2.msra.mxu0 0.0
    %545 = vmatprep.subr.mxu0 0.0
    %546 = vmatpush2.msra.mxu0 0.0
    %547 = vmatprep.subr.mxu0 0.0
    %548 = vmatpush2.msra.mxu0 0.0
    %549 = vmatprep.subr.mxu0 0.0
    %550 = vmatpush2.msra.mxu0 0.0
    %551 = vmatprep.subr.mxu0 0.0
    %552 = vmatpush2.msra.mxu0 0.0
    %553 = vmatprep.mubr.f32.mxu0 0.0
    %554 = vmatmul.mubr.f32.gmra.mxu0 %v466
    %v555 = vpop.f32.mrf.mxu0
    %v556 = vadd.f32 0.0, %v555
    %v557 = vpop.f32.mrf.mxu0
    %558 = vmatprep.mubr.f32.mxu0 0.0
    %559 = vmatmul.mubr.f32.gmra.mxu0 %v469
    %v560 = vpop.f32.mrf.mxu0
    %v561 = vadd.f32 0.0, %v560
    %v562 = vpop.f32.mrf.mxu0
    %563 = vmatprep.mubr.f32.mxu0 0.0
    %564 = vmatmul.mubr.f32.gmra.mxu0 %v472
    %v565 = vpop.f32.mrf.mxu0
    %v566 = vadd.f32 0.0, %v565
    %v567 = vpop.f32.mrf.mxu0
    %568 = vmatprep.mubr.f32.mxu0 0.0
    %569 = vmatmul.mubr.f32.gmra.mxu0 %v475
    %v570 = vpop.f32.mrf.mxu0
    %v571 = vadd.f32 0.0, %v570
    %v572 = vpop.f32.mrf.mxu0
    %573 = vmatprep.mubr.f32.mxu0 0.0
    %574 = vmatmul.mubr.f32.gmra.mxu0 %v478
    %v575 = vpop.f32.mrf.mxu0
    %v576 = vadd.f32 0.0, %v575
    %v577 = vpop.f32.mrf.mxu0
    %578 = vmatprep.mubr.f32.mxu0 0.0
    %579 = vmatmul.mubr.f32.gmra.mxu0 %v481
    %v580 = vpop.f32.mrf.mxu0
    %v581 = vadd.f32 0.0, %v580
    %v582 = vpop.f32.mrf.mxu0
    %583 = vmatprep.mubr.f32.mxu0 0.0
    %584 = vmatmul.mubr.f32.gmra.mxu0 %v484
    %v585 = vpop.f32.mrf.mxu0
    %v586 = vadd.f32 0.0, %v585
    %v587 = vpop.f32.mrf.mxu0
    %588 = vmatprep.mubr.f32.mxu0 0.0
    %589 = vmatmul.mubr.f32.gmra.mxu0 %v487
    %v590 = vpop.f32.mrf.mxu0
    %v591 = vadd.f32 0.0, %v590
    %v592 = vpop.f32.mrf.mxu0
    %593 = vdwg.mxu0
    %v594 = vmul.f32 %v556, %v22
    %v595 = vmul.f32 %v561, %v23
    %v596 = vmul.f32 %v566, %v24
    %v597 = vmul.f32 %v571, %v25
    %v598 = vmul.f32 %v576, %v26
    %v599 = vmul.f32 %v581, %v27
    %v600 = vmul.f32 %v586, %v28
    %v601 = vmul.f32 %v591, %v29
    %v602 = vadd.f32 %v594, %v596
    %v603 = vadd.f32 %v595, %v597
    %v604 = vadd.f32 %v602, %v598
    %v605 = vadd.f32 %v603, %v599
    %v606 = vadd.f32 %v604, %v600
    %v607 = vadd.f32 %v605, %v601
    %v608 = vld [vmem:[%s1 + $0x18] sm:$0xff]
    %v609 = vld [vmem:[%s1 + $0x20] sm:$0xff]
    %v610 = vld [vmem:[%s1 + $0x28] sm:$0x1]
    %v611 = vlaneseq
    %v612 = vshrl.u32 %v611, 7
    %v613 = vsub.s32 0, %v612
    %v614 = vrot.slane %v610, %v613
    %v616 = vsel %vm126, %v606, 0
    %v619 = vsel %vm126, %v607, 0
    %621 = vmatprep.subr.mxu0 0.0
    %622 = vmatpush1.msra.mxu0 0.0
    %623 = vmatprep.subr.mxu0 0.0
    %624 = vmatpush1.msra.mxu0 0.0
    %625 = vmatprep.subr.mxu0 0.0
    %626 = vmatpush1.msra.mxu0 0.0
    %627 = vmatprep.subr.mxu0 0.0
    %628 = vmatpush1.msra.mxu0 0.0
    %629 = vmatprep.subr.mxu0 0.0
    %630 = vmatpush1.msra.mxu0 0.0
    %631 = vmatprep.subr.mxu0 0.0
    %632 = vmatpush1.msra.mxu0 0.0
    %633 = vmatprep.subr.mxu0 0.0
    %634 = vmatpush1.msra.mxu0 0.0
    %635 = vmatprep.subr.mxu0 0.0
    %636 = vmatpush1.msra.mxu0 0.0
    %637 = vmatprep.subr.mxu0 0.0
    %638 = vmatpush1.msra.mxu0 0.0
    %639 = vmatprep.subr.mxu0 0.0
    %640 = vmatpush1.msra.mxu0 0.0
    %641 = vmatprep.subr.mxu0 0.0
    %642 = vmatpush1.msra.mxu0 0.0
    %643 = vmatprep.subr.mxu0 0.0
    %644 = vmatpush1.msra.mxu0 0.0
    %645 = vmatprep.subr.mxu0 0.0
    %646 = vmatpush1.msra.mxu0 0.0
    %647 = vmatprep.subr.mxu0 0.0
    %648 = vmatpush1.msra.mxu0 0.0
    %649 = vmatprep.subr.mxu0 0.0
    %650 = vmatpush1.msra.mxu0 %v609
    %651 = vmatprep.subr.mxu0 0.0
    %652 = vmatpush1.msra.mxu0 %v608
    %653 = vmatprep.subr.mxu0 0.0
    %654 = vmatpush2.msra.mxu0 0.0
    %655 = vmatprep.subr.mxu0 0.0
    %656 = vmatpush2.msra.mxu0 0.0
    %657 = vmatprep.subr.mxu0 0.0
    %658 = vmatpush2.msra.mxu0 0.0
    %659 = vmatprep.subr.mxu0 0.0
    %660 = vmatpush2.msra.mxu0 0.0
    %661 = vmatprep.subr.mxu0 0.0
    %662 = vmatpush2.msra.mxu0 0.0
    %663 = vmatprep.subr.mxu0 0.0
    %664 = vmatpush2.msra.mxu0 0.0
    %665 = vmatprep.subr.mxu0 0.0
    %666 = vmatpush2.msra.mxu0 0.0
    %667 = vmatprep.subr.mxu0 0.0
    %668 = vmatpush2.msra.mxu0 0.0
    %669 = vmatprep.subr.mxu0 0.0
    %670 = vmatpush2.msra.mxu0 0.0
    %671 = vmatprep.subr.mxu0 0.0
    %672 = vmatpush2.msra.mxu0 0.0
    %673 = vmatprep.subr.mxu0 0.0
    %674 = vmatpush2.msra.mxu0 0.0
    %675 = vmatprep.subr.mxu0 0.0
    %676 = vmatpush2.msra.mxu0 0.0
    %677 = vmatprep.subr.mxu0 0.0
    %678 = vmatpush2.msra.mxu0 0.0
    %679 = vmatprep.subr.mxu0 0.0
    %680 = vmatpush2.msra.mxu0 0.0
    %681 = vmatprep.subr.mxu0 0.0
    %682 = vmatpush2.msra.mxu0 0.0
    %683 = vmatprep.subr.mxu0 0.0
    %684 = vmatpush2.msra.mxu0 0.0
    %685 = vmatprep.mubr.f32.mxu0 0.0
    %686 = vmatmul.mubr.f32.gmra.mxu0 %v616
    %v687 = vpop.f32.mrf.mxu0
    %v688 = vadd.f32 %v614, %v687
    %v689 = vpop.f32.mrf.mxu0
    %690 = vmatprep.mubr.f32.mxu0 0.0
    %691 = vmatmul.mubr.f32.gmra.mxu0 %v619
    %v692 = vpop.f32.mrf.mxu0
    %v693 = vadd.f32 %v614, %v692
    %v694 = vpop.f32.mrf.mxu0
    %695 = vdwg.mxu0
    %v696 = vadd.f32 %v111, %v688
    %v697 = vadd.f32 %v116, %v693
    %v698 = vld [vmem:[%s1 + $0x30] sm:$0x1]
    %v699 = vld [vmem:[%s1 + $0x38] sm:$0x1]
    %v700 = vsel %vm126, %v696, 0.0
    %701 = vadd.xlane.f32.xlu0 %v700
    %v702 = vpop.xlane.xlu0 %701
    %v703 = vsel %vm126, %v697, 0.0
    %704 = vadd.xlane.f32.xlu0 %v703
    %v705 = vpop.xlane.xlu0 %704
    %v706 = vrcp.pop 16.0
    %v707 = vmul.f32 %v702, %v706
    %v708 = vmul.f32 %v705, %v706
    %v709 = vsub.f32 %v696, %v707
    %v710 = vsub.f32 %v697, %v708
    %v711 = vmul.f32 %v709, %v709
    %v712 = vmul.f32 %v710, %v710
    %v713 = vsel %vm126, %v711, 0.0
    %714 = vadd.xlane.f32.xlu0 %v713
    %v715 = vpop.xlane.xlu0 %714
    %v716 = vsel %vm126, %v712, 0.0
    %717 = vadd.xlane.f32.xlu0 %v716
    %v718 = vpop.xlane.xlu0 %717
    %v719 = vmul.f32 %v715, %v706
    %v720 = vmul.f32 %v718, %v706
    %v721 = vadd.f32 %v719, 1e-05
    %v722 = vadd.f32 %v720, 1e-05
    %v723 = vrsqrt.pop %v721
    %v724 = vrsqrt.pop %v722
    %v725 = vmul.f32 %v709, %v723
    %v726 = vmul.f32 %v710, %v724
    %v727 = vlaneseq
    %v728 = vshrl.u32 %v727, 7
    %v729 = vsub.s32 0, %v728
    %v730 = vrot.slane %v698, %v729
    %v731 = vmul.f32 %v725, %v730
    %v732 = vmul.f32 %v726, %v730
    %v733 = vlaneseq
    %v734 = vshrl.u32 %v733, 7
    %v735 = vsub.s32 0, %v734
    %v736 = vrot.slane %v699, %v735
    %v737 = vadd.f32 %v731, %v736
    %v738 = vadd.f32 %v732, %v736
    %v739 = vld [vmem:[%s1 + $0x40] sm:$0xff]
    %v740 = vld [vmem:[%s1 + $0x48] sm:$0xff]
    %v741 = vld [vmem:[%s1 + $0x50] sm:$0x1]
    %v742 = vlaneseq
    %v743 = vshrl.u32 %v742, 7
    %v744 = vsub.s32 0, %v743
    %v745 = vrot.slane %v741, %v744
    %v747 = vsel %vm126, %v737, 0
    %v750 = vsel %vm126, %v738, 0
    %752 = vmatprep.subr.mxu0 0.0
    %753 = vmatpush1.msra.mxu0 0.0
    %754 = vmatprep.subr.mxu0 0.0
    %755 = vmatpush1.msra.mxu0 0.0
    %756 = vmatprep.subr.mxu0 0.0
    %757 = vmatpush1.msra.mxu0 0.0
    %758 = vmatprep.subr.mxu0 0.0
    %759 = vmatpush1.msra.mxu0 0.0
    %760 = vmatprep.subr.mxu0 0.0
    %761 = vmatpush1.msra.mxu0 0.0
    %762 = vmatprep.subr.mxu0 0.0
    %763 = vmatpush1.msra.mxu0 0.0
    %764 = vmatprep.subr.mxu0 0.0
    %765 = vmatpush1.msra.mxu0 0.0
    %766 = vmatprep.subr.mxu0 0.0
    %767 = vmatpush1.msra.mxu0 0.0
    %768 = vmatprep.subr.mxu0 0.0
    %769 = vmatpush1.msra.mxu0 0.0
    %770 = vmatprep.subr.mxu0 0.0
    %771 = vmatpush1.msra.mxu0 0.0
    %772 = vmatprep.subr.mxu0 0.0
    %773 = vmatpush1.msra.mxu0 0.0
    %774 = vmatprep.subr.mxu0 0.0
    %775 = vmatpush1.msra.mxu0 0.0
    %776 = vmatprep.subr.mxu0 0.0
    %777 = vmatpush1.msra.mxu0 0.0
    %778 = vmatprep.subr.mxu0 0.0
    %779 = vmatpush1.msra.mxu0 0.0
    %780 = vmatprep.subr.mxu0 0.0
    %781 = vmatpush1.msra.mxu0 %v740
    %782 = vmatprep.subr.mxu0 0.0
    %783 = vmatpush1.msra.mxu0 %v739
    %784 = vmatprep.subr.mxu0 0.0
    %785 = vmatpush2.msra.mxu0 0.0
    %786 = vmatprep.subr.mxu0 0.0
    %787 = vmatpush2.msra.mxu0 0.0
    %788 = vmatprep.subr.mxu0 0.0
    %789 = vmatpush2.msra.mxu0 0.0
    %790 = vmatprep.subr.mxu0 0.0
    %791 = vmatpush2.msra.mxu0 0.0
    %792 = vmatprep.subr.mxu0 0.0
    %793 = vmatpush2.msra.mxu0 0.0
    %794 = vmatprep.subr.mxu0 0.0
    %795 = vmatpush2.msra.mxu0 0.0
    %796 = vmatprep.subr.mxu0 0.0
    %797 = vmatpush2.msra.mxu0 0.0
    %798 = vmatprep.subr.mxu0 0.0
    %799 = vmatpush2.msra.mxu0 0.0
    %800 = vmatprep.subr.mxu0 0.0
    %801 = vmatpush2.msra.mxu0 0.0
    %802 = vmatprep.subr.mxu0 0.0
    %803 = vmatpush2.msra.mxu0 0.0
    %804 = vmatprep.subr.mxu0 0.0
    %805 = vmatpush2.msra.mxu0 0.0
    %806 = vmatprep.subr.mxu0 0.0
    %807 = vmatpush2.msra.mxu0 0.0
    %808 = vmatprep.subr.mxu0 0.0
    %809 = vmatpush2.msra.mxu0 0.0
    %810 = vmatprep.subr.mxu0 0.0
    %811 = vmatpush2.msra.mxu0 0.0
    %812 = vmatprep.subr.mxu0 0.0
    %813 = vmatpush2.msra.mxu0 0.0
    %814 = vmatprep.subr.mxu0 0.0
    %815 = vmatpush2.msra.mxu0 0.0
    %816 = vmatprep.mubr.f32.mxu0 0.0
    %817 = vmatmul.mubr.f32.gmra.mxu0 %v747
    %v818 = vpop.f32.mrf.mxu0
    %v819 = vadd.f32 %v745, %v818
    %v820 = vpop.f32.mrf.mxu0
    %821 = vmatprep.mubr.f32.mxu0 0.0
    %822 = vmatmul.mubr.f32.gmra.mxu0 %v750
    %v823 = vpop.f32.mrf.mxu0
    %v824 = vadd.f32 %v745, %v823
    %v825 = vpop.f32.mrf.mxu0
    %826 = vdwg.mxu0
    %v827 = vmax.f32 %v819, 0.0
    %v828 = vmax.f32 %v824, 0.0
    %v829 = vld [vmem:[%s1 + $0x58] sm:$0xff]
    %v830 = vld [vmem:[%s1 + $0x60] sm:$0xff]
    %v831 = vld [vmem:[%s1 + $0x68] sm:$0xff]
    %v832 = vld [vmem:[%s1 + $0x70] sm:$0xff]
    %v833 = vld [vmem:[%s1 + $0x78] sm:$0x1]
    %v834 = vlaneseq
    %v835 = vshrl.u32 %v834, 7
    %v836 = vsub.s32 0, %v835
    %v837 = vrot.slane %v833, %v836
    %vm838 = vcmask 261120
    %v840 = vsel %vm838, %v827, 0
    %v843 = vsel %vm838, %v828, 0
    %845 = vmatprep.subr.mxu0 0.0
    %846 = vmatpush1.msra.mxu0 0.0
    %847 = vmatprep.subr.mxu0 0.0
    %848 = vmatpush1.msra.mxu0 0.0
    %849 = vmatprep.subr.mxu0 0.0
    %850 = vmatpush1.msra.mxu0 0.0
    %851 = vmatprep.subr.mxu0 0.0
    %852 = vmatpush1.msra.mxu0 0.0
    %853 = vmatprep.subr.mxu0 0.0
    %854 = vmatpush1.msra.mxu0 0.0
    %855 = vmatprep.subr.mxu0 0.0
    %856 = vmatpush1.msra.mxu0 0.0
    %857 = vmatprep.subr.mxu0 0.0
    %858 = vmatpush1.msra.mxu0 0.0
    %859 = vmatprep.subr.mxu0 0.0
    %860 = vmatpush1.msra.mxu0 0.0
    %861 = vmatprep.subr.mxu0 0.0
    %862 = vmatpush1.msra.mxu0 0.0
    %863 = vmatprep.subr.mxu0 0.0
    %864 = vmatpush1.msra.mxu0 0.0
    %865 = vmatprep.subr.mxu0 0.0
    %866 = vmatpush1.msra.mxu0 0.0
    %867 = vmatprep.subr.mxu0 0.0
    %868 = vmatpush1.msra.mxu0 0.0
    %869 = vmatprep.subr.mxu0 0.0
    %870 = vmatpush1.msra.mxu0 %v832
    %871 = vmatprep.subr.mxu0 0.0
    %872 = vmatpush1.msra.mxu0 %v831
    %873 = vmatprep.subr.mxu0 0.0
    %874 = vmatpush1.msra.mxu0 %v830
    %875 = vmatprep.subr.mxu0 0.0
    %876 = vmatpush1.msra.mxu0 %v829
    %877 = vmatprep.subr.mxu0 0.0
    %878 = vmatpush2.msra.mxu0 0.0
    %879 = vmatprep.subr.mxu0 0.0
    %880 = vmatpush2.msra.mxu0 0.0
    %881 = vmatprep.subr.mxu0 0.0
    %882 = vmatpush2.msra.mxu0 0.0
    %883 = vmatprep.subr.mxu0 0.0
    %884 = vmatpush2.msra.mxu0 0.0
    %885 = vmatprep.subr.mxu0 0.0
    %886 = vmatpush2.msra.mxu0 0.0
    %887 = vmatprep.subr.mxu0 0.0
    %888 = vmatpush2.msra.mxu0 0.0
    %889 = vmatprep.subr.mxu0 0.0
    %890 = vmatpush2.msra.mxu0 0.0
    %891 = vmatprep.subr.mxu0 0.0
    %892 = vmatpush2.msra.mxu0 0.0
    %893 = vmatprep.subr.mxu0 0.0
    %894 = vmatpush2.msra.mxu0 0.0
    %895 = vmatprep.subr.mxu0 0.0
    %896 = vmatpush2.msra.mxu0 0.0
    %897 = vmatprep.subr.mxu0 0.0
    %898 = vmatpush2.msra.mxu0 0.0
    %899 = vmatprep.subr.mxu0 0.0
    %900 = vmatpush2.msra.mxu0 0.0
    %901 = vmatprep.subr.mxu0 0.0
    %902 = vmatpush2.msra.mxu0 0.0
    %903 = vmatprep.subr.mxu0 0.0
    %904 = vmatpush2.msra.mxu0 0.0
    %905 = vmatprep.subr.mxu0 0.0
    %906 = vmatpush2.msra.mxu0 0.0
    %907 = vmatprep.subr.mxu0 0.0
    %908 = vmatpush2.msra.mxu0 0.0
    %909 = vmatprep.mubr.f32.mxu0 0.0
    %910 = vmatmul.mubr.f32.gmra.mxu0 %v840
    %v911 = vpop.f32.mrf.mxu0
    %v912 = vadd.f32 %v837, %v911
    %v913 = vpop.f32.mrf.mxu0
    %914 = vmatprep.mubr.f32.mxu0 0.0
    %915 = vmatmul.mubr.f32.gmra.mxu0 %v843
    %v916 = vpop.f32.mrf.mxu0
    %v917 = vadd.f32 %v837, %v916
    %v918 = vpop.f32.mrf.mxu0
    %919 = vdwg.mxu0
    %v920 = vadd.f32 %v737, %v912
    %v921 = vadd.f32 %v738, %v917
    %v922 = vld [vmem:[%s1 + $0x80] sm:$0x1]
    %v923 = vld [vmem:[%s1 + $0x88] sm:$0x1]
    %v924 = vsel %vm126, %v920, 0.0
    %925 = vadd.xlane.f32.xlu0 %v924
    %v926 = vpop.xlane.xlu0 %925
    %v927 = vsel %vm126, %v921, 0.0
    %928 = vadd.xlane.f32.xlu0 %v927
    %v929 = vpop.xlane.xlu0 %928
    %v930 = vmul.f32 %v926, %v706
    %v931 = vmul.f32 %v929, %v706
    %v932 = vsub.f32 %v920, %v930
    %v933 = vsub.f32 %v921, %v931
    %v934 = vmul.f32 %v932, %v932
    %v935 = vmul.f32 %v933, %v933
    %v936 = vsel %vm126, %v934, 0.0
    %937 = vadd.xlane.f32.xlu0 %v936
    %v938 = vpop.xlane.xlu0 %937
    %v939 = vsel %vm126, %v935, 0.0
    %940 = vadd.xlane.f32.xlu0 %v939
    %v941 = vpop.xlane.xlu0 %940
    %v942 = vmul.f32 %v938, %v706
    %v943 = vmul.f32 %v941, %v706
    %v944 = vadd.f32 %v942, 1e-05
    %v945 = vadd.f32 %v943, 1e-05
    %v946 = vrsqrt.pop %v944
    %v947 = vrsqrt.pop %v945
    %v948 = vmul.f32 %v932, %v946
    %v949 = vmul.f32 %v933, %v947
    %v950 = vlaneseq
    %v951 = vshrl.u32 %v950, 7
    %v952 = vsub.s32 0, %v951
    %v953 = vrot.slane %v922, %v952
    %v954 = vmul.f32 %v948, %v953
    %v955 = vmul.f32 %v949, %v953
    %v956 = vlaneseq
    %v957 = vshrl.u32 %v956, 7
    %v958 = vsub.s32 0, %v957
    %v959 = vrot.slane %v923, %v958
    %v960 = vadd.f32 %v954, %v959
    %v961 = vadd.f32 %v955, %v959
    %v962 = vld [vmem:[%s1 + $0x90] sm:$0xff]
    %v963 = vld [vmem:[%s1 + $0x98] sm:$0xff]
    %v964 = vld [vmem:[%s1 + $0xa0] sm:$0x1]
    %v965 = vlaneseq
    %v966 = vshrl.u32 %v965, 7
    %v967 = vsub.s32 0, %v966
    %v968 = vrot.slane %v964, %v967
    %v970 = vsel %vm126, %v960, 0
    %v973 = vsel %vm126, %v961, 0
    %975 = vmatprep.subr.mxu0 0.0
    %976 = vmatpush1.msra.mxu0 0.0
    %977 = vmatprep.subr.mxu0 0.0
    %978 = vmatpush1.msra.mxu0 0.0
    %979 = vmatprep.subr.mxu0 0.0
    %980 = vmatpush1.msra.mxu0 0.0
    %981 = vmatprep.subr.mxu0 0.0
    %982 = vmatpush1.msra.mxu0 0.0
    %983 = vmatprep.subr.mxu0 0.0
    %984 = vmatpush1.msra.mxu0 0.0
    %985 = vmatprep.subr.mxu0 0.0
    %986 = vmatpush1.msra.mxu0 0.0
    %987 = vmatprep.subr.mxu0 0.0
    %988 = vmatpush1.msra.mxu0 0.0
    %989 = vmatprep.subr.mxu0 0.0
    %990 = vmatpush1.msra.mxu0 0.0
    %991 = vmatprep.subr.mxu0 0.0
    %992 = vmatpush1.msra.mxu0 0.0
    %993 = vmatprep.subr.mxu0 0.0
    %994 = vmatpush1.msra.mxu0 0.0
    %995 = vmatprep.subr.mxu0 0.0
    %996 = vmatpush1.msra.mxu0 0.0
    %997 = vmatprep.subr.mxu0 0.0
    %998 = vmatpush1.msra.mxu0 0.0
    %999 = vmatprep.subr.mxu0 0.0
    %1000 = vmatpush1.msra.mxu0 0.0
    %1001 = vmatprep.subr.mxu0 0.0
    %1002 = vmatpush1.msra.mxu0 0.0
    %1003 = vmatprep.subr.mxu0 0.0
    %1004 = vmatpush1.msra.mxu0 %v963
    %1005 = vmatprep.subr.mxu0 0.0
    %1006 = vmatpush1.msra.mxu0 %v962
    %1007 = vmatprep.subr.mxu0 0.0
    %1008 = vmatpush2.msra.mxu0 0.0
    %1009 = vmatprep.subr.mxu0 0.0
    %1010 = vmatpush2.msra.mxu0 0.0
    %1011 = vmatprep.subr.mxu0 0.0
    %1012 = vmatpush2.msra.mxu0 0.0
    %1013 = vmatprep.subr.mxu0 0.0
    %1014 = vmatpush2.msra.mxu0 0.0
    %1015 = vmatprep.subr.mxu0 0.0
    %1016 = vmatpush2.msra.mxu0 0.0
    %1017 = vmatprep.subr.mxu0 0.0
    %1018 = vmatpush2.msra.mxu0 0.0
    %1019 = vmatprep.subr.mxu0 0.0
    %1020 = vmatpush2.msra.mxu0 0.0
    %1021 = vmatprep.subr.mxu0 0.0
    %1022 = vmatpush2.msra.mxu0 0.0
    %1023 = vmatprep.subr.mxu0 0.0
    %1024 = vmatpush2.msra.mxu0 0.0
    %1025 = vmatprep.subr.mxu0 0.0
    %1026 = vmatpush2.msra.mxu0 0.0
    %1027 = vmatprep.subr.mxu0 0.0
    %1028 = vmatpush2.msra.mxu0 0.0
    %1029 = vmatprep.subr.mxu0 0.0
    %1030 = vmatpush2.msra.mxu0 0.0
    %1031 = vmatprep.subr.mxu0 0.0
    %1032 = vmatpush2.msra.mxu0 0.0
    %1033 = vmatprep.subr.mxu0 0.0
    %1034 = vmatpush2.msra.mxu0 0.0
    %1035 = vmatprep.subr.mxu0 0.0
    %1036 = vmatpush2.msra.mxu0 0.0
    %1037 = vmatprep.subr.mxu0 0.0
    %1038 = vmatpush2.msra.mxu0 0.0
    %1039 = vmatprep.mubr.f32.mxu0 0.0
    %1040 = vmatmul.mubr.f32.gmra.mxu0 %v970
    %v1041 = vpop.f32.mrf.mxu0
    %v1042 = vadd.f32 %v968, %v1041
    %v1043 = vpop.f32.mrf.mxu0
    %1044 = vmatprep.mubr.f32.mxu0 0.0
    %1045 = vmatmul.mubr.f32.gmra.mxu0 %v973
    %v1046 = vpop.f32.mrf.mxu0
    %v1047 = vadd.f32 %v968, %v1046
    %v1048 = vpop.f32.mrf.mxu0
    %1049 = vdwg.mxu0
    %v1050 = vmul.f32 %v1042, %v22
    %v1051 = vmul.f32 %v1047, %v23
    %v1052 = vmul.f32 %v1042, %v24
    %v1053 = vmul.f32 %v1047, %v25
    %v1054 = vmul.f32 %v1042, %v26
    %v1055 = vmul.f32 %v1047, %v27
    %v1056 = vmul.f32 %v1042, %v28
    %v1057 = vmul.f32 %v1047, %v29
    %1060 = vrot.lane.b32.xlu0 %v1042, 112
    %v1061 = vpop.permute.xlu0 %1060
    %1062 = vrot.lane.b32.xlu0 %v1047, 112
    %v1063 = vpop.permute.xlu0 %1062
    %v1065 = vsel %vm126, %v1050, 0
    %v1068 = vsel %vm126, %v1051, 0
    %v1071 = vsel %vm126, %v1052, 0
    %v1074 = vsel %vm126, %v1053, 0
    %v1077 = vsel %vm126, %v1054, 0
    %v1080 = vsel %vm126, %v1055, 0
    %v1083 = vsel %vm126, %v1056, 0
    %v1086 = vsel %vm126, %v1057, 0
    %v1088 = vsel %vm126, %v1061, 0
    %v1090 = vsel %vm126, %v1063, 0
    %1092 = vmatprep.subr.mxu0 0.0
    %1093 = vmatpush1.xpose.msra.mxu0 0.0
    %1094 = vmatprep.subr.mxu0 0.0
    %1095 = vmatpush1.xpose.msra.mxu0 0.0
    %1096 = vmatprep.subr.mxu0 0.0
    %1097 = vmatpush1.xpose.msra.mxu0 0.0
    %1098 = vmatprep.subr.mxu0 0.0
    %1099 = vmatpush1.xpose.msra.mxu0 0.0
    %1100 = vmatprep.subr.mxu0 0.0
    %1101 = vmatpush1.xpose.msra.mxu0 0.0
    %1102 = vmatprep.subr.mxu0 0.0
    %1103 = vmatpush1.xpose.msra.mxu0 0.0
    %1104 = vmatprep.subr.mxu0 0.0
    %1105 = vmatpush1.xpose.msra.mxu0 0.0
    %1106 = vmatprep.subr.mxu0 0.0
    %1107 = vmatpush1.xpose.msra.mxu0 0.0
    %1108 = vmatprep.subr.mxu0 0.0
    %1109 = vmatpush1.xpose.msra.mxu0 0.0
    %1110 = vmatprep.subr.mxu0 0.0
    %1111 = vmatpush1.xpose.msra.mxu0 0.0
    %1112 = vmatprep.subr.mxu0 0.0
    %1113 = vmatpush1.xpose.msra.mxu0 0.0
    %1114 = vmatprep.subr.mxu0 0.0
    %1115 = vmatpush1.xpose.msra.mxu0 0.0
    %1116 = vmatprep.subr.mxu0 0.0
    %1117 = vmatpush1.xpose.msra.mxu0 0.0
    %1118 = vmatprep.subr.mxu0 0.0
    %1119 = vmatpush1.xpose.msra.mxu0 0.0
    %1120 = vmatprep.subr.mxu0 0.0
    %1121 = vmatpush1.xpose.msra.mxu0 %v1090
    %1122 = vmatprep.subr.mxu0 0.0
    %1123 = vmatpush1.xpose.msra.mxu0 %v1088
    %1124 = vmatprep.subr.mxu0 0.0
    %1125 = vmatpush2.xpose.msra.mxu0 0.0
    %1126 = vmatprep.subr.mxu0 0.0
    %1127 = vmatpush2.xpose.msra.mxu0 0.0
    %1128 = vmatprep.subr.mxu0 0.0
    %1129 = vmatpush2.xpose.msra.mxu0 0.0
    %1130 = vmatprep.subr.mxu0 0.0
    %1131 = vmatpush2.xpose.msra.mxu0 0.0
    %1132 = vmatprep.subr.mxu0 0.0
    %1133 = vmatpush2.xpose.msra.mxu0 0.0
    %1134 = vmatprep.subr.mxu0 0.0
    %1135 = vmatpush2.xpose.msra.mxu0 0.0
    %1136 = vmatprep.subr.mxu0 0.0
    %1137 = vmatpush2.xpose.msra.mxu0 0.0
    %1138 = vmatprep.subr.mxu0 0.0
    %1139 = vmatpush2.xpose.msra.mxu0 0.0
    %1140 = vmatprep.subr.mxu0 0.0
    %1141 = vmatpush2.xpose.msra.mxu0 0.0
    %1142 = vmatprep.subr.mxu0 0.0
    %1143 = vmatpush2.xpose.msra.mxu0 0.0
    %1144 = vmatprep.subr.mxu0 0.0
    %1145 = vmatpush2.xpose.msra.mxu0 0.0
    %1146 = vmatprep.subr.mxu0 0.0
    %1147 = vmatpush2.xpose.msra.mxu0 0.0
    %1148 = vmatprep.subr.mxu0 0.0
    %1149 = vmatpush2.xpose.msra.mxu0 0.0
    %1150 = vmatprep.subr.mxu0 0.0
    %1151 = vmatpush2.xpose.msra.mxu0 0.0
    %1152 = vmatprep.subr.mxu0 0.0
    %1153 = vmatpush2.xpose.msra.mxu0 0.0
    %1154 = vmatprep.subr.mxu0 0.0
    %1155 = vmatpush2.xpose.msra.mxu0 0.0
    %1156 = vmatprep.mubr.f32.mxu0 0.0
    %1157 = vmatmul.mubr.f32.gmra.mxu0 %v1065
    %v1158 = vpop.f32.mrf.mxu0
    %v1159 = vadd.f32 0.0, %v1158
    %v1160 = vpop.f32.mrf.mxu0
    %1161 = vmatprep.mubr.f32.mxu0 0.0
    %1162 = vmatmul.mubr.f32.gmra.mxu0 %v1068
    %v1163 = vpop.f32.mrf.mxu0
    %v1164 = vadd.f32 0.0, %v1163
    %v1165 = vpop.f32.mrf.mxu0
    %1166 = vmatprep.mubr.f32.mxu0 0.0
    %1167 = vmatmul.mubr.f32.gmra.mxu0 %v1071
    %v1168 = vpop.f32.mrf.mxu0
    %v1169 = vadd.f32 0.0, %v1168
    %v1170 = vpop.f32.mrf.mxu0
    %1171 = vmatprep.mubr.f32.mxu0 0.0
    %1172 = vmatmul.mubr.f32.gmra.mxu0 %v1074
    %v1173 = vpop.f32.mrf.mxu0
    %v1174 = vadd.f32 0.0, %v1173
    %v1175 = vpop.f32.mrf.mxu0
    %1176 = vmatprep.mubr.f32.mxu0 0.0
    %1177 = vmatmul.mubr.f32.gmra.mxu0 %v1077
    %v1178 = vpop.f32.mrf.mxu0
    %v1179 = vadd.f32 0.0, %v1178
    %v1180 = vpop.f32.mrf.mxu0
    %1181 = vmatprep.mubr.f32.mxu0 0.0
    %1182 = vmatmul.mubr.f32.gmra.mxu0 %v1080
    %v1183 = vpop.f32.mrf.mxu0
    %v1184 = vadd.f32 0.0, %v1183
    %v1185 = vpop.f32.mrf.mxu0
    %1186 = vmatprep.mubr.f32.mxu0 0.0
    %1187 = vmatmul.mubr.f32.gmra.mxu0 %v1083
    %v1188 = vpop.f32.mrf.mxu0
    %v1189 = vadd.f32 0.0, %v1188
    %v1190 = vpop.f32.mrf.mxu0
    %1191 = vmatprep.mubr.f32.mxu0 0.0
    %1192 = vmatmul.mubr.f32.gmra.mxu0 %v1086
    %v1193 = vpop.f32.mrf.mxu0
    %v1194 = vadd.f32 0.0, %v1193
    %v1195 = vpop.f32.mrf.mxu0
    %1196 = vdwg.mxu0
    %v1197 = vmul.f32 %v1159, 0.5
    %v1198 = vmul.f32 %v1164, 0.5
    %v1199 = vmul.f32 %v1169, 0.5
    %v1200 = vmul.f32 %v1174, 0.5
    %v1201 = vmul.f32 %v1179, 0.5
    %v1202 = vmul.f32 %v1184, 0.5
    %v1203 = vmul.f32 %v1189, 0.5
    %v1204 = vmul.f32 %v1194, 0.5
    %v1205 = vadd.f32 %v1197, %v14
    %v1206 = vadd.f32 %v1198, %v15
    %v1207 = vadd.f32 %v1199, %v16
    %v1208 = vadd.f32 %v1200, %v17
    %v1209 = vadd.f32 %v1201, %v18
    %v1210 = vadd.f32 %v1202, %v19
    %v1211 = vadd.f32 %v1203, %v20
    %v1212 = vadd.f32 %v1204, %v21
    %v1213 = vsel %vm126, %v1205, -inf
    %1214 = vmax.xlane.f32.xlu0 %v1213
    %v1215 = vpop.xlane.xlu0 %1214
    %v1216 = vsel %vm126, %v1206, -inf
    %1217 = vmax.xlane.f32.xlu0 %v1216
    %v1218 = vpop.xlane.xlu0 %1217
    %v1219 = vsel %vm126, %v1207, -inf
    %1220 = vmax.xlane.f32.xlu0 %v1219
    %v1221 = vpop.xlane.xlu0 %1220
    %v1222 = vsel %vm126, %v1208, -inf
    %1223 = vmax.xlane.f32.xlu0 %v1222
    %v1224 = vpop.xlane.xlu0 %1223
    %v1225 = vsel %vm126, %v1209, -inf
    %1226 = vmax.xlane.f32.xlu0 %v1225
    %v1227 = vpop.xlane.xlu0 %1226
    %v1228 = vsel %vm126, %v1210, -inf
    %1229 = vmax.xlane.f32.xlu0 %v1228
    %v1230 = vpop.xlane.xlu0 %1229
    %v1231 = vsel %vm126, %v1211, -inf
    %1232 = vmax.xlane.f32.xlu0 %v1231
    %v1233 = vpop.xlane.xlu0 %1232
    %v1234 = vsel %vm126, %v1212, -inf
    %1235 = vmax.xlane.f32.xlu0 %v1234
    %v1236 = vpop.xlane.xlu0 %1235
    %v1237 = vsub.f32 %v1205, %v1215
    %v1238 = vsub.f32 %v1206, %v1218
    %v1239 = vsub.f32 %v1207, %v1221
    %v1240 = vsub.f32 %v1208, %v1224
    %v1241 = vsub.f32 %v1209, %v1227
    %v1242 = vsub.f32 %v1210, %v1230
    %v1243 = vsub.f32 %v1211, %v1233
    %v1244 = vsub.f32 %v1212, %v1236
    %v1245 = vmul.f32 %v1237, 1.442695
    %v1246 = vpow.pop %v1245
    %v1247 = vmul.f32 %v1238, 1.442695
    %v1248 = vpow.pop %v1247
    %v1249 = vmul.f32 %v1239, 1.442695
    %v1250 = vpow.pop %v1249
    %v1251 = vmul.f32 %v1240, 1.442695
    %v1252 = vpow.pop %v1251
    %v1253 = vmul.f32 %v1241, 1.442695
    %v1254 = vpow.pop %v1253
    %v1255 = vmul.f32 %v1242, 1.442695
    %v1256 = vpow.pop %v1255
    %v1257 = vmul.f32 %v1243, 1.442695
    %v1258 = vpow.pop %v1257
    %v1259 = vmul.f32 %v1244, 1.442695
    %v1260 = vpow.pop %v1259
    %v1261 = vsel %vm126, %v1246, 0.0
    %1262 = vadd.xlane.f32.xlu0 %v1261
    %v1263 = vpop.xlane.xlu0 %1262
    %v1264 = vsel %vm126, %v1248, 0.0
    %1265 = vadd.xlane.f32.xlu0 %v1264
    %v1266 = vpop.xlane.xlu0 %1265
    %v1267 = vsel %vm126, %v1250, 0.0
    %1268 = vadd.xlane.f32.xlu0 %v1267
    %v1269 = vpop.xlane.xlu0 %1268
    %v1270 = vsel %vm126, %v1252, 0.0
    %1271 = vadd.xlane.f32.xlu0 %v1270
    %v1272 = vpop.xlane.xlu0 %1271
    %v1273 = vsel %vm126, %v1254, 0.0
    %1274 = vadd.xlane.f32.xlu0 %v1273
    %v1275 = vpop.xlane.xlu0 %1274
    %v1276 = vsel %vm126, %v1256, 0.0
    %1277 = vadd.xlane.f32.xlu0 %v1276
    %v1278 = vpop.xlane.xlu0 %1277
    %v1279 = vsel %vm126, %v1258, 0.0
    %1280 = vadd.xlane.f32.xlu0 %v1279
    %v1281 = vpop.xlane.xlu0 %1280
    %v1282 = vsel %vm126, %v1260, 0.0
    %1283 = vadd.xlane.f32.xlu0 %v1282
    %v1284 = vpop.xlane.xlu0 %1283
    %v1285 = vrcp.pop %v1263
    %v1286 = vrcp.pop %v1266
    %v1287 = vrcp.pop %v1269
    %v1288 = vrcp.pop %v1272
    %v1289 = vrcp.pop %v1275
    %v1290 = vrcp.pop %v1278
    %v1291 = vrcp.pop %v1281
    %v1292 = vrcp.pop %v1284
    %v1293 = vmul.f32 %v1246, %v1285
    %v1294 = vmul.f32 %v1248, %v1286
    %v1295 = vmul.f32 %v1250, %v1287
    %v1296 = vmul.f32 %v1252, %v1288
    %v1297 = vmul.f32 %v1254, %v1289
    %v1298 = vmul.f32 %v1256, %v1290
    %v1299 = vmul.f32 %v1258, %v1291
    %v1300 = vmul.f32 %v1260, %v1292
    %1301 = vrot.lane.b32.xlu0 %v1042, 96
    %v1302 = vpop.permute.xlu0 %1301
    %1303 = vrot.lane.b32.xlu0 %v1047, 96
    %v1304 = vpop.permute.xlu0 %1303
    %v1308 = vsel %vm126, %v1293, 0
    %v1311 = vsel %vm126, %v1294, 0
    %v1314 = vsel %vm126, %v1295, 0
    %v1317 = vsel %vm126, %v1296, 0
    %v1320 = vsel %vm126, %v1297, 0
    %v1323 = vsel %vm126, %v1298, 0
    %v1326 = vsel %vm126, %v1299, 0
    %v1329 = vsel %vm126, %v1300, 0
    %1331 = vmatprep.subr.mxu0 0.0
    %1332 = vmatpush1.msra.mxu0 0.0
    %1333 = vmatprep.subr.mxu0 0.0
    %1334 = vmatpush1.msra.mxu0 0.0
    %1335 = vmatprep.subr.mxu0 0.0
    %1336 = vmatpush1.msra.mxu0 0.0
    %1337 = vmatprep.subr.mxu0 0.0
    %1338 = vmatpush1.msra.mxu0 0.0
    %1339 = vmatprep.subr.mxu0 0.0
    %1340 = vmatpush1.msra.mxu0 0.0
    %1341 = vmatprep.subr.mxu0 0.0
    %1342 = vmatpush1.msra.mxu0 0.0
    %1343 = vmatprep.subr.mxu0 0.0
    %1344 = vmatpush1.msra.mxu0 0.0
    %1345 = vmatprep.subr.mxu0 0.0
    %1346 = vmatpush1.msra.mxu0 0.0
    %1347 = vmatprep.subr.mxu0 0.0
    %1348 = vmatpush1.msra.mxu0 0.0
    %1349 = vmatprep.subr.mxu0 0.0
    %1350 = vmatpush1.msra.mxu0 0.0
    %1351 = vmatprep.subr.mxu0 0.0
    %1352 = vmatpush1.msra.mxu0 0.0
    %1353 = vmatprep.subr.mxu0 0.0
    %1354 = vmatpush1.msra.mxu0 0.0
    %1355 = vmatprep.subr.mxu0 0.0
    %1356 = vmatpush1.msra.mxu0 0.0
    %1357 = vmatprep.subr.mxu0 0.0
    %1358 = vmatpush1.msra.mxu0 0.0
    %1359 = vmatprep.subr.mxu0 0.0
    %1360 = vmatpush1.msra.mxu0 %v1304
    %1361 = vmatprep.subr.mxu0 0.0
    %1362 = vmatpush1.msra.mxu0 %v1302
    %1363 = vmatprep.subr.mxu0 0.0
    %1364 = vmatpush2.msra.mxu0 0.0
    %1365 = vmatprep.subr.mxu0 0.0
    %1366 = vmatpush2.msra.mxu0 0.0
    %1367 = vmatprep.subr.mxu0 0.0
    %1368 = vmatpush2.msra.mxu0 0.0
    %1369 = vmatprep.subr.mxu0 0.0
    %1370 = vmatpush2.msra.mxu0 0.0
    %1371 = vmatprep.subr.mxu0 0.0
    %1372 = vmatpush2.msra.mxu0 0.0
    %1373 = vmatprep.subr.mxu0 0.0
    %1374 = vmatpush2.msra.mxu0 0.0
    %1375 = vmatprep.subr.mxu0 0.0
    %1376 = vmatpush2.msra.mxu0 0.0
    %1377 = vmatprep.subr.mxu0 0.0
    %1378 = vmatpush2.msra.mxu0 0.0
    %1379 = vmatprep.subr.mxu0 0.0
    %1380 = vmatpush2.msra.mxu0 0.0
    %1381 = vmatprep.subr.mxu0 0.0
    %1382 = vmatpush2.msra.mxu0 0.0
    %1383 = vmatprep.subr.mxu0 0.0
    %1384 = vmatpush2.msra.mxu0 0.0
    %1385 = vmatprep.subr.mxu0 0.0
    %1386 = vmatpush2.msra.mxu0 0.0
    %1387 = vmatprep.subr.mxu0 0.0
    %1388 = vmatpush2.msra.mxu0 0.0
    %1389 = vmatprep.subr.mxu0 0.0
    %1390 = vmatpush2.msra.mxu0 0.0
    %1391 = vmatprep.subr.mxu0 0.0
    %1392 = vmatpush2.msra.mxu0 0.0
    %1393 = vmatprep.subr.mxu0 0.0
    %1394 = vmatpush2.msra.mxu0 0.0
    %1395 = vmatprep.mubr.f32.mxu0 0.0
    %1396 = vmatmul.mubr.f32.gmra.mxu0 %v1308
    %v1397 = vpop.f32.mrf.mxu0
    %v1398 = vadd.f32 0.0, %v1397
    %v1399 = vpop.f32.mrf.mxu0
    %1400 = vmatprep.mubr.f32.mxu0 0.0
    %1401 = vmatmul.mubr.f32.gmra.mxu0 %v1311
    %v1402 = vpop.f32.mrf.mxu0
    %v1403 = vadd.f32 0.0, %v1402
    %v1404 = vpop.f32.mrf.mxu0
    %1405 = vmatprep.mubr.f32.mxu0 0.0
    %1406 = vmatmul.mubr.f32.gmra.mxu0 %v1314
    %v1407 = vpop.f32.mrf.mxu0
    %v1408 = vadd.f32 0.0, %v1407
    %v1409 = vpop.f32.mrf.mxu0
    %1410 = vmatprep.mubr.f32.mxu0 0.0
    %1411 = vmatmul.mubr.f32.gmra.mxu0 %v1317
    %v1412 = vpop.f32.mrf.mxu0
    %v1413 = vadd.f32 0.0, %v1412
    %v1414 = vpop.f32.mrf.mxu0
    %1415 = vmatprep.mubr.f32.mxu0 0.0
    %1416 = vmatmul.mubr.f32.gmra.mxu0 %v1320
    %v1417 = vpop.f32.mrf.mxu0
    %v1418 = vadd.f32 0.0, %v1417
    %v1419 = vpop.f32.mrf.mxu0
    %1420 = vmatprep.mubr.f32.mxu0 0.0
    %1421 = vmatmul.mubr.f32.gmra.mxu0 %v1323
    %v1422 = vpop.f32.mrf.mxu0
    %v1423 = vadd.f32 0.0, %v1422
    %v1424 = vpop.f32.mrf.mxu0
    %1425 = vmatprep.mubr.f32.mxu0 0.0
    %1426 = vmatmul.mubr.f32.gmra.mxu0 %v1326
    %v1427 = vpop.f32.mrf.mxu0
    %v1428 = vadd.f32 0.0, %v1427
    %v1429 = vpop.f32.mrf.mxu0
    %1430 = vmatprep.mubr.f32.mxu0 0.0
    %1431 = vmatmul.mubr.f32.gmra.mxu0 %v1329
    %v1432 = vpop.f32.mrf.mxu0
    %v1433 = vadd.f32 0.0, %v1432
    %v1434 = vpop.f32.mrf.mxu0
    %1435 = vdwg.mxu0
    %v1436 = vmul.f32 %v1398, %v22
    %v1437 = vmul.f32 %v1403, %v23
    %v1438 = vmul.f32 %v1408, %v24
    %v1439 = vmul.f32 %v1413, %v25
    %v1440 = vmul.f32 %v1418, %v26
    %v1441 = vmul.f32 %v1423, %v27
    %v1442 = vmul.f32 %v1428, %v28
    %v1443 = vmul.f32 %v1433, %v29
    %v1444 = vadd.f32 %v1436, %v1438
    %v1445 = vadd.f32 %v1437, %v1439
    %v1446 = vadd.f32 %v1444, %v1440
    %v1447 = vadd.f32 %v1445, %v1441
    %v1448 = vadd.f32 %v1446, %v1442
    %v1449 = vadd.f32 %v1447, %v1443
    %v1450 = vld [vmem:[%s1 + $0xa8] sm:$0xff]
    %v1451 = vld [vmem:[%s1 + $0xb0] sm:$0xff]
    %v1452 = vld [vmem:[%s1 + $0xb8] sm:$0x1]
    %v1453 = vlaneseq
    %v1454 = vshrl.u32 %v1453, 7
    %v1455 = vsub.s32 0, %v1454
    %v1456 = vrot.slane %v1452, %v1455
    %v1458 = vsel %vm126, %v1448, 0
    %v1461 = vsel %vm126, %v1449, 0
    %1463 = vmatprep.subr.mxu0 0.0
    %1464 = vmatpush1.msra.mxu0 0.0
    %1465 = vmatprep.subr.mxu0 0.0
    %1466 = vmatpush1.msra.mxu0 0.0
    %1467 = vmatprep.subr.mxu0 0.0
    %1468 = vmatpush1.msra.mxu0 0.0
    %1469 = vmatprep.subr.mxu0 0.0
    %1470 = vmatpush1.msra.mxu0 0.0
    %1471 = vmatprep.subr.mxu0 0.0
    %1472 = vmatpush1.msra.mxu0 0.0
    %1473 = vmatprep.subr.mxu0 0.0
    %1474 = vmatpush1.msra.mxu0 0.0
    %1475 = vmatprep.subr.mxu0 0.0
    %1476 = vmatpush1.msra.mxu0 0.0
    %1477 = vmatprep.subr.mxu0 0.0
    %1478 = vmatpush1.msra.mxu0 0.0
    %1479 = vmatprep.subr.mxu0 0.0
    %1480 = vmatpush1.msra.mxu0 0.0
    %1481 = vmatprep.subr.mxu0 0.0
    %1482 = vmatpush1.msra.mxu0 0.0
    %1483 = vmatprep.subr.mxu0 0.0
    %1484 = vmatpush1.msra.mxu0 0.0
    %1485 = vmatprep.subr.mxu0 0.0
    %1486 = vmatpush1.msra.mxu0 0.0
    %1487 = vmatprep.subr.mxu0 0.0
    %1488 = vmatpush1.msra.mxu0 0.0
    %1489 = vmatprep.subr.mxu0 0.0
    %1490 = vmatpush1.msra.mxu0 0.0
    %1491 = vmatprep.subr.mxu0 0.0
    %1492 = vmatpush1.msra.mxu0 %v1451
    %1493 = vmatprep.subr.mxu0 0.0
    %1494 = vmatpush1.msra.mxu0 %v1450
    %1495 = vmatprep.subr.mxu0 0.0
    %1496 = vmatpush2.msra.mxu0 0.0
    %1497 = vmatprep.subr.mxu0 0.0
    %1498 = vmatpush2.msra.mxu0 0.0
    %1499 = vmatprep.subr.mxu0 0.0
    %1500 = vmatpush2.msra.mxu0 0.0
    %1501 = vmatprep.subr.mxu0 0.0
    %1502 = vmatpush2.msra.mxu0 0.0
    %1503 = vmatprep.subr.mxu0 0.0
    %1504 = vmatpush2.msra.mxu0 0.0
    %1505 = vmatprep.subr.mxu0 0.0
    %1506 = vmatpush2.msra.mxu0 0.0
    %1507 = vmatprep.subr.mxu0 0.0
    %1508 = vmatpush2.msra.mxu0 0.0
    %1509 = vmatprep.subr.mxu0 0.0
    %1510 = vmatpush2.msra.mxu0 0.0
    %1511 = vmatprep.subr.mxu0 0.0
    %1512 = vmatpush2.msra.mxu0 0.0
    %1513 = vmatprep.subr.mxu0 0.0
    %1514 = vmatpush2.msra.mxu0 0.0
    %1515 = vmatprep.subr.mxu0 0.0
    %1516 = vmatpush2.msra.mxu0 0.0
    %1517 = vmatprep.subr.mxu0 0.0
    %1518 = vmatpush2.msra.mxu0 0.0
    %1519 = vmatprep.subr.mxu0 0.0
    %1520 = vmatpush2.msra.mxu0 0.0
    %1521 = vmatprep.subr.mxu0 0.0
    %1522 = vmatpush2.msra.mxu0 0.0
    %1523 = vmatprep.subr.mxu0 0.0
    %1524 = vmatpush2.msra.mxu0 0.0
    %1525 = vmatprep.subr.mxu0 0.0
    %1526 = vmatpush2.msra.mxu0 0.0
    %1527 = vmatprep.mubr.f32.mxu0 0.0
    %1528 = vmatmul.mubr.f32.gmra.mxu0 %v1458
    %v1529 = vpop.f32.mrf.mxu0
    %v1530 = vadd.f32 %v1456, %v1529
    %v1531 = vpop.f32.mrf.mxu0
    %1532 = vmatprep.mubr.f32.mxu0 0.0
    %1533 = vmatmul.mubr.f32.gmra.mxu0 %v1461
    %v1534 = vpop.f32.mrf.mxu0
    %v1535 = vadd.f32 %v1456, %v1534
    %v1536 = vpop.f32.mrf.mxu0
    %1537 = vdwg.mxu0
    %v1538 = vadd.f32 %v960, %v1530
    %v1539 = vadd.f32 %v961, %v1535
    %v1540 = vld [vmem:[%s1 + $0xc0] sm:$0x1]
    %v1541 = vld [vmem:[%s1 + $0xc8] sm:$0x1]
    %v1542 = vsel %vm126, %v1538, 0.0
    %1543 = vadd.xlane.f32.xlu0 %v1542
    %v1544 = vpop.xlane.xlu0 %1543
    %v1545 = vsel %vm126, %v1539, 0.0
    %1546 = vadd.xlane.f32.xlu0 %v1545
    %v1547 = vpop.xlane.xlu0 %1546
    %v1548 = vmul.f32 %v1544, %v706
    %v1549 = vmul.f32 %v1547, %v706
    %v1550 = vsub.f32 %v1538, %v1548
    %v1551 = vsub.f32 %v1539, %v1549
    %v1552 = vmul.f32 %v1550, %v1550
    %v1553 = vmul.f32 %v1551, %v1551
    %v1554 = vsel %vm126, %v1552, 0.0
    %1555 = vadd.xlane.f32.xlu0 %v1554
    %v1556 = vpop.xlane.xlu0 %1555
    %v1557 = vsel %vm126, %v1553, 0.0
    %1558 = vadd.xlane.f32.xlu0 %v1557
    %v1559 = vpop.xlane.xlu0 %1558
    %v1560 = vmul.f32 %v1556, %v706
    %v1561 = vmul.f32 %v1559, %v706
    %v1562 = vadd.f32 %v1560, 1e-05
    %v1563 = vadd.f32 %v1561, 1e-05
    %v1564 = vrsqrt.pop %v1562
    %v1565 = vrsqrt.pop %v1563
    %v1566 = vmul.f32 %v1550, %v1564
    %v1567 = vmul.f32 %v1551, %v1565
    %v1568 = vlaneseq
    %v1569 = vshrl.u32 %v1568, 7
    %v1570 = vsub.s32 0, %v1569
    %v1571 = vrot.slane %v1540, %v1570
    %v1572 = vmul.f32 %v1566, %v1571
    %v1573 = vmul.f32 %v1567, %v1571
    %v1574 = vlaneseq
    %v1575 = vshrl.u32 %v1574, 7
    %v1576 = vsub.s32 0, %v1575
    %v1577 = vrot.slane %v1541, %v1576
    %v1578 = vadd.f32 %v1572, %v1577
    %v1579 = vadd.f32 %v1573, %v1577
    %v1580 = vld [vmem:[%s1 + $0xd0] sm:$0xff]
    %v1581 = vld [vmem:[%s1 + $0xd8] sm:$0xff]
    %v1582 = vld [vmem:[%s1 + $0xe0] sm:$0x1]
    %v1583 = vlaneseq
    %v1584 = vshrl.u32 %v1583, 7
    %v1585 = vsub.s32 0, %v1584
    %v1586 = vrot.slane %v1582, %v1585
    %v1588 = vsel %vm126, %v1578, 0
    %v1591 = vsel %vm126, %v1579, 0
    %1593 = vmatprep.subr.mxu0 0.0
    %1594 = vmatpush1.msra.mxu0 0.0
    %1595 = vmatprep.subr.mxu0 0.0
    %1596 = vmatpush1.msra.mxu0 0.0
    %1597 = vmatprep.subr.mxu0 0.0
    %1598 = vmatpush1.msra.mxu0 0.0
    %1599 = vmatprep.subr.mxu0 0.0
    %1600 = vmatpush1.msra.mxu0 0.0
    %1601 = vmatprep.subr.mxu0 0.0
    %1602 = vmatpush1.msra.mxu0 0.0
    %1603 = vmatprep.subr.mxu0 0.0
    %1604 = vmatpush1.msra.mxu0 0.0
    %1605 = vmatprep.subr.mxu0 0.0
    %1606 = vmatpush1.msra.mxu0 0.0
    %1607 = vmatprep.subr.mxu0 0.0
    %1608 = vmatpush1.msra.mxu0 0.0
    %1609 = vmatprep.subr.mxu0 0.0
    %1610 = vmatpush1.msra.mxu0 0.0
    %1611 = vmatprep.subr.mxu0 0.0
    %1612 = vmatpush1.msra.mxu0 0.0
    %1613 = vmatprep.subr.mxu0 0.0
    %1614 = vmatpush1.msra.mxu0 0.0
    %1615 = vmatprep.subr.mxu0 0.0
    %1616 = vmatpush1.msra.mxu0 0.0
    %1617 = vmatprep.subr.mxu0 0.0
    %1618 = vmatpush1.msra.mxu0 0.0
    %1619 = vmatprep.subr.mxu0 0.0
    %1620 = vmatpush1.msra.mxu0 0.0
    %1621 = vmatprep.subr.mxu0 0.0
    %1622 = vmatpush1.msra.mxu0 %v1581
    %1623 = vmatprep.subr.mxu0 0.0
    %1624 = vmatpush1.msra.mxu0 %v1580
    %1625 = vmatprep.subr.mxu0 0.0
    %1626 = vmatpush2.msra.mxu0 0.0
    %1627 = vmatprep.subr.mxu0 0.0
    %1628 = vmatpush2.msra.mxu0 0.0
    %1629 = vmatprep.subr.mxu0 0.0
    %1630 = vmatpush2.msra.mxu0 0.0
    %1631 = vmatprep.subr.mxu0 0.0
    %1632 = vmatpush2.msra.mxu0 0.0
    %1633 = vmatprep.subr.mxu0 0.0
    %1634 = vmatpush2.msra.mxu0 0.0
    %1635 = vmatprep.subr.mxu0 0.0
    %1636 = vmatpush2.msra.mxu0 0.0
    %1637 = vmatprep.subr.mxu0 0.0
    %1638 = vmatpush2.msra.mxu0 0.0
    %1639 = vmatprep.subr.mxu0 0.0
    %1640 = vmatpush2.msra.mxu0 0.0
    %1641 = vmatprep.subr.mxu0 0.0
    %1642 = vmatpush2.msra.mxu0 0.0
    %1643 = vmatprep.subr.mxu0 0.0
    %1644 = vmatpush2.msra.mxu0 0.0
    %1645 = vmatprep.subr.mxu0 0.0
    %1646 = vmatpush2.msra.mxu0 0.0
    %1647 = vmatprep.subr.mxu0 0.0
    %1648 = vmatpush2.msra.mxu0 0.0
    %1649 = vmatprep.subr.mxu0 0.0
    %1650 = vmatpush2.msra.mxu0 0.0
    %1651 = vmatprep.subr.mxu0 0.0
    %1652 = vmatpush2.msra.mxu0 0.0
    %1653 = vmatprep.subr.mxu0 0.0
    %1654 = vmatpush2.msra.mxu0 0.0
    %1655 = vmatprep.subr.mxu0 0.0
    %1656 = vmatpush2.msra.mxu0 0.0
    %1657 = vmatprep.mubr.f32.mxu0 0.0
    %1658 = vmatmul.mubr.f32.gmra.mxu0 %v1588
    %v1659 = vpop.f32.mrf.mxu0
    %v1660 = vadd.f32 %v1586, %v1659
    %v1661 = vpop.f32.mrf.mxu0
    %1662 = vmatprep.mubr.f32.mxu0 0.0
    %1663 = vmatmul.mubr.f32.gmra.mxu0 %v1591
    %v1664 = vpop.f32.mrf.mxu0
    %v1665 = vadd.f32 %v1586, %v1664
    %v1666 = vpop.f32.mrf.mxu0
    %1667 = vdwg.mxu0
    %v1668 = vmax.f32 %v1660, 0.0
    %v1669 = vmax.f32 %v1665, 0.0
    %v1670 = vld [vmem:[%s1 + $0xe8] sm:$0xff]
    %v1671 = vld [vmem:[%s1 + $0xf0] sm:$0xff]
    %v1672 = vld [vmem:[%s1 + $0xf8] sm:$0xff]
    %v1673 = vld [vmem:[%s1 + $0x100] sm:$0xff]
    %v1674 = vld [vmem:[%s1 + $0x108] sm:$0x1]
    %v1675 = vlaneseq
    %v1676 = vshrl.u32 %v1675, 7
    %v1677 = vsub.s32 0, %v1676
    %v1678 = vrot.slane %v1674, %v1677
    %v1680 = vsel %vm838, %v1668, 0
    %v1683 = vsel %vm838, %v1669, 0
    %1685 = vmatprep.subr.mxu0 0.0
    %1686 = vmatpush1.msra.mxu0 0.0
    %1687 = vmatprep.subr.mxu0 0.0
    %1688 = vmatpush1.msra.mxu0 0.0
    %1689 = vmatprep.subr.mxu0 0.0
    %1690 = vmatpush1.msra.mxu0 0.0
    %1691 = vmatprep.subr.mxu0 0.0
    %1692 = vmatpush1.msra.mxu0 0.0
    %1693 = vmatprep.subr.mxu0 0.0
    %1694 = vmatpush1.msra.mxu0 0.0
    %1695 = vmatprep.subr.mxu0 0.0
    %1696 = vmatpush1.msra.mxu0 0.0
    %1697 = vmatprep.subr.mxu0 0.0
    %1698 = vmatpush1.msra.mxu0 0.0
    %1699 = vmatprep.subr.mxu0 0.0
    %1700 = vmatpush1.msra.mxu0 0.0
    %1701 = vmatprep.subr.mxu0 0.0
    %1702 = vmatpush1.msra.mxu0 0.0
    %1703 = vmatprep.subr.mxu0 0.0
    %1704 = vmatpush1.msra.mxu0 0.0
    %1705 = vmatprep.subr.mxu0 0.0
    %1706 = vmatpush1.msra.mxu0 0.0
    %1707 = vmatprep.subr.mxu0 0.0
    %1708 = vmatpush1.msra.mxu0 0.0
    %1709 = vmatprep.subr.mxu0 0.0
    %1710 = vmatpush1.msra.mxu0 %v1673
    %1711 = vmatprep.subr.mxu0 0.0
    %1712 = vmatpush1.msra.mxu0 %v1672
    %1713 = vmatprep.subr.mxu0 0.0
    %1714 = vmatpush1.msra.mxu0 %v1671
    %1715 = vmatprep.subr.mxu0 0.0
    %1716 = vmatpush1.msra.mxu0 %v1670
    %1717 = vmatprep.subr.mxu0 0.0
    %1718 = vmatpush2.msra.mxu0 0.0
    %1719 = vmatprep.subr.mxu0 0.0
    %1720 = vmatpush2.msra.mxu0 0.0
    %1721 = vmatprep.subr.mxu0 0.0
    %1722 = vmatpush2.msra.mxu0 0.0
    %1723 = vmatprep.subr.mxu0 0.0
    %1724 = vmatpush2.msra.mxu0 0.0
    %1725 = vmatprep.subr.mxu0 0.0
    %1726 = vmatpush2.msra.mxu0 0.0
    %1727 = vmatprep.subr.mxu0 0.0
    %1728 = vmatpush2.msra.mxu0 0.0
    %1729 = vmatprep.subr.mxu0 0.0
    %1730 = vmatpush2.msra.mxu0 0.0
    %1731 = vmatprep.subr.mxu0 0.0
    %1732 = vmatpush2.msra.mxu0 0.0
    %1733 = vmatprep.subr.mxu0 0.0
    %1734 = vmatpush2.msra.mxu0 0.0
    %1735 = vmatprep.subr.mxu0 0.0
    %1736 = vmatpush2.msra.mxu0 0.0
    %1737 = vmatprep.subr.mxu0 0.0
    %1738 = vmatpush2.msra.mxu0 0.0
    %1739 = vmatprep.subr.mxu0 0.0
    %1740 = vmatpush2.msra.mxu0 0.0
    %1741 = vmatprep.subr.mxu0 0.0
    %1742 = vmatpush2.msra.mxu0 0.0
    %1743 = vmatprep.subr.mxu0 0.0
    %1744 = vmatpush2.msra.mxu0 0.0
    %1745 = vmatprep.subr.mxu0 0.0
    %1746 = vmatpush2.msra.mxu0 0.0
    %1747 = vmatprep.subr.mxu0 0.0
    %1748 = vmatpush2.msra.mxu0 0.0
    %1749 = vmatprep.mubr.f32.mxu0 0.0
    %1750 = vmatmul.mubr.f32.gmra.mxu0 %v1680
    %v1751 = vpop.f32.mrf.mxu0
    %v1752 = vadd.f32 %v1678, %v1751
    %v1753 = vpop.f32.mrf.mxu0
    %1754 = vmatprep.mubr.f32.mxu0 0.0
    %1755 = vmatmul.mubr.f32.gmra.mxu0 %v1683
    %v1756 = vpop.f32.mrf.mxu0
    %v1757 = vadd.f32 %v1678, %v1756
    %v1758 = vpop.f32.mrf.mxu0
    %1759 = vdwg.mxu0
    %v1760 = vadd.f32 %v1578, %v1752
    %v1761 = vadd.f32 %v1579, %v1757
    %v1762 = vld [vmem:[%s1 + $0x110] sm:$0x1]
    %v1763 = vld [vmem:[%s1 + $0x118] sm:$0x1]
    %v1764 = vsel %vm126, %v1760, 0.0
    %1765 = vadd.xlane.f32.xlu0 %v1764
    %v1766 = vpop.xlane.xlu0 %1765
    %v1767 = vsel %vm126, %v1761, 0.0
    %1768 = vadd.xlane.f32.xlu0 %v1767
    %v1769 = vpop.xlane.xlu0 %1768
    %v1770 = vmul.f32 %v1766, %v706
    %v1771 = vmul.f32 %v1769, %v706
    %v1772 = vsub.f32 %v1760, %v1770
    %v1773 = vsub.f32 %v1761, %v1771
    %v1774 = vmul.f32 %v1772, %v1772
    %v1775 = vmul.f32 %v1773, %v1773
    %v1776 = vsel %vm126, %v1774, 0.0
    %1777 = vadd.xlane.f32.xlu0 %v1776
    %v1778 = vpop.xlane.xlu0 %1777
    %v1779 = vsel %vm126, %v1775, 0.0
    %1780 = vadd.xlane.f32.xlu0 %v1779
    %v1781 = vpop.xlane.xlu0 %1780
    %v1782 = vmul.f32 %v1778, %v706
    %v1783 = vmul.f32 %v1781, %v706
    %v1784 = vadd.f32 %v1782, 1e-05
    %v1785 = vadd.f32 %v1783, 1e-05
    %v1786 = vrsqrt.pop %v1784
    %v1787 = vrsqrt.pop %v1785
    %v1788 = vmul.f32 %v1772, %v1786
    %v1789 = vmul.f32 %v1773, %v1787
    %v1790 = vlaneseq
    %v1791 = vshrl.u32 %v1790, 7
    %v1792 = vsub.s32 0, %v1791
    %v1793 = vrot.slane %v1762, %v1792
    %v1794 = vmul.f32 %v1788, %v1793
    %v1795 = vmul.f32 %v1789, %v1793
    %v1796 = vlaneseq
    %v1797 = vshrl.u32 %v1796, 7
    %v1798 = vsub.s32 0, %v1797
    %v1799 = vrot.slane %v1763, %v1798
    %v1800 = vadd.f32 %v1794, %v1799
    %v1801 = vadd.f32 %v1795, %v1799
    %v1802 = vld [vmem:[%s0 + $0x70] sm:$0xff]
    %vm1803 = vcmask 523264
    %v1805 = vsel %vm1803, %v1802, 0
    %1807 = vmatprep.subr.mxu0 0.0
    %1808 = vmatpush1.msra.mxu0 0.0
    %1809 = vmatprep.subr.mxu0 0.0
    %1810 = vmatpush1.msra.mxu0 0.0
    %1811 = vmatprep.subr.mxu0 0.0
    %1812 = vmatpush1.msra.mxu0 0.0
    %1813 = vmatprep.subr.mxu0 0.0
    %1814 = vmatpush1.msra.mxu0 0.0
    %1815 = vmatprep.subr.mxu0 0.0
    %1816 = vmatpush1.msra.mxu0 0.0
    %1817 = vmatprep.subr.mxu0 0.0
    %1818 = vmatpush1.msra.mxu0 0.0
    %1819 = vmatprep.subr.mxu0 0.0
    %1820 = vmatpush1.msra.mxu0 0.0
    %1821 = vmatprep.subr.mxu0 0.0
    %1822 = vmatpush1.msra.mxu0 0.0
    %1823 = vmatprep.subr.mxu0 0.0
    %1824 = vmatpush1.msra.mxu0 %v1300
    %1825 = vmatprep.subr.mxu0 0.0
    %1826 = vmatpush1.msra.mxu0 %v1299
    %1827 = vmatprep.subr.mxu0 0.0
    %1828 = vmatpush1.msra.mxu0 %v1298
    %1829 = vmatprep.subr.mxu0 0.0
    %1830 = vmatpush1.msra.mxu0 %v1297
    %1831 = vmatprep.subr.mxu0 0.0
    %1832 = vmatpush1.msra.mxu0 %v1296
    %1833 = vmatprep.subr.mxu0 0.0
    %1834 = vmatpush1.msra.mxu0 %v1295
    %1835 = vmatprep.subr.mxu0 0.0
    %1836 = vmatpush1.msra.mxu0 %v1294
    %1837 = vmatprep.subr.mxu0 0.0
    %1838 = vmatpush1.msra.mxu0 %v1293
    %1839 = vmatprep.subr.mxu0 0.0
    %1840 = vmatpush2.msra.mxu0 0.0
    %1841 = vmatprep.subr.mxu0 0.0
    %1842 = vmatpush2.msra.mxu0 0.0
    %1843 = vmatprep.subr.mxu0 0.0
    %1844 = vmatpush2.msra.mxu0 0.0
    %1845 = vmatprep.subr.mxu0 0.0
    %1846 = vmatpush2.msra.mxu0 0.0
    %1847 = vmatprep.subr.mxu0 0.0
    %1848 = vmatpush2.msra.mxu0 0.0
    %1849 = vmatprep.subr.mxu0 0.0
    %1850 = vmatpush2.msra.mxu0 0.0
    %1851 = vmatprep.subr.mxu0 0.0
    %1852 = vmatpush2.msra.mxu0 0.0
    %1853 = vmatprep.subr.mxu0 0.0
    %1854 = vmatpush2.msra.mxu0 0.0
    %1855 = vmatprep.subr.mxu0 0.0
    %1856 = vmatpush2.msra.mxu0 0.0
    %1857 = vmatprep.subr.mxu0 0.0
    %1858 = vmatpush2.msra.mxu0 0.0
    %1859 = vmatprep.subr.mxu0 0.0
    %1860 = vmatpush2.msra.mxu0 0.0
    %1861 = vmatprep.subr.mxu0 0.0
    %1862 = vmatpush2.msra.mxu0 0.0
    %1863 = vmatprep.subr.mxu0 0.0
    %1864 = vmatpush2.msra.mxu0 0.0
    %1865 = vmatprep.subr.mxu0 0.0
    %1866 = vmatpush2.msra.mxu0 0.0
    %1867 = vmatprep.subr.mxu0 0.0
    %1868 = vmatpush2.msra.mxu0 0.0
    %1869 = vmatprep.subr.mxu0 0.0
    %1870 = vmatpush2.msra.mxu0 0.0
    %1871 = vmatprep.mubr.f32.mxu0 0.0
    %1872 = vmatmul.mubr.f32.gmra.mxu0 %v1805
    %v1873 = vpop.f32.mrf.mxu0
    %v1874 = vadd.f32 0.0, %v1873
    %v1875 = vpop.f32.mrf.mxu0
    %1876 = vdwg.mxu0
    %vm1877 = vcmp.gt.f32.partialorder %v1874, 0.0
    %v1878 = vmax.f32 %v1874, 1e-12
    %v1879 = vrsqrt.pop %v1878
    %v1880 = vsel %vm1877, %v1879, 0.0
    %1882 = vrot.lane.b32.xlu0 %v1880, 16
    %v1883 = vpop.permute.xlu0 %1882
    %1885 = vrot.lane.b32.xlu0 %v1880, 32
    %v1886 = vpop.permute.xlu0 %1885
    %1888 = vrot.lane.b32.xlu0 %v1880, 48
    %v1889 = vpop.permute.xlu0 %1888
    %v1891 = vsel %vm126, %v1880, %v1883
    %v1892 = vsel %vm838, %v1891, %v1886
    %vm1893 = vcmask 392192
    %v1894 = vsel %vm1893, %v1892, %v1889
    %v1895 = vld [vmem:[%s1 + $0x1f8] sm:$0xff]
    %v1896 = vmul.f32 %v1894, %v1895
    %v1898 = vsel %vm1803, %v1896, 0
    %1900 = vmatprep.subr.mxu0 0.0
    %1901 = vmatpush1.msra.mxu0 0.0
    %1902 = vmatprep.subr.mxu0 0.0
    %1903 = vmatpush1.msra.mxu0 0.0
    %1904 = vmatprep.subr.mxu0 0.0
    %1905 = vmatpush1.msra.mxu0 0.0
    %1906 = vmatprep.subr.mxu0 0.0
    %1907 = vmatpush1.msra.mxu0 0.0
    %1908 = vmatprep.subr.mxu0 0.0
    %1909 = vmatpush1.msra.mxu0 0.0
    %1910 = vmatprep.subr.mxu0 0.0
    %1911 = vmatpush1.msra.mxu0 0.0
    %1912 = vmatprep.subr.mxu0 0.0
    %1913 = vmatpush1.msra.mxu0 0.0
    %1914 = vmatprep.subr.mxu0 0.0
    %1915 = vmatpush1.msra.mxu0 0.0
    %1916 = vmatprep.subr.mxu0 0.0
    %1917 = vmatpush1.msra.mxu0 %v1300
    %1918 = vmatprep.subr.mxu0 0.0
    %1919 = vmatpush1.msra.mxu0 %v1299
    %1920 = vmatprep.subr.mxu0 0.0
    %1921 = vmatpush1.msra.mxu0 %v1298
    %1922 = vmatprep.subr.mxu0 0.0
    %1923 = vmatpush1.msra.mxu0 %v1297
    %1924 = vmatprep.subr.mxu0 0.0
    %1925 = vmatpush1.msra.mxu0 %v1296
    %1926 = vmatprep.subr.mxu0 0.0
    %1927 = vmatpush1.msra.mxu0 %v1295
    %1928 = vmatprep.subr.mxu0 0.0
    %1929 = vmatpush1.msra.mxu0 %v1294
    %1930 = vmatprep.subr.mxu0 0.0
    %1931 = vmatpush1.msra.mxu0 %v1293
    %1932 = vmatprep.subr.mxu0 0.0
    %1933 = vmatpush2.msra.mxu0 0.0
    %1934 = vmatprep.subr.mxu0 0.0
    %1935 = vmatpush2.msra.mxu0 0.0
    %1936 = vmatprep.subr.mxu0 0.0
    %1937 = vmatpush2.msra.mxu0 0.0
    %1938 = vmatprep.subr.mxu0 0.0
    %1939 = vmatpush2.msra.mxu0 0.0
    %1940 = vmatprep.subr.mxu0 0.0
    %1941 = vmatpush2.msra.mxu0 0.0
    %1942 = vmatprep.subr.mxu0 0.0
    %1943 = vmatpush2.msra.mxu0 0.0
    %1944 = vmatprep.subr.mxu0 0.0
    %1945 = vmatpush2.msra.mxu0 0.0
    %1946 = vmatprep.subr.mxu0 0.0
    %1947 = vmatpush2.msra.mxu0 0.0
    %1948 = vmatprep.subr.mxu0 0.0
    %1949 = vmatpush2.msra.mxu0 0.0
    %1950 = vmatprep.subr.mxu0 0.0
    %1951 = vmatpush2.msra.mxu0 0.0
    %1952 = vmatprep.subr.mxu0 0.0
    %1953 = vmatpush2.msra.mxu0 0.0
    %1954 = vmatprep.subr.mxu0 0.0
    %1955 = vmatpush2.msra.mxu0 0.0
    %1956 = vmatprep.subr.mxu0 0.0
    %1957 = vmatpush2.msra.mxu0 0.0
    %1958 = vmatprep.subr.mxu0 0.0
    %1959 = vmatpush2.msra.mxu0 0.0
    %1960 = vmatprep.subr.mxu0 0.0
    %1961 = vmatpush2.msra.mxu0 0.0
    %1962 = vmatprep.subr.mxu0 0.0
    %1963 = vmatpush2.msra.mxu0 0.0
    %1964 = vmatprep.mubr.f32.mxu0 0.0
    %1965 = vmatmul.mubr.f32.gmra.mxu0 %v1898
    %v1966 = vpop.f32.mrf.mxu0
    %v1967 = vadd.f32 0.0, %v1966
    %v1968 = vpop.f32.mrf.mxu0
    %1969 = vdwg.mxu0
    %v1970 = vmul.f32 %v1880, %v1967
    %v1971 = vld [vmem:[%s1 + $0x200] sm:$0xff]
    %v1972 = vld [vmem:[%s1 + $0x208] sm:$0xff]
    %v1973 = vld [vmem:[%s1 + $0x210] sm:$0xff]
    %v1974 = vld [vmem:[%s1 + $0x218] sm:$0xff]
    %v1975 = vld [vmem:[%s1 + $0x220] sm:$0xff]
    %v1976 = vld [vmem:[%s1 + $0x228] sm:$0xff]
    %v1977 = vld [vmem:[%s1 + $0x230] sm:$0xff]
    %v1978 = vld [vmem:[%s1 + $0x238] sm:$0xff]
    %vm1979 = vcmask 64512
    %v1981 = vsel %vm1979, %v1971, 0
    %v1984 = vsel %vm1979, %v1972, 0
    %v1987 = vsel %vm1979, %v1973, 0
    %v1990 = vsel %vm1979, %v1974, 0
    %v1993 = vsel %vm1979, %v1975, 0
    %v1996 = vsel %vm1979, %v1976, 0
    %v1999 = vsel %vm1979, %v1977, 0
    %v2002 = vsel %vm1979, %v1978, 0
    %2004 = vmatprep.subr.mxu0 0.0
    %2005 = vmatpush1.msra.mxu0 0.0
    %2006 = vmatprep.subr.mxu0 0.0
    %2007 = vmatpush1.msra.mxu0 0.0
    %2008 = vmatprep.subr.mxu0 0.0
    %2009 = vmatpush1.msra.mxu0 0.0
    %2010 = vmatprep.subr.mxu0 0.0
    %2011 = vmatpush1.msra.mxu0 0.0
    %2012 = vmatprep.subr.mxu0 0.0
    %2013 = vmatpush1.msra.mxu0 0.0
    %2014 = vmatprep.subr.mxu0 0.0
    %2015 = vmatpush1.msra.mxu0 0.0
    %2016 = vmatprep.subr.mxu0 0.0
    %2017 = vmatpush1.msra.mxu0 0.0
    %2018 = vmatprep.subr.mxu0 0.0
    %2019 = vmatpush1.msra.mxu0 0.0
    %2020 = vmatprep.subr.mxu0 0.0
    %2021 = vmatpush1.msra.mxu0 0.0
    %2022 = vmatprep.subr.mxu0 0.0
    %2023 = vmatpush1.msra.mxu0 0.0
    %2024 = vmatprep.subr.mxu0 0.0
    %2025 = vmatpush1.msra.mxu0 0.0
    %2026 = vmatprep.subr.mxu0 0.0
    %2027 = vmatpush1.msra.mxu0 0.0
    %2028 = vmatprep.subr.mxu0 0.0
    %2029 = vmatpush1.msra.mxu0 0.0
    %2030 = vmatprep.subr.mxu0 0.0
    %2031 = vmatpush1.msra.mxu0 0.0
    %2032 = vmatprep.subr.mxu0 0.0
    %2033 = vmatpush1.msra.mxu0 0.0
    %2034 = vmatprep.subr.mxu0 0.0
    %2035 = vmatpush1.msra.mxu0 %v1970
    %2036 = vmatprep.subr.mxu0 0.0
    %2037 = vmatpush2.msra.mxu0 0.0
    %2038 = vmatprep.subr.mxu0 0.0
    %2039 = vmatpush2.msra.mxu0 0.0
    %2040 = vmatprep.subr.mxu0 0.0
    %2041 = vmatpush2.msra.mxu0 0.0
    %2042 = vmatprep.subr.mxu0 0.0
    %2043 = vmatpush2.msra.mxu0 0.0
    %2044 = vmatprep.subr.mxu0 0.0
    %2045 = vmatpush2.msra.mxu0 0.0
    %2046 = vmatprep.subr.mxu0 0.0
    %2047 = vmatpush2.msra.mxu0 0.0
    %2048 = vmatprep.subr.mxu0 0.0
    %2049 = vmatpush2.msra.mxu0 0.0
    %2050 = vmatprep.subr.mxu0 0.0
    %2051 = vmatpush2.msra.mxu0 0.0
    %2052 = vmatprep.subr.mxu0 0.0
    %2053 = vmatpush2.msra.mxu0 0.0
    %2054 = vmatprep.subr.mxu0 0.0
    %2055 = vmatpush2.msra.mxu0 0.0
    %2056 = vmatprep.subr.mxu0 0.0
    %2057 = vmatpush2.msra.mxu0 0.0
    %2058 = vmatprep.subr.mxu0 0.0
    %2059 = vmatpush2.msra.mxu0 0.0
    %2060 = vmatprep.subr.mxu0 0.0
    %2061 = vmatpush2.msra.mxu0 0.0
    %2062 = vmatprep.subr.mxu0 0.0
    %2063 = vmatpush2.msra.mxu0 0.0
    %2064 = vmatprep.subr.mxu0 0.0
    %2065 = vmatpush2.msra.mxu0 0.0
    %2066 = vmatprep.subr.mxu0 0.0
    %2067 = vmatpush2.msra.mxu0 0.0
    %2068 = vmatprep.mubr.f32.mxu0 0.0
    %2069 = vmatmul.mubr.f32.gmra.mxu0 %v1981
    %v2070 = vpop.f32.mrf.mxu0
    %v2071 = vadd.f32 0.0, %v2070
    %v2072 = vpop.f32.mrf.mxu0
    %2073 = vmatprep.mubr.f32.mxu0 0.0
    %2074 = vmatmul.mubr.f32.gmra.mxu0 %v1984
    %v2075 = vpop.f32.mrf.mxu0
    %v2076 = vadd.f32 0.0, %v2075
    %v2077 = vpop.f32.mrf.mxu0
    %2078 = vmatprep.mubr.f32.mxu0 0.0
    %2079 = vmatmul.mubr.f32.gmra.mxu0 %v1987
    %v2080 = vpop.f32.mrf.mxu0
    %v2081 = vadd.f32 0.0, %v2080
    %v2082 = vpop.f32.mrf.mxu0
    %2083 = vmatprep.mubr.f32.mxu0 0.0
    %2084 = vmatmul.mubr.f32.gmra.mxu0 %v1990
    %v2085 = vpop.f32.mrf.mxu0
    %v2086 = vadd.f32 0.0, %v2085
    %v2087 = vpop.f32.mrf.mxu0
    %2088 = vmatprep.mubr.f32.mxu0 0.0
    %2089 = vmatmul.mubr.f32.gmra.mxu0 %v1993
    %v2090 = vpop.f32.mrf.mxu0
    %v2091 = vadd.f32 0.0, %v2090
    %v2092 = vpop.f32.mrf.mxu0
    %2093 = vmatprep.mubr.f32.mxu0 0.0
    %2094 = vmatmul.mubr.f32.gmra.mxu0 %v1996
    %v2095 = vpop.f32.mrf.mxu0
    %v2096 = vadd.f32 0.0, %v2095
    %v2097 = vpop.f32.mrf.mxu0
    %2098 = vmatprep.mubr.f32.mxu0 0.0
    %2099 = vmatmul.mubr.f32.gmra.mxu0 %v1999
    %v2100 = vpop.f32.mrf.mxu0
    %v2101 = vadd.f32 0.0, %v2100
    %v2102 = vpop.f32.mrf.mxu0
    %2103 = vmatprep.mubr.f32.mxu0 0.0
    %2104 = vmatmul.mubr.f32.gmra.mxu0 %v2002
    %v2105 = vpop.f32.mrf.mxu0
    %v2106 = vadd.f32 0.0, %v2105
    %v2107 = vpop.f32.mrf.mxu0
    %2108 = vdwg.mxu0
    %v2109 = vld [vmem:[%s1 + $0x240] sm:$0xff]
    %v2110 = vld [vmem:[%s1 + $0x248] sm:$0xff]
    %v2111 = vld [vmem:[%s1 + $0x250] sm:$0xff]
    %v2112 = vld [vmem:[%s1 + $0x258] sm:$0xff]
    %v2113 = vld [vmem:[%s1 + $0x260] sm:$0xff]
    %v2114 = vld [vmem:[%s1 + $0x268] sm:$0xff]
    %v2115 = vld [vmem:[%s1 + $0x270] sm:$0xff]
    %v2116 = vld [vmem:[%s1 + $0x278] sm:$0xff]
    %v2117 = vmul.f32 %v2071, %v2109
    %v2118 = vmul.f32 %v2076, %v2110
    %v2119 = vmul.f32 %v2081, %v2111
    %v2120 = vmul.f32 %v2086, %v2112
    %v2121 = vmul.f32 %v2091, %v2113
    %v2122 = vmul.f32 %v2096, %v2114
    %v2123 = vmul.f32 %v2101, %v2115
    %v2124 = vmul.f32 %v2106, %v2116
    %v2125 = vsel %vm126, %v2117, 0.0
    %2126 = vadd.xlane.f32.xlu0 %v2125
    %v2127 = vpop.xlane.xlu0 %2126
    %v2128 = vsel %vm126, %v2118, 0.0
    %2129 = vadd.xlane.f32.xlu0 %v2128
    %v2130 = vpop.xlane.xlu0 %2129
    %v2131 = vsel %vm126, %v2119, 0.0
    %2132 = vadd.xlane.f32.xlu0 %v2131
    %v2133 = vpop.xlane.xlu0 %2132
    %v2134 = vsel %vm126, %v2120, 0.0
    %2135 = vadd.xlane.f32.xlu0 %v2134
    %v2136 = vpop.xlane.xlu0 %2135
    %v2137 = vsel %vm126, %v2121, 0.0
    %2138 = vadd.xlane.f32.xlu0 %v2137
    %v2139 = vpop.xlane.xlu0 %2138
    %v2140 = vsel %vm126, %v2122, 0.0
    %2141 = vadd.xlane.f32.xlu0 %v2140
    %v2142 = vpop.xlane.xlu0 %2141
    %v2143 = vsel %vm126, %v2123, 0.0
    %2144 = vadd.xlane.f32.xlu0 %v2143
    %v2145 = vpop.xlane.xlu0 %2144
    %v2146 = vsel %vm126, %v2124, 0.0
    %2147 = vadd.xlane.f32.xlu0 %v2146
    %v2148 = vpop.xlane.xlu0 %2147
    %v2149 = vld [vmem:[%s1 + $0x128] sm:$0x1]
    %v2150 = vlaneseq
    %v2151 = vshrl.u32 %v2150, 7
    %v2152 = vsub.s32 0, %v2151
    %v2153 = vrot.slane %v2149, %v2152
    %v2154 = vmul.f32 %v2127, %v2153
    %v2155 = vmul.f32 %v2130, %v2153
    %v2156 = vmul.f32 %v2133, %v2153
    %v2157 = vmul.f32 %v2136, %v2153
    %v2158 = vmul.f32 %v2139, %v2153
    %v2159 = vmul.f32 %v2142, %v2153
    %v2160 = vmul.f32 %v2145, %v2153
    %v2161 = vmul.f32 %v2148, %v2153
    %v2162 = vld [vmem:[%s1 + $0x130] sm:$0x1]
    %v2163 = vlaneseq
    %v2164 = vshrl.u32 %v2163, 7
    %v2165 = vsub.s32 0, %v2164
    %v2166 = vrot.slane %v2162, %v2165
    %v2167 = vadd.f32 %v2154, %v2166
    %v2168 = vadd.f32 %v2155, %v2166
    %v2169 = vadd.f32 %v2156, %v2166
    %v2170 = vadd.f32 %v2157, %v2166
    %v2171 = vadd.f32 %v2158, %v2166
    %v2172 = vadd.f32 %v2159, %v2166
    %v2173 = vadd.f32 %v2160, %v2166
    %v2174 = vadd.f32 %v2161, %v2166
    %v2175 = vtanh.pop %v2167
    %v2176 = vtanh.pop %v2168
    %v2177 = vtanh.pop %v2169
    %v2178 = vtanh.pop %v2170
    %v2179 = vtanh.pop %v2171
    %v2180 = vtanh.pop %v2172
    %v2181 = vtanh.pop %v2173
    %v2182 = vtanh.pop %v2174
    %v2183 = vld [vmem:[%s0 + $0x78] sm:$0xff]
    %v2185 = vsel %vm1803, %v2183, 0
    %2187 = vmatprep.subr.mxu0 0.0
    %2188 = vmatpush1.msra.mxu0 0.0
    %2189 = vmatprep.subr.mxu0 0.0
    %2190 = vmatpush1.msra.mxu0 0.0
    %2191 = vmatprep.subr.mxu0 0.0
    %2192 = vmatpush1.msra.mxu0 0.0
    %2193 = vmatprep.subr.mxu0 0.0
    %2194 = vmatpush1.msra.mxu0 0.0
    %2195 = vmatprep.subr.mxu0 0.0
    %2196 = vmatpush1.msra.mxu0 0.0
    %2197 = vmatprep.subr.mxu0 0.0
    %2198 = vmatpush1.msra.mxu0 0.0
    %2199 = vmatprep.subr.mxu0 0.0
    %2200 = vmatpush1.msra.mxu0 0.0
    %2201 = vmatprep.subr.mxu0 0.0
    %2202 = vmatpush1.msra.mxu0 0.0
    %2203 = vmatprep.subr.mxu0 0.0
    %2204 = vmatpush1.msra.mxu0 %v2182
    %2205 = vmatprep.subr.mxu0 0.0
    %2206 = vmatpush1.msra.mxu0 %v2181
    %2207 = vmatprep.subr.mxu0 0.0
    %2208 = vmatpush1.msra.mxu0 %v2180
    %2209 = vmatprep.subr.mxu0 0.0
    %2210 = vmatpush1.msra.mxu0 %v2179
    %2211 = vmatprep.subr.mxu0 0.0
    %2212 = vmatpush1.msra.mxu0 %v2178
    %2213 = vmatprep.subr.mxu0 0.0
    %2214 = vmatpush1.msra.mxu0 %v2177
    %2215 = vmatprep.subr.mxu0 0.0
    %2216 = vmatpush1.msra.mxu0 %v2176
    %2217 = vmatprep.subr.mxu0 0.0
    %2218 = vmatpush1.msra.mxu0 %v2175
    %2219 = vmatprep.subr.mxu0 0.0
    %2220 = vmatpush2.msra.mxu0 0.0
    %2221 = vmatprep.subr.mxu0 0.0
    %2222 = vmatpush2.msra.mxu0 0.0
    %2223 = vmatprep.subr.mxu0 0.0
    %2224 = vmatpush2.msra.mxu0 0.0
    %2225 = vmatprep.subr.mxu0 0.0
    %2226 = vmatpush2.msra.mxu0 0.0
    %2227 = vmatprep.subr.mxu0 0.0
    %2228 = vmatpush2.msra.mxu0 0.0
    %2229 = vmatprep.subr.mxu0 0.0
    %2230 = vmatpush2.msra.mxu0 0.0
    %2231 = vmatprep.subr.mxu0 0.0
    %2232 = vmatpush2.msra.mxu0 0.0
    %2233 = vmatprep.subr.mxu0 0.0
    %2234 = vmatpush2.msra.mxu0 0.0
    %2235 = vmatprep.subr.mxu0 0.0
    %2236 = vmatpush2.msra.mxu0 0.0
    %2237 = vmatprep.subr.mxu0 0.0
    %2238 = vmatpush2.msra.mxu0 0.0
    %2239 = vmatprep.subr.mxu0 0.0
    %2240 = vmatpush2.msra.mxu0 0.0
    %2241 = vmatprep.subr.mxu0 0.0
    %2242 = vmatpush2.msra.mxu0 0.0
    %2243 = vmatprep.subr.mxu0 0.0
    %2244 = vmatpush2.msra.mxu0 0.0
    %2245 = vmatprep.subr.mxu0 0.0
    %2246 = vmatpush2.msra.mxu0 0.0
    %2247 = vmatprep.subr.mxu0 0.0
    %2248 = vmatpush2.msra.mxu0 0.0
    %2249 = vmatprep.subr.mxu0 0.0
    %2250 = vmatpush2.msra.mxu0 0.0
    %2251 = vmatprep.mubr.f32.mxu0 0.0
    %2252 = vmatmul.mubr.f32.gmra.mxu0 %v2185
    %v2253 = vpop.f32.mrf.mxu0
    %v2254 = vadd.f32 0.0, %v2253
    %v2255 = vpop.f32.mrf.mxu0
    %2256 = vdwg.mxu0
    %v2257 = vld [vmem:[%s1 + $0x138] sm:$0xff]
    %v2258 = vld [vmem:[%s1 + $0x140] sm:$0xff]
    %v2259 = vld [vmem:[%s1 + $0x148] sm:$0xff]
    %v2260 = vld [vmem:[%s1 + $0x150] sm:$0xff]
    %v2261 = vld [vmem:[%s1 + $0x158] sm:$0x1]
    %v2262 = vlaneseq
    %v2263 = vshrl.u32 %v2262, 7
    %v2264 = vsub.s32 0, %v2263
    %v2265 = vrot.slane %v2261, %v2264
    %v2267 = vsel %vm838, %v2254, 0
    %2269 = vmatprep.subr.mxu0 0.0
    %2270 = vmatpush1.msra.mxu0 0.0
    %2271 = vmatprep.subr.mxu0 0.0
    %2272 = vmatpush1.msra.mxu0 0.0
    %2273 = vmatprep.subr.mxu0 0.0
    %2274 = vmatpush1.msra.mxu0 0.0
    %2275 = vmatprep.subr.mxu0 0.0
    %2276 = vmatpush1.msra.mxu0 0.0
    %2277 = vmatprep.subr.mxu0 0.0
    %2278 = vmatpush1.msra.mxu0 0.0
    %2279 = vmatprep.subr.mxu0 0.0
    %2280 = vmatpush1.msra.mxu0 0.0
    %2281 = vmatprep.subr.mxu0 0.0
    %2282 = vmatpush1.msra.mxu0 0.0
    %2283 = vmatprep.subr.mxu0 0.0
    %2284 = vmatpush1.msra.mxu0 0.0
    %2285 = vmatprep.subr.mxu0 0.0
    %2286 = vmatpush1.msra.mxu0 0.0
    %2287 = vmatprep.subr.mxu0 0.0
    %2288 = vmatpush1.msra.mxu0 0.0
    %2289 = vmatprep.subr.mxu0 0.0
    %2290 = vmatpush1.msra.mxu0 0.0
    %2291 = vmatprep.subr.mxu0 0.0
    %2292 = vmatpush1.msra.mxu0 0.0
    %2293 = vmatprep.subr.mxu0 0.0
    %2294 = vmatpush1.msra.mxu0 %v2260
    %2295 = vmatprep.subr.mxu0 0.0
    %2296 = vmatpush1.msra.mxu0 %v2259
    %2297 = vmatprep.subr.mxu0 0.0
    %2298 = vmatpush1.msra.mxu0 %v2258
    %2299 = vmatprep.subr.mxu0 0.0
    %2300 = vmatpush1.msra.mxu0 %v2257
    %2301 = vmatprep.subr.mxu0 0.0
    %2302 = vmatpush2.msra.mxu0 0.0
    %2303 = vmatprep.subr.mxu0 0.0
    %2304 = vmatpush2.msra.mxu0 0.0
    %2305 = vmatprep.subr.mxu0 0.0
    %2306 = vmatpush2.msra.mxu0 0.0
    %2307 = vmatprep.subr.mxu0 0.0
    %2308 = vmatpush2.msra.mxu0 0.0
    %2309 = vmatprep.subr.mxu0 0.0
    %2310 = vmatpush2.msra.mxu0 0.0
    %2311 = vmatprep.subr.mxu0 0.0
    %2312 = vmatpush2.msra.mxu0 0.0
    %2313 = vmatprep.subr.mxu0 0.0
    %2314 = vmatpush2.msra.mxu0 0.0
    %2315 = vmatprep.subr.mxu0 0.0
    %2316 = vmatpush2.msra.mxu0 0.0
    %2317 = vmatprep.subr.mxu0 0.0
    %2318 = vmatpush2.msra.mxu0 0.0
    %2319 = vmatprep.subr.mxu0 0.0
    %2320 = vmatpush2.msra.mxu0 0.0
    %2321 = vmatprep.subr.mxu0 0.0
    %2322 = vmatpush2.msra.mxu0 0.0
    %2323 = vmatprep.subr.mxu0 0.0
    %2324 = vmatpush2.msra.mxu0 0.0
    %2325 = vmatprep.subr.mxu0 0.0
    %2326 = vmatpush2.msra.mxu0 0.0
    %2327 = vmatprep.subr.mxu0 0.0
    %2328 = vmatpush2.msra.mxu0 0.0
    %2329 = vmatprep.subr.mxu0 0.0
    %2330 = vmatpush2.msra.mxu0 0.0
    %2331 = vmatprep.subr.mxu0 0.0
    %2332 = vmatpush2.msra.mxu0 0.0
    %2333 = vmatprep.mubr.f32.mxu0 0.0
    %2334 = vmatmul.mubr.f32.gmra.mxu0 %v2267
    %v2335 = vpop.f32.mrf.mxu0
    %v2336 = vadd.f32 %v2265, %v2335
    %v2337 = vpop.f32.mrf.mxu0
    %2338 = vdwg.mxu0
    %2340 = vset.pattern.permute.xlu0 0
    %2341 = vperm.xlu0 %2340, %v12
    %v2342 = vpop.permute.xlu0 %2341
    %2345 = vset.pattern.permute.xlu0 0
    %2346 = vperm.xlu0 %2345, %v13
    %v2347 = vpop.permute.xlu0 %2346
    %v2349 = vmul.f32 %v1448, %v2342
    %v2350 = vmul.f32 %v1449, %v2347
    %v2351 = vld [vmem:[%s0 + $0x60] sm:$0xff]
    %v2352 = vld [vmem:[%s0 + $0x68] sm:$0xff]
    %v2354 = vsel %vm126, %v2351, 0
    %v2357 = vsel %vm126, %v2352, 0
    %2359 = vmatprep.subr.mxu0 0.0
    %2360 = vmatpush1.msra.mxu0 0.0
    %2361 = vmatprep.subr.mxu0 0.0
    %2362 = vmatpush1.msra.mxu0 0.0
    %2363 = vmatprep.subr.mxu0 0.0
    %2364 = vmatpush1.msra.mxu0 0.0
    %2365 = vmatprep.subr.mxu0 0.0
    %2366 = vmatpush1.msra.mxu0 0.0
    %2367 = vmatprep.subr.mxu0 0.0
    %2368 = vmatpush1.msra.mxu0 0.0
    %2369 = vmatprep.subr.mxu0 0.0
    %2370 = vmatpush1.msra.mxu0 0.0
    %2371 = vmatprep.subr.mxu0 0.0
    %2372 = vmatpush1.msra.mxu0 0.0
    %2373 = vmatprep.subr.mxu0 0.0
    %2374 = vmatpush1.msra.mxu0 0.0
    %2375 = vmatprep.subr.mxu0 0.0
    %2376 = vmatpush1.msra.mxu0 0.0
    %2377 = vmatprep.subr.mxu0 0.0
    %2378 = vmatpush1.msra.mxu0 0.0
    %2379 = vmatprep.subr.mxu0 0.0
    %2380 = vmatpush1.msra.mxu0 0.0
    %2381 = vmatprep.subr.mxu0 0.0
    %2382 = vmatpush1.msra.mxu0 0.0
    %2383 = vmatprep.subr.mxu0 0.0
    %2384 = vmatpush1.msra.mxu0 0.0
    %2385 = vmatprep.subr.mxu0 0.0
    %2386 = vmatpush1.msra.mxu0 0.0
    %2387 = vmatprep.subr.mxu0 0.0
    %2388 = vmatpush1.msra.mxu0 %v2350
    %2389 = vmatprep.subr.mxu0 0.0
    %2390 = vmatpush1.msra.mxu0 %v2349
    %2391 = vmatprep.subr.mxu0 0.0
    %2392 = vmatpush2.msra.mxu0 0.0
    %2393 = vmatprep.subr.mxu0 0.0
    %2394 = vmatpush2.msra.mxu0 0.0
    %2395 = vmatprep.subr.mxu0 0.0
    %2396 = vmatpush2.msra.mxu0 0.0
    %2397 = vmatprep.subr.mxu0 0.0
    %2398 = vmatpush2.msra.mxu0 0.0
    %2399 = vmatprep.subr.mxu0 0.0
    %2400 = vmatpush2.msra.mxu0 0.0
    %2401 = vmatprep.subr.mxu0 0.0
    %2402 = vmatpush2.msra.mxu0 0.0
    %2403 = vmatprep.subr.mxu0 0.0
    %2404 = vmatpush2.msra.mxu0 0.0
    %2405 = vmatprep.subr.mxu0 0.0
    %2406 = vmatpush2.msra.mxu0 0.0
    %2407 = vmatprep.subr.mxu0 0.0
    %2408 = vmatpush2.msra.mxu0 0.0
    %2409 = vmatprep.subr.mxu0 0.0
    %2410 = vmatpush2.msra.mxu0 0.0
    %2411 = vmatprep.subr.mxu0 0.0
    %2412 = vmatpush2.msra.mxu0 0.0
    %2413 = vmatprep.subr.mxu0 0.0
    %2414 = vmatpush2.msra.mxu0 0.0
    %2415 = vmatprep.subr.mxu0 0.0
    %2416 = vmatpush2.msra.mxu0 0.0
    %2417 = vmatprep.subr.mxu0 0.0
    %2418 = vmatpush2.msra.mxu0 0.0
    %2419 = vmatprep.subr.mxu0 0.0
    %2420 = vmatpush2.msra.mxu0 0.0
    %2421 = vmatprep.subr.mxu0 0.0
    %2422 = vmatpush2.msra.mxu0 0.0
    %2423 = vmatprep.mubr.f32.mxu0 0.0
    %2424 = vmatmul.mubr.f32.gmra.mxu0 %v2354
    %v2425 = vpop.f32.mrf.mxu0
    %v2426 = vadd.f32 0.0, %v2425
    %v2427 = vpop.f32.mrf.mxu0
    %2428 = vmatprep.mubr.f32.mxu0 0.0
    %2429 = vmatmul.mubr.f32.gmra.mxu0 %v2357
    %v2430 = vpop.f32.mrf.mxu0
    %v2431 = vadd.f32 0.0, %v2430
    %v2432 = vpop.f32.mrf.mxu0
    %2433 = vdwg.mxu0
    %2436 = vrot.lane.b32.xlu0 %v2426, 16
    %v2437 = vpop.permute.xlu0 %2436
    %2438 = vrot.lane.b32.xlu0 %v2431, 16
    %v2439 = vpop.permute.xlu0 %2438
    %v2442 = vsel %vm126, %v2349, %v2437
    %v2443 = vsel %vm126, %v2350, %v2439
    %2446 = vrot.lane.b32.xlu0 %v2442, 32
    %v2447 = vpop.permute.xlu0 %2446
    %2448 = vrot.lane.b32.xlu0 %v2443, 32
    %v2449 = vpop.permute.xlu0 %2448
    %v2452 = vsel %vm838, %v2442, %v2447
    %v2453 = vsel %vm838, %v2443, %v2449
    %v2454 = vld [vmem:[%s1 + $0x360] sm:$0xff]
    %v2455 = vld [vmem:[%s1 + $0x368] sm:$0xff]
    %v2456 = vmul.f32 %v2452, %v2454
    %v2457 = vmul.f32 %v2453, %v2455
    %v2458 = vld [vmem:[%s1 + $0x280] sm:$0xff]
    %v2459 = vld [vmem:[%s1 + $0x288] sm:$0xff]
    %v2460 = vld [vmem:[%s1 + $0x290] sm:$0xff]
    %v2461 = vld [vmem:[%s1 + $0x298] sm:$0xff]
    %v2462 = vld [vmem:[%s1 + $0x2a0] sm:$0xff]
    %v2463 = vld [vmem:[%s1 + $0x2a8] sm:$0xff]
    %v2464 = vld [vmem:[%s1 + $0x2b0] sm:$0xff]
    %v2465 = vld [vmem:[%s1 + $0x2b8] sm:$0xff]
    %v2467 = vsel %vm1979, %v2458, 0
    %v2470 = vsel %vm1979, %v2459, 0
    %v2473 = vsel %vm1979, %v2460, 0
    %v2476 = vsel %vm1979, %v2461, 0
    %v2479 = vsel %vm1979, %v2462, 0
    %v2482 = vsel %vm1979, %v2463, 0
    %v2485 = vsel %vm1979, %v2464, 0
    %v2488 = vsel %vm1979, %v2465, 0
    %2490 = vmatprep.subr.mxu0 0.0
    %2491 = vmatpush1.msra.mxu0 0.0
    %2492 = vmatprep.subr.mxu0 0.0
    %2493 = vmatpush1.msra.mxu0 0.0
    %2494 = vmatprep.subr.mxu0 0.0
    %2495 = vmatpush1.msra.mxu0 0.0
    %2496 = vmatprep.subr.mxu0 0.0
    %2497 = vmatpush1.msra.mxu0 0.0
    %2498 = vmatprep.subr.mxu0 0.0
    %2499 = vmatpush1.msra.mxu0 0.0
    %2500 = vmatprep.subr.mxu0 0.0
    %2501 = vmatpush1.msra.mxu0 0.0
    %2502 = vmatprep.subr.mxu0 0.0
    %2503 = vmatpush1.msra.mxu0 0.0
    %2504 = vmatprep.subr.mxu0 0.0
    %2505 = vmatpush1.msra.mxu0 0.0
    %2506 = vmatprep.subr.mxu0 0.0
    %2507 = vmatpush1.msra.mxu0 0.0
    %2508 = vmatprep.subr.mxu0 0.0
    %2509 = vmatpush1.msra.mxu0 0.0
    %2510 = vmatprep.subr.mxu0 0.0
    %2511 = vmatpush1.msra.mxu0 0.0
    %2512 = vmatprep.subr.mxu0 0.0
    %2513 = vmatpush1.msra.mxu0 0.0
    %2514 = vmatprep.subr.mxu0 0.0
    %2515 = vmatpush1.msra.mxu0 0.0
    %2516 = vmatprep.subr.mxu0 0.0
    %2517 = vmatpush1.msra.mxu0 0.0
    %2518 = vmatprep.subr.mxu0 0.0
    %2519 = vmatpush1.msra.mxu0 0.0
    %2520 = vmatprep.subr.mxu0 0.0
    %2521 = vmatpush1.msra.mxu0 %v2336
    %2522 = vmatprep.subr.mxu0 0.0
    %2523 = vmatpush2.msra.mxu0 0.0
    %2524 = vmatprep.subr.mxu0 0.0
    %2525 = vmatpush2.msra.mxu0 0.0
    %2526 = vmatprep.subr.mxu0 0.0
    %2527 = vmatpush2.msra.mxu0 0.0
    %2528 = vmatprep.subr.mxu0 0.0
    %2529 = vmatpush2.msra.mxu0 0.0
    %2530 = vmatprep.subr.mxu0 0.0
    %2531 = vmatpush2.msra.mxu0 0.0
    %2532 = vmatprep.subr.mxu0 0.0
    %2533 = vmatpush2.msra.mxu0 0.0
    %2534 = vmatprep.subr.mxu0 0.0
    %2535 = vmatpush2.msra.mxu0 0.0
    %2536 = vmatprep.subr.mxu0 0.0
    %2537 = vmatpush2.msra.mxu0 0.0
    %2538 = vmatprep.subr.mxu0 0.0
    %2539 = vmatpush2.msra.mxu0 0.0
    %2540 = vmatprep.subr.mxu0 0.0
    %2541 = vmatpush2.msra.mxu0 0.0
    %2542 = vmatprep.subr.mxu0 0.0
    %2543 = vmatpush2.msra.mxu0 0.0
    %2544 = vmatprep.subr.mxu0 0.0
    %2545 = vmatpush2.msra.mxu0 0.0
    %2546 = vmatprep.subr.mxu0 0.0
    %2547 = vmatpush2.msra.mxu0 0.0
    %2548 = vmatprep.subr.mxu0 0.0
    %2549 = vmatpush2.msra.mxu0 0.0
    %2550 = vmatprep.subr.mxu0 0.0
    %2551 = vmatpush2.msra.mxu0 0.0
    %2552 = vmatprep.subr.mxu0 0.0
    %2553 = vmatpush2.msra.mxu0 0.0
    %2554 = vmatprep.mubr.f32.mxu0 0.0
    %2555 = vmatmul.mubr.f32.gmra.mxu0 %v2467
    %v2556 = vpop.f32.mrf.mxu0
    %v2557 = vadd.f32 0.0, %v2556
    %v2558 = vpop.f32.mrf.mxu0
    %2559 = vmatprep.mubr.f32.mxu0 0.0
    %2560 = vmatmul.mubr.f32.gmra.mxu0 %v2470
    %v2561 = vpop.f32.mrf.mxu0
    %v2562 = vadd.f32 0.0, %v2561
    %v2563 = vpop.f32.mrf.mxu0
    %2564 = vmatprep.mubr.f32.mxu0 0.0
    %2565 = vmatmul.mubr.f32.gmra.mxu0 %v2473
    %v2566 = vpop.f32.mrf.mxu0
    %v2567 = vadd.f32 0.0, %v2566
    %v2568 = vpop.f32.mrf.mxu0
    %2569 = vmatprep.mubr.f32.mxu0 0.0
    %2570 = vmatmul.mubr.f32.gmra.mxu0 %v2476
    %v2571 = vpop.f32.mrf.mxu0
    %v2572 = vadd.f32 0.0, %v2571
    %v2573 = vpop.f32.mrf.mxu0
    %2574 = vmatprep.mubr.f32.mxu0 0.0
    %2575 = vmatmul.mubr.f32.gmra.mxu0 %v2479
    %v2576 = vpop.f32.mrf.mxu0
    %v2577 = vadd.f32 0.0, %v2576
    %v2578 = vpop.f32.mrf.mxu0
    %2579 = vmatprep.mubr.f32.mxu0 0.0
    %2580 = vmatmul.mubr.f32.gmra.mxu0 %v2482
    %v2581 = vpop.f32.mrf.mxu0
    %v2582 = vadd.f32 0.0, %v2581
    %v2583 = vpop.f32.mrf.mxu0
    %2584 = vmatprep.mubr.f32.mxu0 0.0
    %2585 = vmatmul.mubr.f32.gmra.mxu0 %v2485
    %v2586 = vpop.f32.mrf.mxu0
    %v2587 = vadd.f32 0.0, %v2586
    %v2588 = vpop.f32.mrf.mxu0
    %2589 = vmatprep.mubr.f32.mxu0 0.0
    %2590 = vmatmul.mubr.f32.gmra.mxu0 %v2488
    %v2591 = vpop.f32.mrf.mxu0
    %v2592 = vadd.f32 0.0, %v2591
    %v2593 = vpop.f32.mrf.mxu0
    %2594 = vdwg.mxu0
    %v2595 = vld [vmem:[%s1 + $0x2c0] sm:$0xff]
    %v2596 = vld [vmem:[%s1 + $0x2c8] sm:$0xff]
    %v2597 = vld [vmem:[%s1 + $0x2d0] sm:$0xff]
    %v2598 = vld [vmem:[%s1 + $0x2d8] sm:$0xff]
    %v2599 = vld [vmem:[%s1 + $0x2e0] sm:$0xff]
    %v2600 = vld [vmem:[%s1 + $0x2e8] sm:$0xff]
    %v2601 = vld [vmem:[%s1 + $0x2f0] sm:$0xff]
    %v2602 = vld [vmem:[%s1 + $0x2f8] sm:$0xff]
    %v2603 = vmul.f32 %v2557, %v2595
    %v2604 = vmul.f32 %v2562, %v2596
    %v2605 = vmul.f32 %v2567, %v2597
    %v2606 = vmul.f32 %v2572, %v2598
    %v2607 = vmul.f32 %v2577, %v2599
    %v2608 = vmul.f32 %v2582, %v2600
    %v2609 = vmul.f32 %v2587, %v2601
    %v2610 = vmul.f32 %v2592, %v2602
    %v2611 = vld [vmem:[%s1 + $0x300] sm:$0xff]
    %v2612 = vld [vmem:[%s1 + $0x308] sm:$0xff]
    %v2613 = vld [vmem:[%s1 + $0x310] sm:$0xff]
    %v2614 = vld [vmem:[%s1 + $0x318] sm:$0xff]
    %v2616 = vsel %vm838, %v2603, 0
    %v2619 = vsel %vm838, %v2604, 0
    %v2622 = vsel %vm838, %v2605, 0
    %v2625 = vsel %vm838, %v2606, 0
    %v2628 = vsel %vm838, %v2607, 0
    %v2631 = vsel %vm838, %v2608, 0
    %v2634 = vsel %vm838, %v2609, 0
    %v2637 = vsel %vm838, %v2610, 0
    %2639 = vmatprep.subr.mxu0 0.0
    %2640 = vmatpush1.msra.mxu0 0.0
    %2641 = vmatprep.subr.mxu0 0.0
    %2642 = vmatpush1.msra.mxu0 0.0
    %2643 = vmatprep.subr.mxu0 0.0
    %2644 = vmatpush1.msra.mxu0 0.0
    %2645 = vmatprep.subr.mxu0 0.0
    %2646 = vmatpush1.msra.mxu0 0.0
    %2647 = vmatprep.subr.mxu0 0.0
    %2648 = vmatpush1.msra.mxu0 0.0
    %2649 = vmatprep.subr.mxu0 0.0
    %2650 = vmatpush1.msra.mxu0 0.0
    %2651 = vmatprep.subr.mxu0 0.0
    %2652 = vmatpush1.msra.mxu0 0.0
    %2653 = vmatprep.subr.mxu0 0.0
    %2654 = vmatpush1.msra.mxu0 0.0
    %2655 = vmatprep.subr.mxu0 0.0
    %2656 = vmatpush1.msra.mxu0 0.0
    %2657 = vmatprep.subr.mxu0 0.0
    %2658 = vmatpush1.msra.mxu0 0.0
    %2659 = vmatprep.subr.mxu0 0.0
    %2660 = vmatpush1.msra.mxu0 0.0
    %2661 = vmatprep.subr.mxu0 0.0
    %2662 = vmatpush1.msra.mxu0 0.0
    %2663 = vmatprep.subr.mxu0 0.0
    %2664 = vmatpush1.msra.mxu0 %v2614
    %2665 = vmatprep.subr.mxu0 0.0
    %2666 = vmatpush1.msra.mxu0 %v2613
    %2667 = vmatprep.subr.mxu0 0.0
    %2668 = vmatpush1.msra.mxu0 %v2612
    %2669 = vmatprep.subr.mxu0 0.0
    %2670 = vmatpush1.msra.mxu0 %v2611
    %2671 = vmatprep.subr.mxu0 0.0
    %2672 = vmatpush2.msra.mxu0 0.0
    %2673 = vmatprep.subr.mxu0 0.0
    %2674 = vmatpush2.msra.mxu0 0.0
    %2675 = vmatprep.subr.mxu0 0.0
    %2676 = vmatpush2.msra.mxu0 0.0
    %2677 = vmatprep.subr.mxu0 0.0
    %2678 = vmatpush2.msra.mxu0 0.0
    %2679 = vmatprep.subr.mxu0 0.0
    %2680 = vmatpush2.msra.mxu0 0.0
    %2681 = vmatprep.subr.mxu0 0.0
    %2682 = vmatpush2.msra.mxu0 0.0
    %2683 = vmatprep.subr.mxu0 0.0
    %2684 = vmatpush2.msra.mxu0 0.0
    %2685 = vmatprep.subr.mxu0 0.0
    %2686 = vmatpush2.msra.mxu0 0.0
    %2687 = vmatprep.subr.mxu0 0.0
    %2688 = vmatpush2.msra.mxu0 0.0
    %2689 = vmatprep.subr.mxu0 0.0
    %2690 = vmatpush2.msra.mxu0 0.0
    %2691 = vmatprep.subr.mxu0 0.0
    %2692 = vmatpush2.msra.mxu0 0.0
    %2693 = vmatprep.subr.mxu0 0.0
    %2694 = vmatpush2.msra.mxu0 0.0
    %2695 = vmatprep.subr.mxu0 0.0
    %2696 = vmatpush2.msra.mxu0 0.0
    %2697 = vmatprep.subr.mxu0 0.0
    %2698 = vmatpush2.msra.mxu0 0.0
    %2699 = vmatprep.subr.mxu0 0.0
    %2700 = vmatpush2.msra.mxu0 0.0
    %2701 = vmatprep.subr.mxu0 0.0
    %2702 = vmatpush2.msra.mxu0 0.0
    %2703 = vmatprep.mubr.f32.mxu0 0.0
    %2704 = vmatmul.mubr.f32.gmra.mxu0 %v2616
    %v2705 = vpop.f32.mrf.mxu0
    %v2706 = vadd.f32 0.0, %v2705
    %v2707 = vpop.f32.mrf.mxu0
    %2708 = vmatprep.mubr.f32.mxu0 0.0
    %2709 = vmatmul.mubr.f32.gmra.mxu0 %v2619
    %v2710 = vpop.f32.mrf.mxu0
    %v2711 = vadd.f32 0.0, %v2710
    %v2712 = vpop.f32.mrf.mxu0
    %2713 = vmatprep.mubr.f32.mxu0 0.0
    %2714 = vmatmul.mubr.f32.gmra.mxu0 %v2622
    %v2715 = vpop.f32.mrf.mxu0
    %v2716 = vadd.f32 0.0, %v2715
    %v2717 = vpop.f32.mrf.mxu0
    %2718 = vmatprep.mubr.f32.mxu0 0.0
    %2719 = vmatmul.mubr.f32.gmra.mxu0 %v2625
    %v2720 = vpop.f32.mrf.mxu0
    %v2721 = vadd.f32 0.0, %v2720
    %v2722 = vpop.f32.mrf.mxu0
    %2723 = vmatprep.mubr.f32.mxu0 0.0
    %2724 = vmatmul.mubr.f32.gmra.mxu0 %v2628
    %v2725 = vpop.f32.mrf.mxu0
    %v2726 = vadd.f32 0.0, %v2725
    %v2727 = vpop.f32.mrf.mxu0
    %2728 = vmatprep.mubr.f32.mxu0 0.0
    %2729 = vmatmul.mubr.f32.gmra.mxu0 %v2631
    %v2730 = vpop.f32.mrf.mxu0
    %v2731 = vadd.f32 0.0, %v2730
    %v2732 = vpop.f32.mrf.mxu0
    %2733 = vmatprep.mubr.f32.mxu0 0.0
    %2734 = vmatmul.mubr.f32.gmra.mxu0 %v2634
    %v2735 = vpop.f32.mrf.mxu0
    %v2736 = vadd.f32 0.0, %v2735
    %v2737 = vpop.f32.mrf.mxu0
    %2738 = vmatprep.mubr.f32.mxu0 0.0
    %2739 = vmatmul.mubr.f32.gmra.mxu0 %v2637
    %v2740 = vpop.f32.mrf.mxu0
    %v2741 = vadd.f32 0.0, %v2740
    %v2742 = vpop.f32.mrf.mxu0
    %2743 = vdwg.mxu0
    %v2744 = vld [vmem:[%s1 + $0x320] sm:$0xff]
    %v2745 = vld [vmem:[%s1 + $0x328] sm:$0xff]
    %v2746 = vld [vmem:[%s1 + $0x330] sm:$0xff]
    %v2747 = vld [vmem:[%s1 + $0x338] sm:$0xff]
    %v2748 = vld [vmem:[%s1 + $0x340] sm:$0xff]
    %v2749 = vld [vmem:[%s1 + $0x348] sm:$0xff]
    %v2750 = vld [vmem:[%s1 + $0x350] sm:$0xff]
    %v2751 = vld [vmem:[%s1 + $0x358] sm:$0xff]
    %v2752 = vmul.f32 %v2706, %v2744
    %v2753 = vmul.f32 %v2711, %v2745
    %v2754 = vmul.f32 %v2716, %v2746
    %v2755 = vmul.f32 %v2721, %v2747
    %v2756 = vmul.f32 %v2726, %v2748
    %v2757 = vmul.f32 %v2731, %v2749
    %v2758 = vmul.f32 %v2736, %v2750
    %v2759 = vmul.f32 %v2741, %v2751
    %v2761 = vsel %vm1803, %v2456, 0
    %v2764 = vsel %vm1803, %v2457, 0
    %2766 = vmatprep.subr.mxu0 0.0
    %2767 = vmatpush1.msra.mxu0 0.0
    %2768 = vmatprep.subr.mxu0 0.0
    %2769 = vmatpush1.msra.mxu0 0.0
    %2770 = vmatprep.subr.mxu0 0.0
    %2771 = vmatpush1.msra.mxu0 0.0
    %2772 = vmatprep.subr.mxu0 0.0
    %2773 = vmatpush1.msra.mxu0 0.0
    %2774 = vmatprep.subr.mxu0 0.0
    %2775 = vmatpush1.msra.mxu0 0.0
    %2776 = vmatprep.subr.mxu0 0.0
    %2777 = vmatpush1.msra.mxu0 0.0
    %2778 = vmatprep.subr.mxu0 0.0
    %2779 = vmatpush1.msra.mxu0 0.0
    %2780 = vmatprep.subr.mxu0 0.0
    %2781 = vmatpush1.msra.mxu0 0.0
    %2782 = vmatprep.subr.mxu0 0.0
    %2783 = vmatpush1.msra.mxu0 %v2759
    %2784 = vmatprep.subr.mxu0 0.0
    %2785 = vmatpush1.msra.mxu0 %v2758
    %2786 = vmatprep.subr.mxu0 0.0
    %2787 = vmatpush1.msra.mxu0 %v2757
    %2788 = vmatprep.subr.mxu0 0.0
    %2789 = vmatpush1.msra.mxu0 %v2756
    %2790 = vmatprep.subr.mxu0 0.0
    %2791 = vmatpush1.msra.mxu0 %v2755
    %2792 = vmatprep.subr.mxu0 0.0
    %2793 = vmatpush1.msra.mxu0 %v2754
    %2794 = vmatprep.subr.mxu0 0.0
    %2795 = vmatpush1.msra.mxu0 %v2753
    %2796 = vmatprep.subr.mxu0 0.0
    %2797 = vmatpush1.msra.mxu0 %v2752
    %2798 = vmatprep.subr.mxu0 0.0
    %2799 = vmatpush2.msra.mxu0 0.0
    %2800 = vmatprep.subr.mxu0 0.0
    %2801 = vmatpush2.msra.mxu0 0.0
    %2802 = vmatprep.subr.mxu0 0.0
    %2803 = vmatpush2.msra.mxu0 0.0
    %2804 = vmatprep.subr.mxu0 0.0
    %2805 = vmatpush2.msra.mxu0 0.0
    %2806 = vmatprep.subr.mxu0 0.0
    %2807 = vmatpush2.msra.mxu0 0.0
    %2808 = vmatprep.subr.mxu0 0.0
    %2809 = vmatpush2.msra.mxu0 0.0
    %2810 = vmatprep.subr.mxu0 0.0
    %2811 = vmatpush2.msra.mxu0 0.0
    %2812 = vmatprep.subr.mxu0 0.0
    %2813 = vmatpush2.msra.mxu0 0.0
    %2814 = vmatprep.subr.mxu0 0.0
    %2815 = vmatpush2.msra.mxu0 0.0
    %2816 = vmatprep.subr.mxu0 0.0
    %2817 = vmatpush2.msra.mxu0 0.0
    %2818 = vmatprep.subr.mxu0 0.0
    %2819 = vmatpush2.msra.mxu0 0.0
    %2820 = vmatprep.subr.mxu0 0.0
    %2821 = vmatpush2.msra.mxu0 0.0
    %2822 = vmatprep.subr.mxu0 0.0
    %2823 = vmatpush2.msra.mxu0 0.0
    %2824 = vmatprep.subr.mxu0 0.0
    %2825 = vmatpush2.msra.mxu0 0.0
    %2826 = vmatprep.subr.mxu0 0.0
    %2827 = vmatpush2.msra.mxu0 0.0
    %2828 = vmatprep.subr.mxu0 0.0
    %2829 = vmatpush2.msra.mxu0 0.0
    %2830 = vmatprep.mubr.f32.mxu0 0.0
    %2831 = vmatmul.mubr.f32.gmra.mxu0 %v2761
    %v2832 = vpop.f32.mrf.mxu0
    %v2833 = vadd.f32 0.0, %v2832
    %v2834 = vpop.f32.mrf.mxu0
    %2835 = vmatprep.mubr.f32.mxu0 0.0
    %2836 = vmatmul.mubr.f32.gmra.mxu0 %v2764
    %v2837 = vpop.f32.mrf.mxu0
    %v2838 = vadd.f32 0.0, %v2837
    %v2839 = vpop.f32.mrf.mxu0
    %2840 = vdwg.mxu0
    %v2841 = vmul.f32 %v2833, %v2342
    %v2842 = vmul.f32 %v2838, %v2347
    %v2843 = vld [vmem:[%s1 + $0x160] sm:$0xff]
    %v2844 = vld [vmem:[%s1 + $0x168] sm:$0xff]
    %v2845 = vld [vmem:[%s1 + $0x170] sm:$0xff]
    %v2846 = vld [vmem:[%s1 + $0x178] sm:$0xff]
    %v2848 = vsel %vm126, %v2841, 0
    %v2851 = vsel %vm126, %v2842, 0
    %2853 = vmatprep.subr.mxu0 0.0
    %2854 = vmatpush1.msra.mxu0 0.0
    %2855 = vmatprep.subr.mxu0 0.0
    %2856 = vmatpush1.msra.mxu0 0.0
    %2857 = vmatprep.subr.mxu0 0.0
    %2858 = vmatpush1.msra.mxu0 0.0
    %2859 = vmatprep.subr.mxu0 0.0
    %2860 = vmatpush1.msra.mxu0 0.0
    %2861 = vmatprep.subr.mxu0 0.0
    %2862 = vmatpush1.msra.mxu0 0.0
    %2863 = vmatprep.subr.mxu0 0.0
    %2864 = vmatpush1.msra.mxu0 0.0
    %2865 = vmatprep.subr.mxu0 0.0
    %2866 = vmatpush1.msra.mxu0 0.0
    %2867 = vmatprep.subr.mxu0 0.0
    %2868 = vmatpush1.msra.mxu0 0.0
    %2869 = vmatprep.subr.mxu0 0.0
    %2870 = vmatpush1.msra.mxu0 0.0
    %2871 = vmatprep.subr.mxu0 0.0
    %2872 = vmatpush1.msra.mxu0 0.0
    %2873 = vmatprep.subr.mxu0 0.0
    %2874 = vmatpush1.msra.mxu0 0.0
    %2875 = vmatprep.subr.mxu0 0.0
    %2876 = vmatpush1.msra.mxu0 0.0
    %2877 = vmatprep.subr.mxu0 0.0
    %2878 = vmatpush1.msra.mxu0 0.0
    %2879 = vmatprep.subr.mxu0 0.0
    %2880 = vmatpush1.msra.mxu0 0.0
    %2881 = vmatprep.subr.mxu0 0.0
    %2882 = vmatpush1.msra.mxu0 %v2846
    %2883 = vmatprep.subr.mxu0 0.0
    %2884 = vmatpush1.msra.mxu0 %v2845
    %2885 = vmatprep.subr.mxu0 0.0
    %2886 = vmatpush2.msra.mxu0 0.0
    %2887 = vmatprep.subr.mxu0 0.0
    %2888 = vmatpush2.msra.mxu0 0.0
    %2889 = vmatprep.subr.mxu0 0.0
    %2890 = vmatpush2.msra.mxu0 0.0
    %2891 = vmatprep.subr.mxu0 0.0
    %2892 = vmatpush2.msra.mxu0 0.0
    %2893 = vmatprep.subr.mxu0 0.0
    %2894 = vmatpush2.msra.mxu0 0.0
    %2895 = vmatprep.subr.mxu0 0.0
    %2896 = vmatpush2.msra.mxu0 0.0
    %2897 = vmatprep.subr.mxu0 0.0
    %2898 = vmatpush2.msra.mxu0 0.0
    %2899 = vmatprep.subr.mxu0 0.0
    %2900 = vmatpush2.msra.mxu0 0.0
    %2901 = vmatprep.subr.mxu0 0.0
    %2902 = vmatpush2.msra.mxu0 0.0
    %2903 = vmatprep.subr.mxu0 0.0
    %2904 = vmatpush2.msra.mxu0 0.0
    %2905 = vmatprep.subr.mxu0 0.0
    %2906 = vmatpush2.msra.mxu0 0.0
    %2907 = vmatprep.subr.mxu0 0.0
    %2908 = vmatpush2.msra.mxu0 0.0
    %2909 = vmatprep.subr.mxu0 0.0
    %2910 = vmatpush2.msra.mxu0 0.0
    %2911 = vmatprep.subr.mxu0 0.0
    %2912 = vmatpush2.msra.mxu0 0.0
    %2913 = vmatprep.subr.mxu0 0.0
    %2914 = vmatpush2.msra.mxu0 0.0
    %2915 = vmatprep.subr.mxu0 0.0
    %2916 = vmatpush2.msra.mxu0 0.0
    %2917 = vmatprep.mubr.f32.mxu0 0.0
    %2918 = vmatmul.mubr.f32.gmra.mxu0 %v2848
    %v2919 = vpop.f32.mrf.mxu0
    %v2920 = vadd.f32 0.0, %v2919
    %v2921 = vpop.f32.mrf.mxu0
    %2922 = vmatprep.mubr.f32.mxu0 0.0
    %2923 = vmatmul.mubr.f32.gmra.mxu0 %v2851
    %v2924 = vpop.f32.mrf.mxu0
    %v2925 = vadd.f32 0.0, %v2924
    %v2926 = vpop.f32.mrf.mxu0
    %2927 = vdwg.mxu0
    %v2929 = vsel %vm126, %v1800, 0
    %v2932 = vsel %vm126, %v1801, 0
    %2934 = vmatprep.subr.mxu0 0.0
    %2935 = vmatpush1.msra.mxu0 0.0
    %2936 = vmatprep.subr.mxu0 0.0
    %2937 = vmatpush1.msra.mxu0 0.0
    %2938 = vmatprep.subr.mxu0 0.0
    %2939 = vmatpush1.msra.mxu0 0.0
    %2940 = vmatprep.subr.mxu0 0.0
    %2941 = vmatpush1.msra.mxu0 0.0
    %2942 = vmatprep.subr.mxu0 0.0
    %2943 = vmatpush1.msra.mxu0 0.0
    %2944 = vmatprep.subr.mxu0 0.0
    %2945 = vmatpush1.msra.mxu0 0.0
    %2946 = vmatprep.subr.mxu0 0.0
    %2947 = vmatpush1.msra.mxu0 0.0
    %2948 = vmatprep.subr.mxu0 0.0
    %2949 = vmatpush1.msra.mxu0 0.0
    %2950 = vmatprep.subr.mxu0 0.0
    %2951 = vmatpush1.msra.mxu0 0.0
    %2952 = vmatprep.subr.mxu0 0.0
    %2953 = vmatpush1.msra.mxu0 0.0
    %2954 = vmatprep.subr.mxu0 0.0
    %2955 = vmatpush1.msra.mxu0 0.0
    %2956 = vmatprep.subr.mxu0 0.0
    %2957 = vmatpush1.msra.mxu0 0.0
    %2958 = vmatprep.subr.mxu0 0.0
    %2959 = vmatpush1.msra.mxu0 0.0
    %2960 = vmatprep.subr.mxu0 0.0
    %2961 = vmatpush1.msra.mxu0 0.0
    %2962 = vmatprep.subr.mxu0 0.0
    %2963 = vmatpush1.msra.mxu0 %v2844
    %2964 = vmatprep.subr.mxu0 0.0
    %2965 = vmatpush1.msra.mxu0 %v2843
    %2966 = vmatprep.subr.mxu0 0.0
    %2967 = vmatpush2.msra.mxu0 0.0
    %2968 = vmatprep.subr.mxu0 0.0
    %2969 = vmatpush2.msra.mxu0 0.0
    %2970 = vmatprep.subr.mxu0 0.0
    %2971 = vmatpush2.msra.mxu0 0.0
    %2972 = vmatprep.subr.mxu0 0.0
    %2973 = vmatpush2.msra.mxu0 0.0
    %2974 = vmatprep.subr.mxu0 0.0
    %2975 = vmatpush2.msra.mxu0 0.0
    %2976 = vmatprep.subr.mxu0 0.0
    %2977 = vmatpush2.msra.mxu0 0.0
    %2978 = vmatprep.subr.mxu0 0.0
    %2979 = vmatpush2.msra.mxu0 0.0
    %2980 = vmatprep.subr.mxu0 0.0
    %2981 = vmatpush2.msra.mxu0 0.0
    %2982 = vmatprep.subr.mxu0 0.0
    %2983 = vmatpush2.msra.mxu0 0.0
    %2984 = vmatprep.subr.mxu0 0.0
    %2985 = vmatpush2.msra.mxu0 0.0
    %2986 = vmatprep.subr.mxu0 0.0
    %2987 = vmatpush2.msra.mxu0 0.0
    %2988 = vmatprep.subr.mxu0 0.0
    %2989 = vmatpush2.msra.mxu0 0.0
    %2990 = vmatprep.subr.mxu0 0.0
    %2991 = vmatpush2.msra.mxu0 0.0
    %2992 = vmatprep.subr.mxu0 0.0
    %2993 = vmatpush2.msra.mxu0 0.0
    %2994 = vmatprep.subr.mxu0 0.0
    %2995 = vmatpush2.msra.mxu0 0.0
    %2996 = vmatprep.subr.mxu0 0.0
    %2997 = vmatpush2.msra.mxu0 0.0
    %2998 = vmatprep.mubr.f32.mxu0 0.0
    %2999 = vmatmul.mubr.f32.gmra.mxu0 %v2929
    %v3000 = vpop.f32.mrf.mxu0
    %v3001 = vadd.f32 %v2920, %v3000
    %v3002 = vpop.f32.mrf.mxu0
    %3003 = vmatprep.mubr.f32.mxu0 0.0
    %3004 = vmatmul.mubr.f32.gmra.mxu0 %v2932
    %v3005 = vpop.f32.mrf.mxu0
    %v3006 = vadd.f32 %v2925, %v3005
    %v3007 = vpop.f32.mrf.mxu0
    %3008 = vdwg.mxu0
    %v3009 = vld [vmem:[%s1 + $0x180] sm:$0x1]
    %v3010 = vlaneseq
    %v3011 = vshrl.u32 %v3010, 7
    %v3012 = vsub.s32 0, %v3011
    %v3013 = vrot.slane %v3009, %v3012
    %v3014 = vadd.f32 %v3001, %v3013
    %v3015 = vadd.f32 %v3006, %v3013
    %v3016 = vld [vmem:[%s0 + $0x80] sm:$0x3]
    %v3018 = vsel %vm126, %v3016, 0
    %3020 = vmatprep.subr.mxu0 0.0
    %3021 = vmatpush1.msra.mxu0 0.0
    %3022 = vmatprep.subr.mxu0 0.0
    %3023 = vmatpush1.msra.mxu0 0.0
    %3024 = vmatprep.subr.mxu0 0.0
    %3025 = vmatpush1.msra.mxu0 0.0
    %3026 = vmatprep.subr.mxu0 0.0
    %3027 = vmatpush1.msra.mxu0 0.0
    %3028 = vmatprep.subr.mxu0 0.0
    %3029 = vmatpush1.msra.mxu0 0.0
    %3030 = vmatprep.subr.mxu0 0.0
    %3031 = vmatpush1.msra.mxu0 0.0
    %3032 = vmatprep.subr.mxu0 0.0
    %3033 = vmatpush1.msra.mxu0 0.0
    %3034 = vmatprep.subr.mxu0 0.0
    %3035 = vmatpush1.msra.mxu0 0.0
    %3036 = vmatprep.subr.mxu0 0.0
    %3037 = vmatpush1.msra.mxu0 0.0
    %3038 = vmatprep.subr.mxu0 0.0
    %3039 = vmatpush1.msra.mxu0 0.0
    %3040 = vmatprep.subr.mxu0 0.0
    %3041 = vmatpush1.msra.mxu0 0.0
    %3042 = vmatprep.subr.mxu0 0.0
    %3043 = vmatpush1.msra.mxu0 0.0
    %3044 = vmatprep.subr.mxu0 0.0
    %3045 = vmatpush1.msra.mxu0 0.0
    %3046 = vmatprep.subr.mxu0 0.0
    %3047 = vmatpush1.msra.mxu0 0.0
    %3048 = vmatprep.subr.mxu0 0.0
    %3049 = vmatpush1.msra.mxu0 %v3015
    %3050 = vmatprep.subr.mxu0 0.0
    %3051 = vmatpush1.msra.mxu0 %v3014
    %3052 = vmatprep.subr.mxu0 0.0
    %3053 = vmatpush2.msra.mxu0 0.0
    %3054 = vmatprep.subr.mxu0 0.0
    %3055 = vmatpush2.msra.mxu0 0.0
    %3056 = vmatprep.subr.mxu0 0.0
    %3057 = vmatpush2.msra.mxu0 0.0
    %3058 = vmatprep.subr.mxu0 0.0
    %3059 = vmatpush2.msra.mxu0 0.0
    %3060 = vmatprep.subr.mxu0 0.0
    %3061 = vmatpush2.msra.mxu0 0.0
    %3062 = vmatprep.subr.mxu0 0.0
    %3063 = vmatpush2.msra.mxu0 0.0
    %3064 = vmatprep.subr.mxu0 0.0
    %3065 = vmatpush2.msra.mxu0 0.0
    %3066 = vmatprep.subr.mxu0 0.0
    %3067 = vmatpush2.msra.mxu0 0.0
    %3068 = vmatprep.subr.mxu0 0.0
    %3069 = vmatpush2.msra.mxu0 0.0
    %3070 = vmatprep.subr.mxu0 0.0
    %3071 = vmatpush2.msra.mxu0 0.0
    %3072 = vmatprep.subr.mxu0 0.0
    %3073 = vmatpush2.msra.mxu0 0.0
    %3074 = vmatprep.subr.mxu0 0.0
    %3075 = vmatpush2.msra.mxu0 0.0
    %3076 = vmatprep.subr.mxu0 0.0
    %3077 = vmatpush2.msra.mxu0 0.0
    %3078 = vmatprep.subr.mxu0 0.0
    %3079 = vmatpush2.msra.mxu0 0.0
    %3080 = vmatprep.subr.mxu0 0.0
    %3081 = vmatpush2.msra.mxu0 0.0
    %3082 = vmatprep.subr.mxu0 0.0
    %3083 = vmatpush2.msra.mxu0 0.0
    %3084 = vmatprep.mubr.f32.mxu0 0.0
    %3085 = vmatmul.mubr.f32.gmra.mxu0 %v3018
    %v3086 = vpop.f32.mrf.mxu0
    %v3087 = vadd.f32 0.0, %v3086
    %v3088 = vpop.f32.mrf.mxu0
    %3089 = vdwg.mxu0
    %v3090 = vld [vmem:[%s1 + $0x188] sm:$0xff]
    %v3091 = vld [vmem:[%s1 + $0x190] sm:$0xff]
    %v3092 = vld [vmem:[%s1 + $0x198] sm:$0x1]
    %v3093 = vlaneseq
    %v3094 = vshrl.u32 %v3093, 7
    %v3095 = vsub.s32 0, %v3094
    %v3096 = vrot.slane %v3092, %v3095
    %v3098 = vsel %vm126, %v3087, 0
    %3100 = vmatprep.subr.mxu0 0.0
    %3101 = vmatpush1.msra.mxu0 0.0
    %3102 = vmatprep.subr.mxu0 0.0
    %3103 = vmatpush1.msra.mxu0 0.0
    %3104 = vmatprep.subr.mxu0 0.0
    %3105 = vmatpush1.msra.mxu0 0.0
    %3106 = vmatprep.subr.mxu0 0.0
    %3107 = vmatpush1.msra.mxu0 0.0
    %3108 = vmatprep.subr.mxu0 0.0
    %3109 = vmatpush1.msra.mxu0 0.0
    %3110 = vmatprep.subr.mxu0 0.0
    %3111 = vmatpush1.msra.mxu0 0.0
    %3112 = vmatprep.subr.mxu0 0.0
    %3113 = vmatpush1.msra.mxu0 0.0
    %3114 = vmatprep.subr.mxu0 0.0
    %3115 = vmatpush1.msra.mxu0 0.0
    %3116 = vmatprep.subr.mxu0 0.0
    %3117 = vmatpush1.msra.mxu0 0.0
    %3118 = vmatprep.subr.mxu0 0.0
    %3119 = vmatpush1.msra.mxu0 0.0
    %3120 = vmatprep.subr.mxu0 0.0
    %3121 = vmatpush1.msra.mxu0 0.0
    %3122 = vmatprep.subr.mxu0 0.0
    %3123 = vmatpush1.msra.mxu0 0.0
    %3124 = vmatprep.subr.mxu0 0.0
    %3125 = vmatpush1.msra.mxu0 0.0
    %3126 = vmatprep.subr.mxu0 0.0
    %3127 = vmatpush1.msra.mxu0 0.0
    %3128 = vmatprep.subr.mxu0 0.0
    %3129 = vmatpush1.msra.mxu0 %v3091
    %3130 = vmatprep.subr.mxu0 0.0
    %3131 = vmatpush1.msra.mxu0 %v3090
    %3132 = vmatprep.subr.mxu0 0.0
    %3133 = vmatpush2.msra.mxu0 0.0
    %3134 = vmatprep.subr.mxu0 0.0
    %3135 = vmatpush2.msra.mxu0 0.0
    %3136 = vmatprep.subr.mxu0 0.0
    %3137 = vmatpush2.msra.mxu0 0.0
    %3138 = vmatprep.subr.mxu0 0.0
    %3139 = vmatpush2.msra.mxu0 0.0
    %3140 = vmatprep.subr.mxu0 0.0
    %3141 = vmatpush2.msra.mxu0 0.0
    %3142 = vmatprep.subr.mxu0 0.0
    %3143 = vmatpush2.msra.mxu0 0.0
    %3144 = vmatprep.subr.mxu0 0.0
    %3145 = vmatpush2.msra.mxu0 0.0
    %3146 = vmatprep.subr.mxu0 0.0
    %3147 = vmatpush2.msra.mxu0 0.0
    %3148 = vmatprep.subr.mxu0 0.0
    %3149 = vmatpush2.msra.mxu0 0.0
    %3150 = vmatprep.subr.mxu0 0.0
    %3151 = vmatpush2.msra.mxu0 0.0
    %3152 = vmatprep.subr.mxu0 0.0
    %3153 = vmatpush2.msra.mxu0 0.0
    %3154 = vmatprep.subr.mxu0 0.0
    %3155 = vmatpush2.msra.mxu0 0.0
    %3156 = vmatprep.subr.mxu0 0.0
    %3157 = vmatpush2.msra.mxu0 0.0
    %3158 = vmatprep.subr.mxu0 0.0
    %3159 = vmatpush2.msra.mxu0 0.0
    %3160 = vmatprep.subr.mxu0 0.0
    %3161 = vmatpush2.msra.mxu0 0.0
    %3162 = vmatprep.subr.mxu0 0.0
    %3163 = vmatpush2.msra.mxu0 0.0
    %3164 = vmatprep.mubr.f32.mxu0 0.0
    %3165 = vmatmul.mubr.f32.gmra.mxu0 %v3098
    %v3166 = vpop.f32.mrf.mxu0
    %v3167 = vadd.f32 %v3096, %v3166
    %v3168 = vpop.f32.mrf.mxu0
    %3169 = vdwg.mxu0
    %v3170 = vmax.f32 %v3167, 0.0
    %v3171 = vld [vmem:[%s1 + $0x1a0] sm:$0xff]
    %v3172 = vld [vmem:[%s1 + $0x1a8] sm:$0xff]
    %v3173 = vld [vmem:[%s1 + $0x1b0] sm:$0x1]
    %v3174 = vlaneseq
    %v3175 = vshrl.u32 %v3174, 7
    %v3176 = vsub.s32 0, %v3175
    %v3177 = vrot.slane %v3173, %v3176
    %v3179 = vsel %vm126, %v3170, 0
    %3181 = vmatprep.subr.mxu0 0.0
    %3182 = vmatpush1.msra.mxu0 0.0
    %3183 = vmatprep.subr.mxu0 0.0
    %3184 = vmatpush1.msra.mxu0 0.0
    %3185 = vmatprep.subr.mxu0 0.0
    %3186 = vmatpush1.msra.mxu0 0.0
    %3187 = vmatprep.subr.mxu0 0.0
    %3188 = vmatpush1.msra.mxu0 0.0
    %3189 = vmatprep.subr.mxu0 0.0
    %3190 = vmatpush1.msra.mxu0 0.0
    %3191 = vmatprep.subr.mxu0 0.0
    %3192 = vmatpush1.msra.mxu0 0.0
    %3193 = vmatprep.subr.mxu0 0.0
    %3194 = vmatpush1.msra.mxu0 0.0
    %3195 = vmatprep.subr.mxu0 0.0
    %3196 = vmatpush1.msra.mxu0 0.0
    %3197 = vmatprep.subr.mxu0 0.0
    %3198 = vmatpush1.msra.mxu0 0.0
    %3199 = vmatprep.subr.mxu0 0.0
    %3200 = vmatpush1.msra.mxu0 0.0
    %3201 = vmatprep.subr.mxu0 0.0
    %3202 = vmatpush1.msra.mxu0 0.0
    %3203 = vmatprep.subr.mxu0 0.0
    %3204 = vmatpush1.msra.mxu0 0.0
    %3205 = vmatprep.subr.mxu0 0.0
    %3206 = vmatpush1.msra.mxu0 0.0
    %3207 = vmatprep.subr.mxu0 0.0
    %3208 = vmatpush1.msra.mxu0 0.0
    %3209 = vmatprep.subr.mxu0 0.0
    %3210 = vmatpush1.msra.mxu0 %v3172
    %3211 = vmatprep.subr.mxu0 0.0
    %3212 = vmatpush1.msra.mxu0 %v3171
    %3213 = vmatprep.subr.mxu0 0.0
    %3214 = vmatpush2.msra.mxu0 0.0
    %3215 = vmatprep.subr.mxu0 0.0
    %3216 = vmatpush2.msra.mxu0 0.0
    %3217 = vmatprep.subr.mxu0 0.0
    %3218 = vmatpush2.msra.mxu0 0.0
    %3219 = vmatprep.subr.mxu0 0.0
    %3220 = vmatpush2.msra.mxu0 0.0
    %3221 = vmatprep.subr.mxu0 0.0
    %3222 = vmatpush2.msra.mxu0 0.0
    %3223 = vmatprep.subr.mxu0 0.0
    %3224 = vmatpush2.msra.mxu0 0.0
    %3225 = vmatprep.subr.mxu0 0.0
    %3226 = vmatpush2.msra.mxu0 0.0
    %3227 = vmatprep.subr.mxu0 0.0
    %3228 = vmatpush2.msra.mxu0 0.0
    %3229 = vmatprep.subr.mxu0 0.0
    %3230 = vmatpush2.msra.mxu0 0.0
    %3231 = vmatprep.subr.mxu0 0.0
    %3232 = vmatpush2.msra.mxu0 0.0
    %3233 = vmatprep.subr.mxu0 0.0
    %3234 = vmatpush2.msra.mxu0 0.0
    %3235 = vmatprep.subr.mxu0 0.0
    %3236 = vmatpush2.msra.mxu0 0.0
    %3237 = vmatprep.subr.mxu0 0.0
    %3238 = vmatpush2.msra.mxu0 0.0
    %3239 = vmatprep.subr.mxu0 0.0
    %3240 = vmatpush2.msra.mxu0 0.0
    %3241 = vmatprep.subr.mxu0 0.0
    %3242 = vmatpush2.msra.mxu0 0.0
    %3243 = vmatprep.subr.mxu0 0.0
    %3244 = vmatpush2.msra.mxu0 0.0
    %3245 = vmatprep.mubr.f32.mxu0 0.0
    %3246 = vmatmul.mubr.f32.gmra.mxu0 %v3179
    %v3247 = vpop.f32.mrf.mxu0
    %v3248 = vadd.f32 %v3177, %v3247
    %v3249 = vpop.f32.mrf.mxu0
    %3250 = vdwg.mxu0
    %vm3251 = vcmask 17408
    %3252 = vst.msk [vmem:[#allocation2] sm:$0x3] %vm3251, %v3248
    // Predicated region
    $region10: #{forward.1} parent=1 // pred_check
      _
    $region11: #{forward.1} parent=1 // pred_check_branch
      %3254 = sbr.rel (0) target = $region13
    $region12: #{forward.1} parent=1 // pred_region
      %s3256 = ssub.s32 32, 32
      %3257 = vsyncadd [#allocation3], %s3256
      %s3259 = sshll.u32 [#allocation2], 4
      %s3260 = int_to_ptr.vmem [resolvable:$true] %s3259
      %3262 = dma.vmem_to_hbm [thread:$0]  %s3260, 32, %s2, [#allocation3]
    $region13: #{forward.1} parent=1 // pred_fallthru
      _
    // Predicated region
    $region14: #{forward.1} parent=1 // pred_check
      _
    $region15: #{forward.1} parent=1 // pred_check_branch
      %3264 = sbr.rel (0) target = $region17
    $region16: #{forward.1} parent=1 // pred_region
      %3265 = dma.done [#allocation3], 32
    $region17: #{forward.1} parent=1 // pred_fallthru
      _
    %3266 = vsyncpa [#allocation3], 1

</llo_original>
